<compile_context>
chip_gen: v7x
topology: tpu7x:2x2x1
jax: 0.10.0
libtpu: 0.0.40
codegen_flags: <defaults>
</compile_context>

<pallas_src>
import functools

import jax
import jax.numpy as jnp
from jax.experimental import pallas as pl
from jax.experimental.pallas import tpu as pltpu


def _round_up(v, m):
    return (v + m - 1) // m * m


def _pick_tile(dim, cap, unit):
    """Pick a tile size (multiple of `unit`, <= cap, >= cap//2) minimizing padding."""
    if dim <= cap:
        return _round_up(dim, unit)
    best_t = cap
    best_pad = _round_up(dim, cap) - dim
    t = cap - unit
    while t >= cap // 2 and best_pad > 0:
        pad = _round_up(dim, t) - dim
        if pad < best_pad:
            best_t, best_pad = t, pad
        t -= unit
    return best_t


# ---------------------------------------------------------------------------
# Fused GEMM: Y = act(X @ W + b)   (used for the im2col convolutions)
# ---------------------------------------------------------------------------
def _matmul_bias_act_kernel(x_ref, w_ref, b_ref, o_ref, acc_ref, *, relu):
    @pl.when(pl.program_id(2) == 0)
    def _init():
        acc_ref[...] = jnp.zeros_like(acc_ref)

    acc_ref[...] += jnp.dot(
        x_ref[...], w_ref[...], preferred_element_type=jnp.float32
    )

    @pl.when(pl.program_id(2) == pl.num_programs(2) - 1)
    def _finalize():
        y = acc_ref[...] + b_ref[...]          # (tm, tn) + (1, tn) broadcast
        if relu:
            y = jnp.maximum(y, 0.0)
        o_ref[...] = y.astype(o_ref.dtype)


def matmul_bias_act(x, w, b, *, relu, tm_cap=256, tn_cap=512, tk_cap=1024):
    """x: (M, K), w: (K, N), b: (N,) -> act(x @ w + b), all f32."""
    M, K = x.shape
    K2, N = w.shape
    assert K == K2 and b.shape == (N,)

    # Tile sizes: multiples of (8, 128); pad operands to tile multiples so all
    # vector loads/stores in the kernel are full, unmasked (lane-dense).
    tm = _pick_tile(M, tm_cap, 8)
    tn = _pick_tile(N, tn_cap, 128)
    tk = _pick_tile(K, tk_cap, 128)
    Mp, Kp, Np = _round_up(M, tm), _round_up(K, tk), _round_up(N, tn)

    xp = jnp.pad(x, ((0, Mp - M), (0, Kp - K)))
    wp = jnp.pad(w, ((0, Kp - K), (0, Np - N)))
    bp = jnp.pad(b, (0, Np - N)).reshape(1, Np)

    grid = (Mp // tm, Np // tn, Kp // tk)
    kernel = functools.partial(_matmul_bias_act_kernel, relu=relu)

    out = pl.pallas_call(
        kernel,
        out_shape=jax.ShapeDtypeStruct((Mp, Np), x.dtype),
        grid_spec=pltpu.PrefetchScalarGridSpec(
            num_scalar_prefetch=0,
            grid=grid,
            in_specs=[
                pl.BlockSpec((tm, tk), lambda i, j, k: (i, k)),
                pl.BlockSpec((tk, tn), lambda i, j, k: (k, j)),
                pl.BlockSpec((1, tn), lambda i, j, k: (0, j)),
            ],
            out_specs=pl.BlockSpec((tm, tn), lambda i, j, k: (i, j)),
            scratch_shapes=[pltpu.VMEM((tm, tn), jnp.float32)],
        ),
        compiler_params=pltpu.CompilerParams(
            dimension_semantics=("parallel", "parallel", "arbitrary"),
        ),
    )(xp, wp, bp)
    return out[:M, :N]


# ---------------------------------------------------------------------------
# Fused 3-layer MLP head: fc1 -> ReLU -> fc2 -> ReLU -> fc3 (single pallas_call).
# Everything (weights + activations) is tiny and stays resident in VMEM.
# ---------------------------------------------------------------------------
def _mlp3_kernel(x_ref, w1_ref, b1_ref, w2_ref, b2_ref, w3_ref, b3_ref, o_ref):
    h = jnp.dot(x_ref[...], w1_ref[...], preferred_element_type=jnp.float32)
    h = jnp.maximum(h + b1_ref[...], 0.0)
    h = jnp.dot(h, w2_ref[...], preferred_element_type=jnp.float32)
    h = jnp.maximum(h + b2_ref[...], 0.0)
    h = jnp.dot(h, w3_ref[...], preferred_element_type=jnp.float32)
    o_ref[...] = (h + b3_ref[...]).astype(o_ref.dtype)


def mlp3(x, w1, b1, w2, b2, w3, b3):
    """x:(M,K) -> relu(x@w1+b1) -> relu(.@w2+b2) -> .@w3+b3, all f32.

    Zero-padding is benign: padded weight rows/cols are 0 and padded biases are 0,
    so padded hidden columns stay exactly 0 through the ReLUs and contribute nothing.
    """
    M, K = x.shape
    N1, N2, N3 = w1.shape[1], w2.shape[1], w3.shape[1]
    Mp, Kp = _round_up(M, 8), _round_up(K, 128)
    N1p, N2p, N3p = (_round_up(n, 128) for n in (N1, N2, N3))

    xp = jnp.pad(x, ((0, Mp - M), (0, Kp - K)))
    w1p = jnp.pad(w1, ((0, Kp - K), (0, N1p - N1)))
    b1p = jnp.pad(b1, (0, N1p - N1)).reshape(1, N1p)
    w2p = jnp.pad(w2, ((0, N1p - N1), (0, N2p - N2)))
    b2p = jnp.pad(b2, (0, N2p - N2)).reshape(1, N2p)
    w3p = jnp.pad(w3, ((0, N2p - N2), (0, N3p - N3)))
    b3p = jnp.pad(b3, (0, N3p - N3)).reshape(1, N3p)

    out = pl.pallas_call(
        _mlp3_kernel,
        out_shape=jax.ShapeDtypeStruct((Mp, N3p), x.dtype),
    )(xp, w1p, b1p, w2p, b2p, w3p, b3p)
    return out[:M, :N3]


# ---------------------------------------------------------------------------
# 2x2 max-pool (stride 2) as elementwise max of the four shifted sub-grids.
# ---------------------------------------------------------------------------
def _max4_kernel(a_ref, b_ref, c_ref, d_ref, o_ref):
    o_ref[...] = jnp.maximum(
        jnp.maximum(a_ref[...], b_ref[...]),
        jnp.maximum(c_ref[...], d_ref[...]),
    )


def maxpool_2x2(x_nhwc):
    B, H, W, C = x_nhwc.shape
    Ho, Wo = H // 2, W // 2
    # Strided sub-grid extraction is pure layout plumbing in the wrapper; the
    # reduction runs in Pallas on lane-dense (B*Ho, Wo*C) slabs.
    parts = [
        x_nhwc[:, di::2, dj::2, :].reshape(B * Ho, Wo * C)
        for di in (0, 1)
        for dj in (0, 1)
    ]
    out = pl.pallas_call(
        _max4_kernel,
        out_shape=jax.ShapeDtypeStruct((B * Ho, Wo * C), x_nhwc.dtype),
    )(*parts)
    return out.reshape(B, Ho, Wo, C)


# ---------------------------------------------------------------------------
# Conv2d (valid padding, stride 1) + ReLU via im2col + fused Pallas GEMM.
# ---------------------------------------------------------------------------
def conv2d_relu(x_nhwc, w_oihw, b):
    B, H, W, Cin = x_nhwc.shape
    Cout, Cin2, kh, kw = w_oihw.shape
    assert Cin == Cin2
    Ho, Wo = H - kh + 1, W - kw + 1

    cols = [
        x_nhwc[:, di:di + Ho, dj:dj + Wo, :]
        for di in range(kh)
        for dj in range(kw)
    ]
    patches = jnp.stack(cols, axis=3).reshape(B * Ho * Wo, kh * kw * Cin)
    # (Cout, Cin, kh, kw) -> (kh, kw, Cin, Cout) -> (kh*kw*Cin, Cout) matches
    # the (di, dj, ci) column ordering of `patches`.
    w_mat = jnp.transpose(w_oihw, (2, 3, 1, 0)).reshape(kh * kw * Cin, Cout)

    y = matmul_bias_act(patches, w_mat, b, relu=True)
    return y.reshape(B, Ho, Wo, Cout)


# ---------------------------------------------------------------------------
# Full SimpleCNN forward (salt_layer = -1 path).
# ---------------------------------------------------------------------------
def simple_cnn_forward(params, x_nchw):
    # NOTE: the PyTorch forward computes (x - mean)/std into `out` but never
    # uses it; we reproduce that behaviour (no normalization applied).
    x = jnp.transpose(x_nchw, (0, 2, 3, 1))                    # NCHW -> NHWC
    x = conv2d_relu(x, params["conv1_w"], params["conv1_b"])
    x = conv2d_relu(x, params["conv2_w"], params["conv2_b"])
    x = maxpool_2x2(x)
    x = conv2d_relu(x, params["conv3_w"], params["conv3_b"])
    x = maxpool_2x2(x)
    B = x.shape[0]
    x = jnp.transpose(x, (0, 3, 1, 2)).reshape(B, -1)          # NCHW flatten order
    return mlp3(
        x,
        params["fc1_w"].T, params["fc1_b"],
        params["fc2_w"].T, params["fc2_b"],
        params["fc3_w"].T, params["fc3_b"],
    )


# ---------------------------------------------------------------------------
# Pure-JAX reference (for an in-script correctness check).
# ---------------------------------------------------------------------------
def reference_forward(params, x):
    dn = ("NCHW", "OIHW", "NCHW")

    def conv(h, w, b):
        y = jax.lax.conv_general_dilated(h, w, (1, 1), "VALID", dimension_numbers=dn)
        return jax.nn.relu(y + b.reshape(1, -1, 1, 1))

    def pool(h):
        return jax.lax.reduce_window(
            h, -jnp.inf, jax.lax.max, (1, 1, 2, 2), (1, 1, 2, 2), "VALID"
        )

    y = conv(x, params["conv1_w"], params["conv1_b"])
    y = conv(y, params["conv2_w"], params["conv2_b"])
    y = pool(y)
    y = conv(y, params["conv3_w"], params["conv3_b"])
    y = pool(y)
    y = y.reshape(y.shape[0], -1)
    y = jax.nn.relu(y @ params["fc1_w"].T + params["fc1_b"])
    y = jax.nn.relu(y @ params["fc2_w"].T + params["fc2_b"])
    y = y @ params["fc3_w"].T + params["fc3_b"]
    return y


if __name__ == "__main__":
    # The architecture (fc_1 expects 32*4*4 features) implies 32x32 inputs.
    B, Cin, H, W = 2, 3, 32, 32
    num_classes = 10

    key = jax.random.PRNGKey(0)
    ks = jax.random.split(key, 13)
    x = jax.random.normal(ks[0], (B, Cin, H, W), dtype=jnp.float32)

    def he(k, shape, fan_in):
        return jax.random.normal(k, shape, jnp.float32) * (2.0 / fan_in) ** 0.5

    params = {
        "conv1_w": he(ks[1], (32, 3, 5, 5), 3 * 25),
        "conv1_b": jax.random.normal(ks[2], (32,), jnp.float32) * 0.1,
        "conv2_w": he(ks[3], (32, 32, 5, 5), 32 * 25),
        "conv2_b": jax.random.normal(ks[4], (32,), jnp.float32) * 0.1,
        "conv3_w": he(ks[5], (32, 32, 5, 5), 32 * 25),
        "conv3_b": jax.random.normal(ks[6], (32,), jnp.float32) * 0.1,
        "fc1_w": he(ks[7], (120, 512), 512),
        "fc1_b": jax.random.normal(ks[8], (120,), jnp.float32) * 0.1,
        "fc2_w": he(ks[9], (84, 120), 120),
        "fc2_b": jax.random.normal(ks[10], (84,), jnp.float32) * 0.1,
        "fc3_w": he(ks[11], (num_classes, 84), 84),
        "fc3_b": jax.random.normal(ks[12], (num_classes,), jnp.float32) * 0.1,
    }

    fwd = jax.jit(simple_cnn_forward)
    out = jax.block_until_ready(fwd(params, x))
    assert out.shape == (B, num_classes), out.shape

    ref = jax.block_until_ready(jax.jit(reference_forward)(params, x))
    max_err = float(jnp.max(jnp.abs(out - ref)))
    assert jnp.allclose(out, ref, rtol=2e-2, atol=2e-2), f"max abs err {max_err}"

    print("KERNEL_OK")
</pallas_src>

<mosaic_0001>
module attributes {stable_mosaic.version = 11 : i64} {
  func.func @_matmul_bias_act_kernel(%arg0: i32, %arg1: i32, %arg2: i32, %arg3: memref<224x128xf32, #tpu.memory_space<vmem>>, %arg4: memref<128x128xf32, #tpu.memory_space<vmem>>, %arg5: memref<1x128xf32, #tpu.memory_space<vmem>>, %arg6: memref<224x128xf32, #tpu.memory_space<vmem>>, %arg7: memref<224x128xf32, #tpu.memory_space<vmem>>) attributes {dimension_semantics = [#tpu.dimension_semantics<parallel>, #tpu.dimension_semantics<parallel>, #tpu.dimension_semantics<arbitrary>], iteration_bounds = array<i64: 7, 1, 1>, scalar_prefetch = 0 : i64, scratch_operands = 1 : i64, tpu.core_type = #tpu.core_type<tc>, window_params = [{transform_indices = @transform_0, window_bounds = array<i64: 224, 128>}, {transform_indices = @transform_1, window_bounds = array<i64: 128, 128>}, {transform_indices = @transform_2, window_bounds = array<i64: 1, 128>}, {transform_indices = @transform_3, window_bounds = array<i64: 224, 128>}]} {
    %c0_i32 = arith.constant 0 : i32
    %0 = arith.cmpi eq, %arg2, %c0_i32 : i32
    %1 = arith.extui %0 : i1 to i32
    %c0_i32_0 = arith.constant 0 : i32
    %2 = arith.cmpi ne, %1, %c0_i32_0 : i32
    scf.if %2 {
      %cst_10 = arith.constant 0.000000e+00 : f32
      %12 = vector.broadcast %cst_10 : f32 to vector<224x128xf32>
      %c0_11 = arith.constant 0 : index
      %c0_12 = arith.constant 0 : index
      %13 = vector.load %arg7[%c0_11, %c0_12] : memref<224x128xf32, #tpu.memory_space<vmem>>, vector<224x128xf32>
      tpu.vector_store %arg7[%c0_11, %c0_12], %12 {strides = array<i32>} : memref<224x128xf32, #tpu.memory_space<vmem>>, vector<224x128xf32>,
    } else {
    }
    %c0 = arith.constant 0 : index
    %c0_1 = arith.constant 0 : index
    %3 = vector.load %arg7[%c0, %c0_1] : memref<224x128xf32, #tpu.memory_space<vmem>>, vector<224x128xf32>
    %c0_2 = arith.constant 0 : index
    %c0_3 = arith.constant 0 : index
    %4 = vector.load %arg3[%c0_2, %c0_3] : memref<224x128xf32, #tpu.memory_space<vmem>>, vector<224x128xf32>
    %c0_4 = arith.constant 0 : index
    %c0_5 = arith.constant 0 : index
    %5 = vector.load %arg4[%c0_4, %c0_5] : memref<128x128xf32, #tpu.memory_space<vmem>>, vector<128x128xf32>
    %cst = arith.constant dense<0.000000e+00> : vector<224x128xf32>
    %6 = tpu.matmul %4, %5, %cst {dimension_numbers = #tpu.dot_dimension_numbers<[1], [0], [0], [1], [0, 0, 1, 1], [], []>} : vector<224x128xf32>, vector<128x128xf32>, vector<224x128xf32> -> vector<224x128xf32>
    %7 = arith.addf %3, %6 : vector<224x128xf32>
    %c0_6 = arith.constant 0 : index
    %c0_7 = arith.constant 0 : index
    %8 = vector.load %arg7[%c0_6, %c0_7] : memref<224x128xf32, #tpu.memory_space<vmem>>, vector<224x128xf32>
    tpu.vector_store %arg7[%c0_6, %c0_7], %7 {strides = array<i32>} : memref<224x128xf32, #tpu.memory_space<vmem>>, vector<224x128xf32>,
    %c0_i32_8 = arith.constant 0 : i32
    %9 = arith.cmpi eq, %arg2, %c0_i32_8 : i32
    %10 = arith.extui %9 : i1 to i32
    %c0_i32_9 = arith.constant 0 : i32
    %11 = arith.cmpi ne, %10, %c0_i32_9 : i32
    scf.if %11 {
      %c0_10 = arith.constant 0 : index
      %c0_11 = arith.constant 0 : index
      %12 = vector.load %arg7[%c0_10, %c0_11] : memref<224x128xf32, #tpu.memory_space<vmem>>, vector<224x128xf32>
      %c0_12 = arith.constant 0 : index
      %c0_13 = arith.constant 0 : index
      %13 = vector.load %arg5[%c0_12, %c0_13] : memref<1x128xf32, #tpu.memory_space<vmem>>, vector<1x128xf32>
      %14 = vector.broadcast %13 : vector<1x128xf32> to vector<224x128xf32>
      %15 = arith.addf %12, %14 : vector<224x128xf32>
      %cst_14 = arith.constant 0.000000e+00 : f32
      %16 = vector.broadcast %cst_14 : f32 to vector<224x128xf32>
      %17 = arith.maximumf %15, %16 : vector<224x128xf32>
      %c0_15 = arith.constant 0 : index
      %c0_16 = arith.constant 0 : index
      %18 = vector.load %arg6[%c0_15, %c0_16] : memref<224x128xf32, #tpu.memory_space<vmem>>, vector<224x128xf32>
      tpu.vector_store %arg6[%c0_15, %c0_16], %17 {strides = array<i32>} : memref<224x128xf32, #tpu.memory_space<vmem>>, vector<224x128xf32>,
    } else {
    }
    return
  }
  func.func @transform_0(%arg0: i32, %arg1: i32, %arg2: i32) -> (i32, i32) {
    %c0_i32 = arith.constant 0 : i32
    return %arg0, %arg2 : i32, i32
  }
  func.func @transform_1(%arg0: i32, %arg1: i32, %arg2: i32) -> (i32, i32) {
    %c0_i32 = arith.constant 0 : i32
    return %arg2, %arg1 : i32, i32
  }
  func.func @transform_2(%arg0: i32, %arg1: i32, %arg2: i32) -> (i32, i32) {
    %c0_i32 = arith.constant 0 : i32
    %c0_i32_0 = arith.constant 0 : i32
    return %c0_i32, %arg1 : i32, i32
  }
  func.func @transform_3(%arg0: i32, %arg1: i32, %arg2: i32) -> (i32, i32) {
    %c0_i32 = arith.constant 0 : i32
    return %arg0, %arg1 : i32, i32
  }
}

module attributes {stable_mosaic.version = 11 : i64} {
  func.func @_matmul_bias_act_kernel(%arg0: i32, %arg1: i32, %arg2: i32, %arg3: memref<192x896xf32, #tpu.memory_space<vmem>>, %arg4: memref<896x128xf32, #tpu.memory_space<vmem>>, %arg5: memref<1x128xf32, #tpu.memory_space<vmem>>, %arg6: memref<192x128xf32, #tpu.memory_space<vmem>>, %arg7: memref<192x128xf32, #tpu.memory_space<vmem>>) attributes {dimension_semantics = [#tpu.dimension_semantics<parallel>, #tpu.dimension_semantics<parallel>, #tpu.dimension_semantics<arbitrary>], iteration_bounds = array<i64: 6, 1, 1>, scalar_prefetch = 0 : i64, scratch_operands = 1 : i64, tpu.core_type = #tpu.core_type<tc>, window_params = [{transform_indices = @transform_0, window_bounds = array<i64: 192, 896>}, {transform_indices = @transform_1, window_bounds = array<i64: 896, 128>}, {transform_indices = @transform_2, window_bounds = array<i64: 1, 128>}, {transform_indices = @transform_3, window_bounds = array<i64: 192, 128>}]} {
    %c0_i32 = arith.constant 0 : i32
    %0 = arith.cmpi eq, %arg2, %c0_i32 : i32
    %1 = arith.extui %0 : i1 to i32
    %c0_i32_0 = arith.constant 0 : i32
    %2 = arith.cmpi ne, %1, %c0_i32_0 : i32
    scf.if %2 {
      %cst_10 = arith.constant 0.000000e+00 : f32
      %12 = vector.broadcast %cst_10 : f32 to vector<192x128xf32>
      %c0_11 = arith.constant 0 : index
      %c0_12 = arith.constant 0 : index
      %13 = vector.load %arg7[%c0_11, %c0_12] : memref<192x128xf32, #tpu.memory_space<vmem>>, vector<192x128xf32>
      tpu.vector_store %arg7[%c0_11, %c0_12], %12 {strides = array<i32>} : memref<192x128xf32, #tpu.memory_space<vmem>>, vector<192x128xf32>,
    } else {
    }
    %c0 = arith.constant 0 : index
    %c0_1 = arith.constant 0 : index
    %3 = vector.load %arg7[%c0, %c0_1] : memref<192x128xf32, #tpu.memory_space<vmem>>, vector<192x128xf32>
    %c0_2 = arith.constant 0 : index
    %c0_3 = arith.constant 0 : index
    %4 = vector.load %arg3[%c0_2, %c0_3] : memref<192x896xf32, #tpu.memory_space<vmem>>, vector<192x896xf32>
    %c0_4 = arith.constant 0 : index
    %c0_5 = arith.constant 0 : index
    %5 = vector.load %arg4[%c0_4, %c0_5] : memref<896x128xf32, #tpu.memory_space<vmem>>, vector<896x128xf32>
    %cst = arith.constant dense<0.000000e+00> : vector<192x128xf32>
    %6 = tpu.matmul %4, %5, %cst {dimension_numbers = #tpu.dot_dimension_numbers<[1], [0], [0], [1], [0, 0, 1, 1], [], []>} : vector<192x896xf32>, vector<896x128xf32>, vector<192x128xf32> -> vector<192x128xf32>
    %7 = arith.addf %3, %6 : vector<192x128xf32>
    %c0_6 = arith.constant 0 : index
    %c0_7 = arith.constant 0 : index
    %8 = vector.load %arg7[%c0_6, %c0_7] : memref<192x128xf32, #tpu.memory_space<vmem>>, vector<192x128xf32>
    tpu.vector_store %arg7[%c0_6, %c0_7], %7 {strides = array<i32>} : memref<192x128xf32, #tpu.memory_space<vmem>>, vector<192x128xf32>,
    %c0_i32_8 = arith.constant 0 : i32
    %9 = arith.cmpi eq, %arg2, %c0_i32_8 : i32
    %10 = arith.extui %9 : i1 to i32
    %c0_i32_9 = arith.constant 0 : i32
    %11 = arith.cmpi ne, %10, %c0_i32_9 : i32
    scf.if %11 {
      %c0_10 = arith.constant 0 : index
      %c0_11 = arith.constant 0 : index
      %12 = vector.load %arg7[%c0_10, %c0_11] : memref<192x128xf32, #tpu.memory_space<vmem>>, vector<192x128xf32>
      %c0_12 = arith.constant 0 : index
      %c0_13 = arith.constant 0 : index
      %13 = vector.load %arg5[%c0_12, %c0_13] : memref<1x128xf32, #tpu.memory_space<vmem>>, vector<1x128xf32>
      %14 = vector.broadcast %13 : vector<1x128xf32> to vector<192x128xf32>
      %15 = arith.addf %12, %14 : vector<192x128xf32>
      %cst_14 = arith.constant 0.000000e+00 : f32
      %16 = vector.broadcast %cst_14 : f32 to vector<192x128xf32>
      %17 = arith.maximumf %15, %16 : vector<192x128xf32>
      %c0_15 = arith.constant 0 : index
      %c0_16 = arith.constant 0 : index
      %18 = vector.load %arg6[%c0_15, %c0_16] : memref<192x128xf32, #tpu.memory_space<vmem>>, vector<192x128xf32>
      tpu.vector_store %arg6[%c0_15, %c0_16], %17 {strides = array<i32>} : memref<192x128xf32, #tpu.memory_space<vmem>>, vector<192x128xf32>,
    } else {
    }
    return
  }
  func.func @transform_0(%arg0: i32, %arg1: i32, %arg2: i32) -> (i32, i32) {
    %c0_i32 = arith.constant 0 : i32
    return %arg0, %arg2 : i32, i32
  }
  func.func @transform_1(%arg0: i32, %arg1: i32, %arg2: i32) -> (i32, i32) {
    %c0_i32 = arith.constant 0 : i32
    return %arg2, %arg1 : i32, i32
  }
  func.func @transform_2(%arg0: i32, %arg1: i32, %arg2: i32) -> (i32, i32) {
    %c0_i32 = arith.constant 0 : i32
    %c0_i32_0 = arith.constant 0 : i32
    return %c0_i32, %arg1 : i32, i32
  }
  func.func @transform_3(%arg0: i32, %arg1: i32, %arg2: i32) -> (i32, i32) {
    %c0_i32 = arith.constant 0 : i32
    return %arg0, %arg1 : i32, i32
  }
}

module attributes {stable_mosaic.version = 11 : i64} {
  func.func @_max4_kernel(%arg0: memref<24x384xf32, #tpu.memory_space<vmem>>, %arg1: memref<24x384xf32, #tpu.memory_space<vmem>>, %arg2: memref<24x384xf32, #tpu.memory_space<vmem>>, %arg3: memref<24x384xf32, #tpu.memory_space<vmem>>, %arg4: memref<24x384xf32, #tpu.memory_space<vmem>>) attributes {dimension_semantics = [], scalar_prefetch = 0 : i64, scratch_operands = 0 : i64, tpu.core_type = #tpu.core_type<tc>} {
    %c0 = arith.constant 0 : index
    %c0_0 = arith.constant 0 : index
    %0 = vector.load %arg0[%c0, %c0_0] : memref<24x384xf32, #tpu.memory_space<vmem>>, vector<24x384xf32>
    %c0_1 = arith.constant 0 : index
    %c0_2 = arith.constant 0 : index
    %1 = vector.load %arg1[%c0_1, %c0_2] : memref<24x384xf32, #tpu.memory_space<vmem>>, vector<24x384xf32>
    %2 = arith.maximumf %0, %1 : vector<24x384xf32>
    %c0_3 = arith.constant 0 : index
    %c0_4 = arith.constant 0 : index
    %3 = vector.load %arg2[%c0_3, %c0_4] : memref<24x384xf32, #tpu.memory_space<vmem>>, vector<24x384xf32>
    %c0_5 = arith.constant 0 : index
    %c0_6 = arith.constant 0 : index
    %4 = vector.load %arg3[%c0_5, %c0_6] : memref<24x384xf32, #tpu.memory_space<vmem>>, vector<24x384xf32>
    %5 = arith.maximumf %3, %4 : vector<24x384xf32>
    %6 = arith.maximumf %2, %5 : vector<24x384xf32>
    %c0_7 = arith.constant 0 : index
    %c0_8 = arith.constant 0 : index
    %7 = vector.load %arg4[%c0_7, %c0_8] : memref<24x384xf32, #tpu.memory_space<vmem>>, vector<24x384xf32>
    tpu.vector_store %arg4[%c0_7, %c0_8], %6 {strides = array<i32>} : memref<24x384xf32, #tpu.memory_space<vmem>>, vector<24x384xf32>,
    return
  }
}

module attributes {stable_mosaic.version = 11 : i64} {
  func.func @_matmul_bias_act_kernel(%arg0: i32, %arg1: i32, %arg2: i32, %arg3: memref<128x896xf32, #tpu.memory_space<vmem>>, %arg4: memref<896x128xf32, #tpu.memory_space<vmem>>, %arg5: memref<1x128xf32, #tpu.memory_space<vmem>>, %arg6: memref<128x128xf32, #tpu.memory_space<vmem>>, %arg7: memref<128x128xf32, #tpu.memory_space<vmem>>) attributes {dimension_semantics = [#tpu.dimension_semantics<parallel>, #tpu.dimension_semantics<parallel>, #tpu.dimension_semantics<arbitrary>], iteration_bounds = array<i64: 1, 1, 1>, scalar_prefetch = 0 : i64, scratch_operands = 1 : i64, tpu.core_type = #tpu.core_type<tc>, window_params = [{transform_indices = @transform_0, window_bounds = array<i64: 128, 896>}, {transform_indices = @transform_1, window_bounds = array<i64: 896, 128>}, {transform_indices = @transform_2, window_bounds = array<i64: 1, 128>}, {transform_indices = @transform_3, window_bounds = array<i64: 128, 128>}]} {
    %c0_i32 = arith.constant 0 : i32
    %0 = arith.cmpi eq, %arg2, %c0_i32 : i32
    %1 = arith.extui %0 : i1 to i32
    %c0_i32_0 = arith.constant 0 : i32
    %2 = arith.cmpi ne, %1, %c0_i32_0 : i32
    scf.if %2 {
      %cst_10 = arith.constant 0.000000e+00 : f32
      %12 = vector.broadcast %cst_10 : f32 to vector<128x128xf32>
      %c0_11 = arith.constant 0 : index
      %c0_12 = arith.constant 0 : index
      %13 = vector.load %arg7[%c0_11, %c0_12] : memref<128x128xf32, #tpu.memory_space<vmem>>, vector<128x128xf32>
      tpu.vector_store %arg7[%c0_11, %c0_12], %12 {strides = array<i32>} : memref<128x128xf32, #tpu.memory_space<vmem>>, vector<128x128xf32>,
    } else {
    }
    %c0 = arith.constant 0 : index
    %c0_1 = arith.constant 0 : index
    %3 = vector.load %arg7[%c0, %c0_1] : memref<128x128xf32, #tpu.memory_space<vmem>>, vector<128x128xf32>
    %c0_2 = arith.constant 0 : index
    %c0_3 = arith.constant 0 : index
    %4 = vector.load %arg3[%c0_2, %c0_3] : memref<128x896xf32, #tpu.memory_space<vmem>>, vector<128x896xf32>
    %c0_4 = arith.constant 0 : index
    %c0_5 = arith.constant 0 : index
    %5 = vector.load %arg4[%c0_4, %c0_5] : memref<896x128xf32, #tpu.memory_space<vmem>>, vector<896x128xf32>
    %cst = arith.constant dense<0.000000e+00> : vector<128x128xf32>
    %6 = tpu.matmul %4, %5, %cst {dimension_numbers = #tpu.dot_dimension_numbers<[1], [0], [0], [1], [0, 0, 1, 1], [], []>} : vector<128x896xf32>, vector<896x128xf32>, vector<128x128xf32> -> vector<128x128xf32>
    %7 = arith.addf %3, %6 : vector<128x128xf32>
    %c0_6 = arith.constant 0 : index
    %c0_7 = arith.constant 0 : index
    %8 = vector.load %arg7[%c0_6, %c0_7] : memref<128x128xf32, #tpu.memory_space<vmem>>, vector<128x128xf32>
    tpu.vector_store %arg7[%c0_6, %c0_7], %7 {strides = array<i32>} : memref<128x128xf32, #tpu.memory_space<vmem>>, vector<128x128xf32>,
    %c0_i32_8 = arith.constant 0 : i32
    %9 = arith.cmpi eq, %arg2, %c0_i32_8 : i32
    %10 = arith.extui %9 : i1 to i32
    %c0_i32_9 = arith.constant 0 : i32
    %11 = arith.cmpi ne, %10, %c0_i32_9 : i32
    scf.if %11 {
      %c0_10 = arith.constant 0 : index
      %c0_11 = arith.constant 0 : index
      %12 = vector.load %arg7[%c0_10, %c0_11] : memref<128x128xf32, #tpu.memory_space<vmem>>, vector<128x128xf32>
      %c0_12 = arith.constant 0 : index
      %c0_13 = arith.constant 0 : index
      %13 = vector.load %arg5[%c0_12, %c0_13] : memref<1x128xf32, #tpu.memory_space<vmem>>, vector<1x128xf32>
      %14 = vector.broadcast %13 : vector<1x128xf32> to vector<128x128xf32>
      %15 = arith.addf %12, %14 : vector<128x128xf32>
      %cst_14 = arith.constant 0.000000e+00 : f32
      %16 = vector.broadcast %cst_14 : f32 to vector<128x128xf32>
      %17 = arith.maximumf %15, %16 : vector<128x128xf32>
      %c0_15 = arith.constant 0 : index
      %c0_16 = arith.constant 0 : index
      %18 = vector.load %arg6[%c0_15, %c0_16] : memref<128x128xf32, #tpu.memory_space<vmem>>, vector<128x128xf32>
      tpu.vector_store %arg6[%c0_15, %c0_16], %17 {strides = array<i32>} : memref<128x128xf32, #tpu.memory_space<vmem>>, vector<128x128xf32>,
    } else {
    }
    return
  }
  func.func @transform_0(%arg0: i32, %arg1: i32, %arg2: i32) -> (i32, i32) {
    %c0_i32 = arith.constant 0 : i32
    return %arg0, %arg2 : i32, i32
  }
  func.func @transform_1(%arg0: i32, %arg1: i32, %arg2: i32) -> (i32, i32) {
    %c0_i32 = arith.constant 0 : i32
    return %arg2, %arg1 : i32, i32
  }
  func.func @transform_2(%arg0: i32, %arg1: i32, %arg2: i32) -> (i32, i32) {
    %c0_i32 = arith.constant 0 : i32
    %c0_i32_0 = arith.constant 0 : i32
    return %c0_i32, %arg1 : i32, i32
  }
  func.func @transform_3(%arg0: i32, %arg1: i32, %arg2: i32) -> (i32, i32) {
    %c0_i32 = arith.constant 0 : i32
    return %arg0, %arg1 : i32, i32
  }
}

module attributes {stable_mosaic.version = 11 : i64} {
  func.func @_max4_kernel(%arg0: memref<8x128xf32, #tpu.memory_space<vmem>>, %arg1: memref<8x128xf32, #tpu.memory_space<vmem>>, %arg2: memref<8x128xf32, #tpu.memory_space<vmem>>, %arg3: memref<8x128xf32, #tpu.memory_space<vmem>>, %arg4: memref<8x128xf32, #tpu.memory_space<vmem>>) attributes {dimension_semantics = [], scalar_prefetch = 0 : i64, scratch_operands = 0 : i64, tpu.core_type = #tpu.core_type<tc>} {
    %c0 = arith.constant 0 : index
    %c0_0 = arith.constant 0 : index
    %0 = vector.load %arg0[%c0, %c0_0] : memref<8x128xf32, #tpu.memory_space<vmem>>, vector<8x128xf32>
    %c0_1 = arith.constant 0 : index
    %c0_2 = arith.constant 0 : index
    %1 = vector.load %arg1[%c0_1, %c0_2] : memref<8x128xf32, #tpu.memory_space<vmem>>, vector<8x128xf32>
    %2 = arith.maximumf %0, %1 : vector<8x128xf32>
    %c0_3 = arith.constant 0 : index
    %c0_4 = arith.constant 0 : index
    %3 = vector.load %arg2[%c0_3, %c0_4] : memref<8x128xf32, #tpu.memory_space<vmem>>, vector<8x128xf32>
    %c0_5 = arith.constant 0 : index
    %c0_6 = arith.constant 0 : index
    %4 = vector.load %arg3[%c0_5, %c0_6] : memref<8x128xf32, #tpu.memory_space<vmem>>, vector<8x128xf32>
    %5 = arith.maximumf %3, %4 : vector<8x128xf32>
    %6 = arith.maximumf %2, %5 : vector<8x128xf32>
    %c0_7 = arith.constant 0 : index
    %c0_8 = arith.constant 0 : index
    %7 = vector.load %arg4[%c0_7, %c0_8] : memref<8x128xf32, #tpu.memory_space<vmem>>, vector<8x128xf32>
    tpu.vector_store %arg4[%c0_7, %c0_8], %6 {strides = array<i32>} : memref<8x128xf32, #tpu.memory_space<vmem>>, vector<8x128xf32>,
    return
  }
}

module attributes {stable_mosaic.version = 11 : i64} {
  func.func @_mlp3_kernel(%arg0: memref<8x512xf32, #tpu.memory_space<vmem>>, %arg1: memref<512x128xf32, #tpu.memory_space<vmem>>, %arg2: memref<1x128xf32, #tpu.memory_space<vmem>>, %arg3: memref<128x128xf32, #tpu.memory_space<vmem>>, %arg4: memref<1x128xf32, #tpu.memory_space<vmem>>, %arg5: memref<128x128xf32, #tpu.memory_space<vmem>>, %arg6: memref<1x128xf32, #tpu.memory_space<vmem>>, %arg7: memref<8x128xf32, #tpu.memory_space<vmem>>) attributes {dimension_semantics = [], scalar_prefetch = 0 : i64, scratch_operands = 0 : i64, tpu.core_type = #tpu.core_type<tc>} {
    %c0 = arith.constant 0 : index
    %c0_0 = arith.constant 0 : index
    %0 = vector.load %arg0[%c0, %c0_0] : memref<8x512xf32, #tpu.memory_space<vmem>>, vector<8x512xf32>
    %c0_1 = arith.constant 0 : index
    %c0_2 = arith.constant 0 : index
    %1 = vector.load %arg1[%c0_1, %c0_2] : memref<512x128xf32, #tpu.memory_space<vmem>>, vector<512x128xf32>
    %cst = arith.constant dense<0.000000e+00> : vector<8x128xf32>
    %2 = tpu.matmul %0, %1, %cst {dimension_numbers = #tpu.dot_dimension_numbers<[1], [0], [0], [1], [0, 0, 1, 1], [], []>} : vector<8x512xf32>, vector<512x128xf32>, vector<8x128xf32> -> vector<8x128xf32>
    %c0_3 = arith.constant 0 : index
    %c0_4 = arith.constant 0 : index
    %3 = vector.load %arg2[%c0_3, %c0_4] : memref<1x128xf32, #tpu.memory_space<vmem>>, vector<1x128xf32>
    %4 = vector.broadcast %3 : vector<1x128xf32> to vector<8x128xf32>
    %5 = arith.addf %2, %4 : vector<8x128xf32>
    %cst_5 = arith.constant 0.000000e+00 : f32
    %6 = vector.broadcast %cst_5 : f32 to vector<8x128xf32>
    %7 = arith.maximumf %5, %6 : vector<8x128xf32>
    %c0_6 = arith.constant 0 : index
    %c0_7 = arith.constant 0 : index
    %8 = vector.load %arg3[%c0_6, %c0_7] : memref<128x128xf32, #tpu.memory_space<vmem>>, vector<128x128xf32>
    %cst_8 = arith.constant dense<0.000000e+00> : vector<8x128xf32>
    %9 = tpu.matmul %7, %8, %cst_8 {dimension_numbers = #tpu.dot_dimension_numbers<[1], [0], [0], [1], [0, 0, 1, 1], [], []>} : vector<8x128xf32>, vector<128x128xf32>, vector<8x128xf32> -> vector<8x128xf32>
    %c0_9 = arith.constant 0 : index
    %c0_10 = arith.constant 0 : index
    %10 = vector.load %arg4[%c0_9, %c0_10] : memref<1x128xf32, #tpu.memory_space<vmem>>, vector<1x128xf32>
    %11 = vector.broadcast %10 : vector<1x128xf32> to vector<8x128xf32>
    %12 = arith.addf %9, %11 : vector<8x128xf32>
    %cst_11 = arith.constant 0.000000e+00 : f32
    %13 = vector.broadcast %cst_11 : f32 to vector<8x128xf32>
    %14 = arith.maximumf %12, %13 : vector<8x128xf32>
    %c0_12 = arith.constant 0 : index
    %c0_13 = arith.constant 0 : index
    %15 = vector.load %arg5[%c0_12, %c0_13] : memref<128x128xf32, #tpu.memory_space<vmem>>, vector<128x128xf32>
    %cst_14 = arith.constant dense<0.000000e+00> : vector<8x128xf32>
    %16 = tpu.matmul %14, %15, %cst_14 {dimension_numbers = #tpu.dot_dimension_numbers<[1], [0], [0], [1], [0, 0, 1, 1], [], []>} : vector<8x128xf32>, vector<128x128xf32>, vector<8x128xf32> -> vector<8x128xf32>
    %c0_15 = arith.constant 0 : index
    %c0_16 = arith.constant 0 : index
    %17 = vector.load %arg6[%c0_15, %c0_16] : memref<1x128xf32, #tpu.memory_space<vmem>>, vector<1x128xf32>
    %18 = vector.broadcast %17 : vector<1x128xf32> to vector<8x128xf32>
    %19 = arith.addf %16, %18 : vector<8x128xf32>
    %c0_17 = arith.constant 0 : index
    %c0_18 = arith.constant 0 : index
    %20 = vector.load %arg7[%c0_17, %c0_18] : memref<8x128xf32, #tpu.memory_space<vmem>>, vector<8x128xf32>
    tpu.vector_store %arg7[%c0_17, %c0_18], %19 {strides = array<i32>} : memref<8x128xf32, #tpu.memory_space<vmem>>, vector<8x128xf32>,
    return
  }
}

</mosaic_0001>

<llo_original>
// kernel: simple_cnn_forward.6
$region0: #{simple_cnn_forward.6}
  #allocation0 [shape = 'u32[]', space=smem, size = 0x4, offset = 0x4, fixed_abs, tag = 'smem constant byte address 0x4 - core index']
  #allocation1 [shape = 'u32[144,128]{1,0:T(1,128)}', space=vmem, size = 0x12000, scoped, tag = 'internal scratch']
  #allocation2 [shape = 'f32[224,128]{1,0:T(8,128)}', space=vmem, size = 0x1c000, scoped, tag = 'scratch operand']
  %s0 = inlined_call_operand.vmem [shape: f32[1568,128], index: 0, kind: input, shape index: {}]
  %s1 = inlined_call_operand.vmem [shape: f32[128,128], index: 1, kind: input, shape index: {}]
  %s2 = inlined_call_operand.vmem [shape: f32[1,128], index: 2, kind: input, shape index: {}]
  %s3 = inlined_call_operand.vmem [shape: f32[1568,128], index: 3, kind: output, shape index: {}]
  %s4 = sld [smem:[#allocation0]]
  $region53: #{simple_cnn_forward.6} parent=0
    _
  %s6 = ssub.s32 1, %s4
  %s7 = scalar_select 0, %s6, %s4
  loop: start=0, step=1, limit=9
  $region2: #{simple_cnn_forward.6} parent=0 // loop_pre_header
    _
  $region3: #{simple_cnn_forward.6} parent=0 // loop_header
    %s9 = sphi 0, %s13
    %p10 = scmp.ge.s32.totalorder %s9, 9
    %s16 = sphi 0, %s35
    %s17 = sphi 0, %s31
    %s18 = sphi 0, %s27
    %s19 = sphi 0, %s16
    %s20 = sphi 0, %s17
    %s21 = sphi 0, %s18
    %s22 = sphi 0, %s19
    %s23 = sphi 0, %s20
    %s24 = sphi 0, %s21
    %s40 = sphi 0, %s42
    %s43 = sphi 0, %s40
    %s44 = sphi 0, %s43
    %s60 = sphi 0, %s44
    %s68 = sphi 0, %s70
    %s71 = sphi 0, %s68
    %s72 = sphi 0, %s71
    %s88 = sphi 0, %s72
    %s94 = sphi 0, %s96
    %s97 = sphi 0, %s94
    %s98 = sphi 0, %s97
    %s114 = sphi 0, %s98
    %s122 = sphi 0, %s124
    %s125 = sphi 0, %s122
    %s126 = sphi 0, %s125
    %s142 = sphi 0, %s126
  $region4: #{simple_cnn_forward.6} parent=0 // loop_header_branch
    %12 = sbr.rel (%p10) target = $region8
  $region5: #{simple_cnn_forward.6} parent=0 // loop_body
    %s14 = ssub.s32 %s9, 1
    %s15 = ssub.s32 %s9, 2
    %s25 = sadd.s32 1, %s18
    %p26 = scmp.ge.s32.totalorder %s25, 1
    %s27 = scalar_select %p26, 0, %s25
    %s28 = sadd.s32 1, %s17
    %s29 = scalar_select %p26, %s28, %s17
    %p30 = scmp.ge.s32.totalorder %s29, 1
    %s31 = scalar_select %p30, 0, %s29
    %s32 = sadd.s32 1, %s16
    %s33 = scalar_select %p30, %s32, %s16
    %p34 = scmp.ge.s32.totalorder %s33, 7
    %s35 = scalar_select %p34, 0, %s33
    %s36 = ssub.s32 %s16, %s35
    %s37 = ssub.s32 %s18, %s27
    %s38 = sor.u32 %s36, %s37
    %p39 = scmp.eq.s32.totalorder %s38, 0
    %s41 = sadd.s32 %s40, 1
    %s42 = scalar_select %p39, %s40, %s41
    %p45 = pneg %p39
    %p46 = scmp.eq.s32.totalorder %s9, 6
    %p47 = por %p45, %p46
    %p48 = scmp.ne.s32.totalorder %s40, %s43
    %p49 = scmp.eq.s32.totalorder %s9, 0
    %p50 = por %p48, %p49
    %p51 = scmp.ne.s32.totalorder %s40, %s43
    %p52 = scmp.eq.s32.totalorder %s14, 6
    %p53 = por %p51, %p52
    %p54 = scmp.ne.s32.totalorder %s43, %s44
    %p55 = scmp.eq.s32.totalorder %s14, 0
    %p56 = por %p54, %p55
    %p57 = scmp.ne.s32.totalorder %s43, %s44
    %p58 = scmp.eq.s32.totalorder %s15, 6
    %p59 = por %p57, %p58
    %p61 = scmp.ne.s32.totalorder %s44, %s60
    %p62 = scmp.eq.s32.totalorder %s15, 0
    %p63 = por %p61, %p62
    %s64 = ssub.s32 %s18, %s27
    %s65 = ssub.s32 %s17, %s31
    %s66 = sor.u32 %s64, %s65
    %p67 = scmp.eq.s32.totalorder %s66, 0
    %s69 = sadd.s32 %s68, 1
    %s70 = scalar_select %p67, %s68, %s69
    %p73 = pneg %p67
    %p74 = scmp.eq.s32.totalorder %s9, 6
    %p75 = por %p73, %p74
    %p76 = scmp.ne.s32.totalorder %s68, %s71
    %p77 = scmp.eq.s32.totalorder %s9, 0
    %p78 = por %p76, %p77
    %p79 = scmp.ne.s32.totalorder %s68, %s71
    %p80 = scmp.eq.s32.totalorder %s14, 6
    %p81 = por %p79, %p80
    %p82 = scmp.ne.s32.totalorder %s71, %s72
    %p83 = scmp.eq.s32.totalorder %s14, 0
    %p84 = por %p82, %p83
    %p85 = scmp.ne.s32.totalorder %s71, %s72
    %p86 = scmp.eq.s32.totalorder %s15, 6
    %p87 = por %p85, %p86
    %p89 = scmp.ne.s32.totalorder %s72, %s88
    %p90 = scmp.eq.s32.totalorder %s15, 0
    %p91 = por %p89, %p90
    %s92 = ssub.s32 %s17, %s31
    %p93 = scmp.eq.s32.totalorder %s92, 0
    %s95 = sadd.s32 %s94, 1
    %s96 = scalar_select %p93, %s94, %s95
    %p99 = pneg %p93
    %p100 = scmp.eq.s32.totalorder %s9, 6
    %p101 = por %p99, %p100
    %p102 = scmp.ne.s32.totalorder %s94, %s97
    %p103 = scmp.eq.s32.totalorder %s9, 0
    %p104 = por %p102, %p103
    %p105 = scmp.ne.s32.totalorder %s94, %s97
    %p106 = scmp.eq.s32.totalorder %s14, 6
    %p107 = por %p105, %p106
    %p108 = scmp.ne.s32.totalorder %s97, %s98
    %p109 = scmp.eq.s32.totalorder %s14, 0
    %p110 = por %p108, %p109
    %p111 = scmp.ne.s32.totalorder %s97, %s98
    %p112 = scmp.eq.s32.totalorder %s15, 6
    %p113 = por %p111, %p112
    %p115 = scmp.ne.s32.totalorder %s98, %s114
    %p116 = scmp.eq.s32.totalorder %s15, 0
    %p117 = por %p115, %p116
    %s118 = ssub.s32 %s16, %s35
    %s119 = ssub.s32 %s17, %s31
    %s120 = sor.u32 %s118, %s119
    %p121 = scmp.eq.s32.totalorder %s120, 0
    %s123 = sadd.s32 %s122, 1
    %s124 = scalar_select %p121, %s122, %s123
    %p127 = pneg %p121
    %p128 = scmp.eq.s32.totalorder %s9, 6
    %p129 = por %p127, %p128
    %p130 = scmp.ne.s32.totalorder %s122, %s125
    %p131 = scmp.eq.s32.totalorder %s9, 0
    %p132 = por %p130, %p131
    %p133 = scmp.ne.s32.totalorder %s122, %s125
    %p134 = scmp.eq.s32.totalorder %s14, 6
    %p135 = por %p133, %p134
    %p136 = scmp.ne.s32.totalorder %s125, %s126
    %p137 = scmp.eq.s32.totalorder %s14, 0
    %p138 = por %p136, %p137
    %p139 = scmp.ne.s32.totalorder %s125, %s126
    %p140 = scmp.eq.s32.totalorder %s15, 6
    %p141 = por %p139, %p140
    %p143 = scmp.ne.s32.totalorder %s126, %s142
    %p144 = scmp.eq.s32.totalorder %s15, 0
    %p145 = por %p143, %p144
    %p146 = scmp.le.s32.totalorder 1, %s9
    %p147 = scmp.lt.s32.totalorder %s9, 8
    %p148 = pnand %p146, %p147
    %p149 = pneg %p148
    // Predicated region
    $region9: #{simple_cnn_forward.6} parent=5 // pred_check
      _
    $region10: #{simple_cnn_forward.6} parent=5 // pred_check_branch
      %151 = sbr.rel (%p148) target = $region12
    $region11: #{simple_cnn_forward.6} parent=5 // pred_region
      %s152 = ssub.s32 %s9, 1
      // Predicated region
      $region13: #{simple_cnn_forward.6} parent=11 // pred_check
        %p153 = pneg %p84
      $region14: #{simple_cnn_forward.6} parent=11 // pred_check_branch
        %155 = sbr.rel (%p153) target = $region16
      $region15: #{simple_cnn_forward.6} parent=11 // pred_region
        %s156 = smul.u32 16, %s21
        %p157 = scmp.lt.s32.totalorder %s156, 15
        %s158 = scalar_select %p157, %s156, 15
        %p159 = scmp.lt.s32.totalorder %s20, 0
        %s160 = scalar_select %p159, %s20, 0
        %s161 = sadd.s32 %s160, %s158
        %s162 = smul.addr %s161, 8
        %s163 = scalar_lea.vmem %s1, %s162
        %s164 = smul.u32 16, %s21
      $region16: #{simple_cnn_forward.6} parent=11 // pred_fallthru
        _
      // Predicated region
      $region17: #{simple_cnn_forward.6} parent=11 // pred_check
        %p165 = pneg %p110
      $region18: #{simple_cnn_forward.6} parent=11 // pred_check_branch
        %167 = sbr.rel (%p165) target = $region20
      $region19: #{simple_cnn_forward.6} parent=11 // pred_region
        %p168 = scmp.lt.s32.totalorder %s20, 0
        %s169 = scalar_select %p168, %s20, 0
        %s170 = scalar_lea.vmem %s2, %s169
      $region20: #{simple_cnn_forward.6} parent=11 // pred_fallthru
        _
    $region12: #{simple_cnn_forward.6} parent=5 // pred_fallthru
      _
    %p171 = scmp.lt.s32.totalorder %s9, 7
    // Predicated region
    $region21: #{simple_cnn_forward.6} parent=5 // pred_check
      %p172 = pneg %p171
    $region22: #{simple_cnn_forward.6} parent=5 // pred_check_branch
      %174 = sbr.rel (%p172) target = $region24
    $region23: #{simple_cnn_forward.6} parent=5 // pred_region
      // Predicated region
      $region25: #{simple_cnn_forward.6} parent=23 // pred_check
        %p175 = pneg %p50
      $region26: #{simple_cnn_forward.6} parent=23 // pred_check_branch
        %177 = sbr.rel (%p175) target = $region28
      $region27: #{simple_cnn_forward.6} parent=23 // pred_region
        %s178 = smul.u32 28, %s16
        %p179 = scmp.lt.s32.totalorder %s178, 195
        %s180 = scalar_select %p179, %s178, 195
        %p181 = scmp.lt.s32.totalorder %s18, 0
        %s182 = scalar_select %p181, %s18, 0
        %s183 = sadd.s32 %s182, %s180
        %s184 = smul.addr %s183, 8
        %s185 = scalar_lea.vmem %s0, %s184
        %s186 = smul.u32 28, %s16
      $region28: #{simple_cnn_forward.6} parent=23 // pred_fallthru
        _
    $region24: #{simple_cnn_forward.6} parent=5 // pred_fallthru
      _
    %p187 = scmp.le.s32.totalorder 1, %s9
    %p188 = scmp.lt.s32.totalorder %s9, 8
    %p189 = pnand %p187, %p188
    %p190 = pneg %p189
    // Predicated region
    $region29: #{simple_cnn_forward.6} parent=5 // pred_check
      _
    $region30: #{simple_cnn_forward.6} parent=5 // pred_check_branch
      %192 = sbr.rel (%p189) target = $region32
    $region31: #{simple_cnn_forward.6} parent=5 // pred_region
      %s193 = ssub.s32 %s9, 1
      %s194 = smul.u32 28, %s19
      %p195 = scmp.lt.s32.totalorder %s194, 195
      %s196 = scalar_select %p195, %s194, 195
      %p197 = scmp.lt.s32.totalorder %s21, 0
      %s198 = scalar_select %p197, %s21, 0
      %s199 = sadd.s32 %s198, %s196
      %s200 = smul.addr %s199, 8
      %s201 = scalar_lea.vmem %s0, %s200
      %p202 = pneg %p56
      %p203 = pneg %p53
      %s204 = smul.u32 16, %s21
      %p205 = scmp.lt.s32.totalorder %s204, 15
      %s206 = scalar_select %p205, %s204, 15
      %p207 = scmp.lt.s32.totalorder %s20, 0
      %s208 = scalar_select %p207, %s20, 0
      %s209 = sadd.s32 %s208, %s206
      %s210 = smul.addr %s209, 8
      %s211 = scalar_lea.vmem %s1, %s210
      %p212 = pneg %p84
      %p213 = pneg %p81
      %p214 = scmp.lt.s32.totalorder %s20, 0
      %s215 = scalar_select %p214, %s20, 0
      %s216 = scalar_lea.vmem %s2, %s215
      %p217 = pneg %p110
      %p218 = pneg %p107
      %p219 = pneg %p138
      %p220 = pneg %p135
      %s221 = smul.u32 28, %s19
      %p222 = scmp.lt.s32.totalorder %s221, 195
      %s223 = scalar_select %p222, %s221, 195
      %p224 = scmp.lt.s32.totalorder %s20, 0
      %s225 = scalar_select %p224, %s20, 0
      %s226 = sadd.s32 %s225, %s223
      %s227 = smul.addr %s226, 8
      %s228 = scalar_lea.vmem %s3, %s227
      %s229 = smul.u32 28, %s19
      %p230 = scmp.lt.s32.totalorder %s229, 195
      %s231 = scalar_select %p230, %s229, 195
      %p232 = scmp.lt.s32.totalorder %s21, 0
      %s233 = scalar_select %p232, %s21, 0
      %s234 = sadd.s32 %s233, %s231
      %s235 = smul.addr %s234, 8
      %s236 = scalar_lea.vmem %s0, %s235
      %s237 = smul.u32 28, %s19
      %s238 = smul.u32 16, %s21
      %p239 = scmp.lt.s32.totalorder %s238, 15
      %s240 = scalar_select %p239, %s238, 15
      %p241 = scmp.lt.s32.totalorder %s20, 0
      %s242 = scalar_select %p241, %s20, 0
      %s243 = sadd.s32 %s242, %s240
      %s244 = smul.addr %s243, 8
      %s245 = scalar_lea.vmem %s1, %s244
      %s246 = smul.u32 16, %s21
      %p247 = scmp.lt.s32.totalorder %s20, 0
      %s248 = scalar_select %p247, %s20, 0
      %s249 = scalar_lea.vmem %s2, %s248
      %s250 = smul.u32 28, %s19
      %p251 = scmp.lt.s32.totalorder %s250, 195
      %s252 = scalar_select %p251, %s250, 195
      %p253 = scmp.lt.s32.totalorder %s20, 0
      %s254 = scalar_select %p253, %s20, 0
      %s255 = sadd.s32 %s254, %s252
      %s256 = smul.addr %s255, 8
      %s257 = scalar_lea.vmem %s3, %s256
      %s258 = smul.u32 28, %s19
      %p259 = scmp.eq.s32.totalorder %s21, 0
      // Predicated region
      $region33: #{simple_cnn_forward.6} parent=31 // pred_check
        %p260 = pneg %p259
      $region34: #{simple_cnn_forward.6} parent=31 // pred_check_branch
        %262 = sbr.rel (%p260) target = $region36
      $region35: #{simple_cnn_forward.6} parent=31 // pred_region
        %263 = vst [vmem:[#allocation2] sm:$0xff] 0.0
        %264 = vst [vmem:[#allocation2 + $0x8] sm:$0xff] 0.0
        %265 = vst [vmem:[#allocation2 + $0x10] sm:$0xff] 0.0
        %266 = vst [vmem:[#allocation2 + $0x18] sm:$0xff] 0.0
        %267 = vst [vmem:[#allocation2 + $0x20] sm:$0xff] 0.0
        %268 = vst [vmem:[#allocation2 + $0x28] sm:$0xff] 0.0
        %269 = vst [vmem:[#allocation2 + $0x30] sm:$0xff] 0.0
        %270 = vst [vmem:[#allocation2 + $0x38] sm:$0xff] 0.0
        %271 = vst [vmem:[#allocation2 + $0x40] sm:$0xff] 0.0
        %272 = vst [vmem:[#allocation2 + $0x48] sm:$0xff] 0.0
        %273 = vst [vmem:[#allocation2 + $0x50] sm:$0xff] 0.0
        %274 = vst [vmem:[#allocation2 + $0x58] sm:$0xff] 0.0
        %275 = vst [vmem:[#allocation2 + $0x60] sm:$0xff] 0.0
        %276 = vst [vmem:[#allocation2 + $0x68] sm:$0xff] 0.0
        %277 = vst [vmem:[#allocation2 + $0x70] sm:$0xff] 0.0
        %278 = vst [vmem:[#allocation2 + $0x78] sm:$0xff] 0.0
        %279 = vst [vmem:[#allocation2 + $0x80] sm:$0xff] 0.0
        %280 = vst [vmem:[#allocation2 + $0x88] sm:$0xff] 0.0
        %281 = vst [vmem:[#allocation2 + $0x90] sm:$0xff] 0.0
        %282 = vst [vmem:[#allocation2 + $0x98] sm:$0xff] 0.0
        %283 = vst [vmem:[#allocation2 + $0xa0] sm:$0xff] 0.0
        %284 = vst [vmem:[#allocation2 + $0xa8] sm:$0xff] 0.0
        %285 = vst [vmem:[#allocation2 + $0xb0] sm:$0xff] 0.0
        %286 = vst [vmem:[#allocation2 + $0xb8] sm:$0xff] 0.0
        %287 = vst [vmem:[#allocation2 + $0xc0] sm:$0xff] 0.0
        %288 = vst [vmem:[#allocation2 + $0xc8] sm:$0xff] 0.0
        %289 = vst [vmem:[#allocation2 + $0xd0] sm:$0xff] 0.0
        %290 = vst [vmem:[#allocation2 + $0xd8] sm:$0xff] 0.0
      $region36: #{simple_cnn_forward.6} parent=31 // pred_fallthru
        _
      %v291 = vld [vmem:[#allocation2] sm:$0xff]
      %v292 = vld [vmem:[#allocation2 + $0x8] sm:$0xff]
      %v293 = vld [vmem:[#allocation2 + $0x10] sm:$0xff]
      %v294 = vld [vmem:[#allocation2 + $0x18] sm:$0xff]
      %v295 = vld [vmem:[#allocation2 + $0x20] sm:$0xff]
      %v296 = vld [vmem:[#allocation2 + $0x28] sm:$0xff]
      %v297 = vld [vmem:[#allocation2 + $0x30] sm:$0xff]
      %v298 = vld [vmem:[#allocation2 + $0x38] sm:$0xff]
      %v299 = vld [vmem:[#allocation2 + $0x40] sm:$0xff]
      %v300 = vld [vmem:[#allocation2 + $0x48] sm:$0xff]
      %v301 = vld [vmem:[#allocation2 + $0x50] sm:$0xff]
      %v302 = vld [vmem:[#allocation2 + $0x58] sm:$0xff]
      %v303 = vld [vmem:[#allocation2 + $0x60] sm:$0xff]
      %v304 = vld [vmem:[#allocation2 + $0x68] sm:$0xff]
      %v305 = vld [vmem:[#allocation2 + $0x70] sm:$0xff]
      %v306 = vld [vmem:[#allocation2 + $0x78] sm:$0xff]
      %v307 = vld [vmem:[#allocation2 + $0x80] sm:$0xff]
      %v308 = vld [vmem:[#allocation2 + $0x88] sm:$0xff]
      %v309 = vld [vmem:[#allocation2 + $0x90] sm:$0xff]
      %v310 = vld [vmem:[#allocation2 + $0x98] sm:$0xff]
      %v311 = vld [vmem:[#allocation2 + $0xa0] sm:$0xff]
      %v312 = vld [vmem:[#allocation2 + $0xa8] sm:$0xff]
      %v313 = vld [vmem:[#allocation2 + $0xb0] sm:$0xff]
      %v314 = vld [vmem:[#allocation2 + $0xb8] sm:$0xff]
      %v315 = vld [vmem:[#allocation2 + $0xc0] sm:$0xff]
      %v316 = vld [vmem:[#allocation2 + $0xc8] sm:$0xff]
      %v317 = vld [vmem:[#allocation2 + $0xd0] sm:$0xff]
      %v318 = vld [vmem:[#allocation2 + $0xd8] sm:$0xff]
      %v319 = vld [vmem:[%s236] sm:$0xff]
      %v320 = vld [vmem:[%s236 + $0x8] sm:$0xff]
      %v321 = vld [vmem:[%s236 + $0x10] sm:$0xff]
      %v322 = vld [vmem:[%s236 + $0x18] sm:$0xff]
      %v323 = vld [vmem:[%s236 + $0x20] sm:$0xff]
      %v324 = vld [vmem:[%s236 + $0x28] sm:$0xff]
      %v325 = vld [vmem:[%s236 + $0x30] sm:$0xff]
      %v326 = vld [vmem:[%s236 + $0x38] sm:$0xff]
      %v327 = vld [vmem:[%s236 + $0x40] sm:$0xff]
      %v328 = vld [vmem:[%s236 + $0x48] sm:$0xff]
      %v329 = vld [vmem:[%s236 + $0x50] sm:$0xff]
      %v330 = vld [vmem:[%s236 + $0x58] sm:$0xff]
      %v331 = vld [vmem:[%s236 + $0x60] sm:$0xff]
      %v332 = vld [vmem:[%s236 + $0x68] sm:$0xff]
      %v333 = vld [vmem:[%s236 + $0x70] sm:$0xff]
      %v334 = vld [vmem:[%s236 + $0x78] sm:$0xff]
      %v335 = vld [vmem:[%s236 + $0x80] sm:$0xff]
      %v336 = vld [vmem:[%s236 + $0x88] sm:$0xff]
      %v337 = vld [vmem:[%s236 + $0x90] sm:$0xff]
      %v338 = vld [vmem:[%s236 + $0x98] sm:$0xff]
      %v339 = vld [vmem:[%s236 + $0xa0] sm:$0xff]
      %v340 = vld [vmem:[%s236 + $0xa8] sm:$0xff]
      %v341 = vld [vmem:[%s236 + $0xb0] sm:$0xff]
      %v342 = vld [vmem:[%s236 + $0xb8] sm:$0xff]
      %v343 = vld [vmem:[%s236 + $0xc0] sm:$0xff]
      %v344 = vld [vmem:[%s236 + $0xc8] sm:$0xff]
      %v345 = vld [vmem:[%s236 + $0xd0] sm:$0xff]
      %v346 = vld [vmem:[%s236 + $0xd8] sm:$0xff]
      %v347 = vld [vmem:[%s245] sm:$0xff]
      %v348 = vld [vmem:[%s245 + $0x8] sm:$0xff]
      %v349 = vld [vmem:[%s245 + $0x10] sm:$0xff]
      %v350 = vld [vmem:[%s245 + $0x18] sm:$0xff]
      %v351 = vld [vmem:[%s245 + $0x20] sm:$0xff]
      %v352 = vld [vmem:[%s245 + $0x28] sm:$0xff]
      %v353 = vld [vmem:[%s245 + $0x30] sm:$0xff]
      %v354 = vld [vmem:[%s245 + $0x38] sm:$0xff]
      %v355 = vld [vmem:[%s245 + $0x40] sm:$0xff]
      %v356 = vld [vmem:[%s245 + $0x48] sm:$0xff]
      %v357 = vld [vmem:[%s245 + $0x50] sm:$0xff]
      %v358 = vld [vmem:[%s245 + $0x58] sm:$0xff]
      %v359 = vld [vmem:[%s245 + $0x60] sm:$0xff]
      %v360 = vld [vmem:[%s245 + $0x68] sm:$0xff]
      %v361 = vld [vmem:[%s245 + $0x70] sm:$0xff]
      %v362 = vld [vmem:[%s245 + $0x78] sm:$0xff]
      %363 = vmatprep.subr.mxu0 0.0
      %364 = vmatpush1.msra.mxu0 %v347
      %365 = vmatprep.subr.mxu0 0.0
      %366 = vmatpush1.msra.mxu0 %v348
      %367 = vmatprep.subr.mxu0 0.0
      %368 = vmatpush1.msra.mxu0 %v349
      %369 = vmatprep.subr.mxu0 0.0
      %370 = vmatpush1.msra.mxu0 %v350
      %371 = vmatprep.subr.mxu0 0.0
      %372 = vmatpush1.msra.mxu0 %v351
      %373 = vmatprep.subr.mxu0 0.0
      %374 = vmatpush1.msra.mxu0 %v352
      %375 = vmatprep.subr.mxu0 0.0
      %376 = vmatpush1.msra.mxu0 %v353
      %377 = vmatprep.subr.mxu0 0.0
      %378 = vmatpush1.msra.mxu0 %v354
      %379 = vmatprep.subr.mxu0 0.0
      %380 = vmatpush1.msra.mxu0 %v355
      %381 = vmatprep.subr.mxu0 0.0
      %382 = vmatpush1.msra.mxu0 %v356
      %383 = vmatprep.subr.mxu0 0.0
      %384 = vmatpush1.msra.mxu0 %v357
      %385 = vmatprep.subr.mxu0 0.0
      %386 = vmatpush1.msra.mxu0 %v358
      %387 = vmatprep.subr.mxu0 0.0
      %388 = vmatpush1.msra.mxu0 %v359
      %389 = vmatprep.subr.mxu0 0.0
      %390 = vmatpush1.msra.mxu0 %v360
      %391 = vmatprep.subr.mxu0 0.0
      %392 = vmatpush1.msra.mxu0 %v361
      %393 = vmatprep.subr.mxu0 0.0
      %394 = vmatpush1.msra.mxu0 %v362
      %395 = vmatprep.subr.mxu0 0.0
      %396 = vmatpush1.msra.mxu0 0.0
      %397 = vmatprep.subr.mxu0 0.0
      %398 = vmatpush1.msra.mxu0 0.0
      %399 = vmatprep.subr.mxu0 0.0
      %400 = vmatpush1.msra.mxu0 0.0
      %401 = vmatprep.subr.mxu0 0.0
      %402 = vmatpush1.msra.mxu0 0.0
      %403 = vmatprep.subr.mxu0 0.0
      %404 = vmatpush1.msra.mxu0 0.0
      %405 = vmatprep.subr.mxu0 0.0
      %406 = vmatpush1.msra.mxu0 0.0
      %407 = vmatprep.subr.mxu0 0.0
      %408 = vmatpush1.msra.mxu0 0.0
      %409 = vmatprep.subr.mxu0 0.0
      %410 = vmatpush1.msra.mxu0 0.0
      %411 = vmatprep.subr.mxu0 0.0
      %412 = vmatpush1.msra.mxu0 0.0
      %413 = vmatprep.subr.mxu0 0.0
      %414 = vmatpush1.msra.mxu0 0.0
      %415 = vmatprep.subr.mxu0 0.0
      %416 = vmatpush1.msra.mxu0 0.0
      %417 = vmatprep.subr.mxu0 0.0
      %418 = vmatpush1.msra.mxu0 0.0
      %419 = vmatprep.subr.mxu0 0.0
      %420 = vmatpush1.msra.mxu0 0.0
      %421 = vmatprep.subr.mxu0 0.0
      %422 = vmatpush1.msra.mxu0 0.0
      %423 = vmatprep.subr.mxu0 0.0
      %424 = vmatpush1.msra.mxu0 0.0
      %425 = vmatprep.subr.mxu0 0.0
      %426 = vmatpush1.msra.mxu0 0.0
      %427 = vmatprep.mubr.f32.mxu0 0.0
      %428 = vmatmul.mubr.f32.gmra.mrb[0].mxu0 %v319
      %v429 = vpop.f32.mrb[0].mxu0
      %v430 = vadd.f32 0.0, %v429
      %v431 = vpop.f32.mrb[0].mxu0
      %432 = vmatprep.mubr.f32.mxu0 0.0
      %433 = vmatmul.mubr.f32.gmra.mrb[0].mxu0 %v320
      %v434 = vpop.f32.mrb[0].mxu0
      %v435 = vadd.f32 0.0, %v434
      %v436 = vpop.f32.mrb[0].mxu0
      %437 = vmatprep.mubr.f32.mxu0 0.0
      %438 = vmatmul.mubr.f32.gmra.mrb[0].mxu0 %v321
      %v439 = vpop.f32.mrb[0].mxu0
      %v440 = vadd.f32 0.0, %v439
      %v441 = vpop.f32.mrb[0].mxu0
      %442 = vmatprep.mubr.f32.mxu0 0.0
      %443 = vmatmul.mubr.f32.gmra.mrb[0].mxu0 %v322
      %v444 = vpop.f32.mrb[0].mxu0
      %v445 = vadd.f32 0.0, %v444
      %v446 = vpop.f32.mrb[0].mxu0
      %447 = vmatprep.mubr.f32.mxu0 0.0
      %448 = vmatmul.mubr.f32.gmra.mrb[0].mxu0 %v323
      %v449 = vpop.f32.mrb[0].mxu0
      %v450 = vadd.f32 0.0, %v449
      %v451 = vpop.f32.mrb[0].mxu0
      %452 = vmatprep.mubr.f32.mxu0 0.0
      %453 = vmatmul.mubr.f32.gmra.mrb[0].mxu0 %v324
      %v454 = vpop.f32.mrb[0].mxu0
      %v455 = vadd.f32 0.0, %v454
      %v456 = vpop.f32.mrb[0].mxu0
      %457 = vmatprep.mubr.f32.mxu0 0.0
      %458 = vmatmul.mubr.f32.gmra.mrb[0].mxu0 %v325
      %v459 = vpop.f32.mrb[0].mxu0
      %v460 = vadd.f32 0.0, %v459
      %v461 = vpop.f32.mrb[0].mxu0
      %462 = vmatprep.mubr.f32.mxu0 0.0
      %463 = vmatmul.mubr.f32.gmra.mrb[0].mxu0 %v326
      %v464 = vpop.f32.mrb[0].mxu0
      %v465 = vadd.f32 0.0, %v464
      %v466 = vpop.f32.mrb[0].mxu0
      %467 = vmatprep.mubr.f32.mxu0 0.0
      %468 = vmatmul.mubr.f32.gmra.mrb[0].mxu0 %v327
      %v469 = vpop.f32.mrb[0].mxu0
      %v470 = vadd.f32 0.0, %v469
      %v471 = vpop.f32.mrb[0].mxu0
      %472 = vmatprep.mubr.f32.mxu0 0.0
      %473 = vmatmul.mubr.f32.gmra.mrb[0].mxu0 %v328
      %v474 = vpop.f32.mrb[0].mxu0
      %v475 = vadd.f32 0.0, %v474
      %v476 = vpop.f32.mrb[0].mxu0
      %477 = vmatprep.mubr.f32.mxu0 0.0
      %478 = vmatmul.mubr.f32.gmra.mrb[0].mxu0 %v329
      %v479 = vpop.f32.mrb[0].mxu0
      %v480 = vadd.f32 0.0, %v479
      %v481 = vpop.f32.mrb[0].mxu0
      %482 = vmatprep.mubr.f32.mxu0 0.0
      %483 = vmatmul.mubr.f32.gmra.mrb[0].mxu0 %v330
      %v484 = vpop.f32.mrb[0].mxu0
      %v485 = vadd.f32 0.0, %v484
      %v486 = vpop.f32.mrb[0].mxu0
      %487 = vmatprep.mubr.f32.mxu0 0.0
      %488 = vmatmul.mubr.f32.gmra.mrb[0].mxu0 %v331
      %v489 = vpop.f32.mrb[0].mxu0
      %v490 = vadd.f32 0.0, %v489
      %v491 = vpop.f32.mrb[0].mxu0
      %492 = vmatprep.mubr.f32.mxu0 0.0
      %493 = vmatmul.mubr.f32.gmra.mrb[0].mxu0 %v332
      %v494 = vpop.f32.mrb[0].mxu0
      %v495 = vadd.f32 0.0, %v494
      %v496 = vpop.f32.mrb[0].mxu0
      %497 = vmatprep.mubr.f32.mxu0 0.0
      %498 = vmatmul.mubr.f32.gmra.mrb[0].mxu0 %v333
      %v499 = vpop.f32.mrb[0].mxu0
      %v500 = vadd.f32 0.0, %v499
      %v501 = vpop.f32.mrb[0].mxu0
      %502 = vmatprep.mubr.f32.mxu0 0.0
      %503 = vmatmul.mubr.f32.gmra.mrb[0].mxu0 %v334
      %v504 = vpop.f32.mrb[0].mxu0
      %v505 = vadd.f32 0.0, %v504
      %v506 = vpop.f32.mrb[0].mxu0
      %507 = vmatprep.mubr.f32.mxu0 0.0
      %508 = vmatmul.mubr.f32.gmra.mrb[0].mxu0 %v335
      %v509 = vpop.f32.mrb[0].mxu0
      %v510 = vadd.f32 0.0, %v509
      %v511 = vpop.f32.mrb[0].mxu0
      %512 = vmatprep.mubr.f32.mxu0 0.0
      %513 = vmatmul.mubr.f32.gmra.mrb[0].mxu0 %v336
      %v514 = vpop.f32.mrb[0].mxu0
      %v515 = vadd.f32 0.0, %v514
      %v516 = vpop.f32.mrb[0].mxu0
      %517 = vmatprep.mubr.f32.mxu0 0.0
      %518 = vmatmul.mubr.f32.gmra.mrb[0].mxu0 %v337
      %v519 = vpop.f32.mrb[0].mxu0
      %v520 = vadd.f32 0.0, %v519
      %v521 = vpop.f32.mrb[0].mxu0
      %522 = vmatprep.mubr.f32.mxu0 0.0
      %523 = vmatmul.mubr.f32.gmra.mrb[0].mxu0 %v338
      %v524 = vpop.f32.mrb[0].mxu0
      %v525 = vadd.f32 0.0, %v524
      %v526 = vpop.f32.mrb[0].mxu0
      %527 = vmatprep.mubr.f32.mxu0 0.0
      %528 = vmatmul.mubr.f32.gmra.mrb[0].mxu0 %v339
      %v529 = vpop.f32.mrb[0].mxu0
      %v530 = vadd.f32 0.0, %v529
      %v531 = vpop.f32.mrb[0].mxu0
      %532 = vmatprep.mubr.f32.mxu0 0.0
      %533 = vmatmul.mubr.f32.gmra.mrb[0].mxu0 %v340
      %v534 = vpop.f32.mrb[0].mxu0
      %v535 = vadd.f32 0.0, %v534
      %v536 = vpop.f32.mrb[0].mxu0
      %537 = vmatprep.mubr.f32.mxu0 0.0
      %538 = vmatmul.mubr.f32.gmra.mrb[0].mxu0 %v341
      %v539 = vpop.f32.mrb[0].mxu0
      %v540 = vadd.f32 0.0, %v539
      %v541 = vpop.f32.mrb[0].mxu0
      %542 = vmatprep.mubr.f32.mxu0 0.0
      %543 = vmatmul.mubr.f32.gmra.mrb[0].mxu0 %v342
      %v544 = vpop.f32.mrb[0].mxu0
      %v545 = vadd.f32 0.0, %v544
      %v546 = vpop.f32.mrb[0].mxu0
      %547 = vmatprep.mubr.f32.mxu0 0.0
      %548 = vmatmul.mubr.f32.gmra.mrb[0].mxu0 %v343
      %v549 = vpop.f32.mrb[0].mxu0
      %v550 = vadd.f32 0.0, %v549
      %v551 = vpop.f32.mrb[0].mxu0
      %552 = vmatprep.mubr.f32.mxu0 0.0
      %553 = vmatmul.mubr.f32.gmra.mrb[0].mxu0 %v344
      %v554 = vpop.f32.mrb[0].mxu0
      %v555 = vadd.f32 0.0, %v554
      %v556 = vpop.f32.mrb[0].mxu0
      %557 = vmatprep.mubr.f32.mxu0 0.0
      %558 = vmatmul.mubr.f32.gmra.mrb[0].mxu0 %v345
      %v559 = vpop.f32.mrb[0].mxu0
      %v560 = vadd.f32 0.0, %v559
      %v561 = vpop.f32.mrb[0].mxu0
      %562 = vmatprep.mubr.f32.mxu0 0.0
      %563 = vmatmul.mubr.f32.gmra.mrb[0].mxu0 %v346
      %v564 = vpop.f32.mrb[0].mxu0
      %v565 = vadd.f32 0.0, %v564
      %v566 = vpop.f32.mrb[0].mxu0
      %567 = vdwg.mxu0
      %v568 = vadd.f32 %v291, %v430
      %v569 = vadd.f32 %v292, %v435
      %v570 = vadd.f32 %v293, %v440
      %v571 = vadd.f32 %v294, %v445
      %v572 = vadd.f32 %v295, %v450
      %v573 = vadd.f32 %v296, %v455
      %v574 = vadd.f32 %v297, %v460
      %v575 = vadd.f32 %v298, %v465
      %v576 = vadd.f32 %v299, %v470
      %v577 = vadd.f32 %v300, %v475
      %v578 = vadd.f32 %v301, %v480
      %v579 = vadd.f32 %v302, %v485
      %v580 = vadd.f32 %v303, %v490
      %v581 = vadd.f32 %v304, %v495
      %v582 = vadd.f32 %v305, %v500
      %v583 = vadd.f32 %v306, %v505
      %v584 = vadd.f32 %v307, %v510
      %v585 = vadd.f32 %v308, %v515
      %v586 = vadd.f32 %v309, %v520
      %v587 = vadd.f32 %v310, %v525
      %v588 = vadd.f32 %v311, %v530
      %v589 = vadd.f32 %v312, %v535
      %v590 = vadd.f32 %v313, %v540
      %v591 = vadd.f32 %v314, %v545
      %v592 = vadd.f32 %v315, %v550
      %v593 = vadd.f32 %v316, %v555
      %v594 = vadd.f32 %v317, %v560
      %v595 = vadd.f32 %v318, %v565
      %596 = vst [vmem:[#allocation2] sm:$0xff] %v568
      %597 = vst [vmem:[#allocation2 + $0x8] sm:$0xff] %v569
      %598 = vst [vmem:[#allocation2 + $0x10] sm:$0xff] %v570
      %599 = vst [vmem:[#allocation2 + $0x18] sm:$0xff] %v571
      %600 = vst [vmem:[#allocation2 + $0x20] sm:$0xff] %v572
      %601 = vst [vmem:[#allocation2 + $0x28] sm:$0xff] %v573
      %602 = vst [vmem:[#allocation2 + $0x30] sm:$0xff] %v574
      %603 = vst [vmem:[#allocation2 + $0x38] sm:$0xff] %v575
      %604 = vst [vmem:[#allocation2 + $0x40] sm:$0xff] %v576
      %605 = vst [vmem:[#allocation2 + $0x48] sm:$0xff] %v577
      %606 = vst [vmem:[#allocation2 + $0x50] sm:$0xff] %v578
      %607 = vst [vmem:[#allocation2 + $0x58] sm:$0xff] %v579
      %608 = vst [vmem:[#allocation2 + $0x60] sm:$0xff] %v580
      %609 = vst [vmem:[#allocation2 + $0x68] sm:$0xff] %v581
      %610 = vst [vmem:[#allocation2 + $0x70] sm:$0xff] %v582
      %611 = vst [vmem:[#allocation2 + $0x78] sm:$0xff] %v583
      %612 = vst [vmem:[#allocation2 + $0x80] sm:$0xff] %v584
      %613 = vst [vmem:[#allocation2 + $0x88] sm:$0xff] %v585
      %614 = vst [vmem:[#allocation2 + $0x90] sm:$0xff] %v586
      %615 = vst [vmem:[#allocation2 + $0x98] sm:$0xff] %v587
      %616 = vst [vmem:[#allocation2 + $0xa0] sm:$0xff] %v588
      %617 = vst [vmem:[#allocation2 + $0xa8] sm:$0xff] %v589
      %618 = vst [vmem:[#allocation2 + $0xb0] sm:$0xff] %v590
      %619 = vst [vmem:[#allocation2 + $0xb8] sm:$0xff] %v591
      %620 = vst [vmem:[#allocation2 + $0xc0] sm:$0xff] %v592
      %621 = vst [vmem:[#allocation2 + $0xc8] sm:$0xff] %v593
      %622 = vst [vmem:[#allocation2 + $0xd0] sm:$0xff] %v594
      %623 = vst [vmem:[#allocation2 + $0xd8] sm:$0xff] %v595
      // Predicated region
      $region37: #{simple_cnn_forward.6} parent=31 // pred_check
        %p624 = pneg %p259
      $region38: #{simple_cnn_forward.6} parent=31 // pred_check_branch
        %626 = sbr.rel (%p624) target = $region40
      $region39: #{simple_cnn_forward.6} parent=31 // pred_region
        %v627 = vld [vmem:[#allocation2] sm:$0xff]
        %v628 = vld [vmem:[#allocation2 + $0x8] sm:$0xff]
        %v629 = vld [vmem:[#allocation2 + $0x10] sm:$0xff]
        %v630 = vld [vmem:[#allocation2 + $0x18] sm:$0xff]
        %v631 = vld [vmem:[#allocation2 + $0x20] sm:$0xff]
        %v632 = vld [vmem:[#allocation2 + $0x28] sm:$0xff]
        %v633 = vld [vmem:[#allocation2 + $0x30] sm:$0xff]
        %v634 = vld [vmem:[#allocation2 + $0x38] sm:$0xff]
        %v635 = vld [vmem:[#allocation2 + $0x40] sm:$0xff]
        %v636 = vld [vmem:[#allocation2 + $0x48] sm:$0xff]
        %v637 = vld [vmem:[#allocation2 + $0x50] sm:$0xff]
        %v638 = vld [vmem:[#allocation2 + $0x58] sm:$0xff]
        %v639 = vld [vmem:[#allocation2 + $0x60] sm:$0xff]
        %v640 = vld [vmem:[#allocation2 + $0x68] sm:$0xff]
        %v641 = vld [vmem:[#allocation2 + $0x70] sm:$0xff]
        %v642 = vld [vmem:[#allocation2 + $0x78] sm:$0xff]
        %v643 = vld [vmem:[#allocation2 + $0x80] sm:$0xff]
        %v644 = vld [vmem:[#allocation2 + $0x88] sm:$0xff]
        %v645 = vld [vmem:[#allocation2 + $0x90] sm:$0xff]
        %v646 = vld [vmem:[#allocation2 + $0x98] sm:$0xff]
        %v647 = vld [vmem:[#allocation2 + $0xa0] sm:$0xff]
        %v648 = vld [vmem:[#allocation2 + $0xa8] sm:$0xff]
        %v649 = vld [vmem:[#allocation2 + $0xb0] sm:$0xff]
        %v650 = vld [vmem:[#allocation2 + $0xb8] sm:$0xff]
        %v651 = vld [vmem:[#allocation2 + $0xc0] sm:$0xff]
        %v652 = vld [vmem:[#allocation2 + $0xc8] sm:$0xff]
        %v653 = vld [vmem:[#allocation2 + $0xd0] sm:$0xff]
        %v654 = vld [vmem:[#allocation2 + $0xd8] sm:$0xff]
        %v655 = vld [vmem:[%s249] sm:$0x1]
        %v657 = vlaneseq
        %v658 = vshrl.u32 %v657, 7
        %v659 = vsub.s32 0, %v658
        %v660 = vrot.slane %v655, %v659
        %v662 = vadd.f32 %v627, %v660
        %v663 = vadd.f32 %v628, %v660
        %v664 = vadd.f32 %v629, %v660
        %v665 = vadd.f32 %v630, %v660
        %v666 = vadd.f32 %v631, %v660
        %v667 = vadd.f32 %v632, %v660
        %v668 = vadd.f32 %v633, %v660
        %v669 = vadd.f32 %v634, %v660
        %v670 = vadd.f32 %v635, %v660
        %v671 = vadd.f32 %v636, %v660
        %v672 = vadd.f32 %v637, %v660
        %v673 = vadd.f32 %v638, %v660
        %v674 = vadd.f32 %v639, %v660
        %v675 = vadd.f32 %v640, %v660
        %v676 = vadd.f32 %v641, %v660
        %v677 = vadd.f32 %v642, %v660
        %v678 = vadd.f32 %v643, %v660
        %v679 = vadd.f32 %v644, %v660
        %v680 = vadd.f32 %v645, %v660
        %v681 = vadd.f32 %v646, %v660
        %v682 = vadd.f32 %v647, %v660
        %v683 = vadd.f32 %v648, %v660
        %v684 = vadd.f32 %v649, %v660
        %v685 = vadd.f32 %v650, %v660
        %v686 = vadd.f32 %v651, %v660
        %v687 = vadd.f32 %v652, %v660
        %v688 = vadd.f32 %v653, %v660
        %v689 = vadd.f32 %v654, %v660
        %v690 = vmax.f32 %v662, 0.0
        %v691 = vmax.f32 %v663, 0.0
        %v692 = vmax.f32 %v664, 0.0
        %v693 = vmax.f32 %v665, 0.0
        %v694 = vmax.f32 %v666, 0.0
        %v695 = vmax.f32 %v667, 0.0
        %v696 = vmax.f32 %v668, 0.0
        %v697 = vmax.f32 %v669, 0.0
        %v698 = vmax.f32 %v670, 0.0
        %v699 = vmax.f32 %v671, 0.0
        %v700 = vmax.f32 %v672, 0.0
        %v701 = vmax.f32 %v673, 0.0
        %v702 = vmax.f32 %v674, 0.0
        %v703 = vmax.f32 %v675, 0.0
        %v704 = vmax.f32 %v676, 0.0
        %v705 = vmax.f32 %v677, 0.0
        %v706 = vmax.f32 %v678, 0.0
        %v707 = vmax.f32 %v679, 0.0
        %v708 = vmax.f32 %v680, 0.0
        %v709 = vmax.f32 %v681, 0.0
        %v710 = vmax.f32 %v682, 0.0
        %v711 = vmax.f32 %v683, 0.0
        %v712 = vmax.f32 %v684, 0.0
        %v713 = vmax.f32 %v685, 0.0
        %v714 = vmax.f32 %v686, 0.0
        %v715 = vmax.f32 %v687, 0.0
        %v716 = vmax.f32 %v688, 0.0
        %v717 = vmax.f32 %v689, 0.0
        %718 = vst [vmem:[%s257] sm:$0xff] %v690
        %719 = vst [vmem:[%s257 + $0x8] sm:$0xff] %v691
        %720 = vst [vmem:[%s257 + $0x10] sm:$0xff] %v692
        %721 = vst [vmem:[%s257 + $0x18] sm:$0xff] %v693
        %722 = vst [vmem:[%s257 + $0x20] sm:$0xff] %v694
        %723 = vst [vmem:[%s257 + $0x28] sm:$0xff] %v695
        %724 = vst [vmem:[%s257 + $0x30] sm:$0xff] %v696
        %725 = vst [vmem:[%s257 + $0x38] sm:$0xff] %v697
        %726 = vst [vmem:[%s257 + $0x40] sm:$0xff] %v698
        %727 = vst [vmem:[%s257 + $0x48] sm:$0xff] %v699
        %728 = vst [vmem:[%s257 + $0x50] sm:$0xff] %v700
        %729 = vst [vmem:[%s257 + $0x58] sm:$0xff] %v701
        %730 = vst [vmem:[%s257 + $0x60] sm:$0xff] %v702
        %731 = vst [vmem:[%s257 + $0x68] sm:$0xff] %v703
        %732 = vst [vmem:[%s257 + $0x70] sm:$0xff] %v704
        %733 = vst [vmem:[%s257 + $0x78] sm:$0xff] %v705
        %734 = vst [vmem:[%s257 + $0x80] sm:$0xff] %v706
        %735 = vst [vmem:[%s257 + $0x88] sm:$0xff] %v707
        %736 = vst [vmem:[%s257 + $0x90] sm:$0xff] %v708
        %737 = vst [vmem:[%s257 + $0x98] sm:$0xff] %v709
        %738 = vst [vmem:[%s257 + $0xa0] sm:$0xff] %v710
        %739 = vst [vmem:[%s257 + $0xa8] sm:$0xff] %v711
        %740 = vst [vmem:[%s257 + $0xb0] sm:$0xff] %v712
        %741 = vst [vmem:[%s257 + $0xb8] sm:$0xff] %v713
        %742 = vst [vmem:[%s257 + $0xc0] sm:$0xff] %v714
        %743 = vst [vmem:[%s257 + $0xc8] sm:$0xff] %v715
        %744 = vst [vmem:[%s257 + $0xd0] sm:$0xff] %v716
        %745 = vst [vmem:[%s257 + $0xd8] sm:$0xff] %v717
      $region40: #{simple_cnn_forward.6} parent=31 // pred_fallthru
        _
      %s746 = smul.u32 28, %s19
      %p747 = scmp.lt.s32.totalorder %s746, 195
      %s748 = scalar_select %p747, %s746, 195
      %p749 = scmp.lt.s32.totalorder %s20, 0
      %s750 = scalar_select %p749, %s20, 0
      %s751 = sadd.s32 %s750, %s748
      %s752 = smul.addr %s751, 8
      %s753 = scalar_lea.vmem %s3, %s752
      // Predicated region
      $region41: #{simple_cnn_forward.6} parent=31 // pred_check
        %p754 = pneg %p135
      $region42: #{simple_cnn_forward.6} parent=31 // pred_check_branch
        %756 = sbr.rel (%p754) target = $region44
      $region43: #{simple_cnn_forward.6} parent=31 // pred_region
        %s757 = smul.u32 28, %s19
      $region44: #{simple_cnn_forward.6} parent=31 // pred_fallthru
        _
    $region32: #{simple_cnn_forward.6} parent=5 // pred_fallthru
      _
    %p758 = scmp.le.s32.totalorder 2, %s9
    // Predicated region
    $region45: #{simple_cnn_forward.6} parent=5 // pred_check
      %p759 = pneg %p758
    $region46: #{simple_cnn_forward.6} parent=5 // pred_check_branch
      %761 = sbr.rel (%p759) target = $region48
    $region47: #{simple_cnn_forward.6} parent=5 // pred_region
      %s762 = ssub.s32 %s9, 2
      // Predicated region
      $region49: #{simple_cnn_forward.6} parent=47 // pred_check
        %p763 = pneg %p141
      $region50: #{simple_cnn_forward.6} parent=47 // pred_check_branch
        %765 = sbr.rel (%p763) target = $region52
      $region51: #{simple_cnn_forward.6} parent=47 // pred_region
        %s766 = smul.u32 28, %s22
        %p767 = scmp.lt.s32.totalorder %s766, 195
        %s768 = scalar_select %p767, %s766, 195
        %p769 = scmp.lt.s32.totalorder %s23, 0
        %s770 = scalar_select %p769, %s23, 0
        %s771 = sadd.s32 %s770, %s768
        %s772 = smul.addr %s771, 8
        %s773 = scalar_lea.vmem %s3, %s772
      $region52: #{simple_cnn_forward.6} parent=47 // pred_fallthru
        _
    $region48: #{simple_cnn_forward.6} parent=5 // pred_fallthru
      _
  $region6: #{simple_cnn_forward.6} parent=0 // loop_footer
    %s13 = sadd.s32 1, %s9
  $region7: #{simple_cnn_forward.6} parent=0 // loop_footer_branch
    %8 = sbr.rel target = $region3
  $region8: #{simple_cnn_forward.6} parent=0 // loop_exit
    _

// kernel: simple_cnn_forward.7
$region0: #{simple_cnn_forward.7}
  #allocation0 [shape = 'u32[]', space=smem, size = 0x4, offset = 0x4, fixed_abs, tag = 'smem constant byte address 0x4 - core index']
  #allocation1 [shape = 'u32[144,128]{1,0:T(1,128)}', space=vmem, size = 0x12000, scoped, tag = 'internal scratch']
  #allocation2 [shape = 'f32[192,128]{1,0:T(8,128)}', space=vmem, size = 0x18000, scoped, tag = 'scratch operand']
  %s0 = inlined_call_operand.vmem [shape: f32[1152,896], index: 0, kind: input, shape index: {}]
  %s1 = inlined_call_operand.vmem [shape: f32[896,128], index: 1, kind: input, shape index: {}]
  %s2 = inlined_call_operand.vmem [shape: f32[1,128], index: 2, kind: input, shape index: {}]
  %s3 = inlined_call_operand.vmem [shape: f32[1152,128], index: 3, kind: output, shape index: {}]
  %s4 = sld [smem:[#allocation0]]
  $region53: #{simple_cnn_forward.7} parent=0
    _
  %s6 = ssub.s32 1, %s4
  %s7 = scalar_select 0, %s6, %s4
  loop: start=0, step=1, limit=8
  $region2: #{simple_cnn_forward.7} parent=0 // loop_pre_header
    _
  $region3: #{simple_cnn_forward.7} parent=0 // loop_header
    %s9 = sphi 0, %s13
    %p10 = scmp.ge.s32.totalorder %s9, 8
    %s16 = sphi 0, %s35
    %s17 = sphi 0, %s31
    %s18 = sphi 0, %s27
    %s19 = sphi 0, %s16
    %s20 = sphi 0, %s17
    %s21 = sphi 0, %s18
    %s22 = sphi 0, %s19
    %s23 = sphi 0, %s20
    %s24 = sphi 0, %s21
    %s40 = sphi 0, %s42
    %s43 = sphi 0, %s40
    %s44 = sphi 0, %s43
    %s60 = sphi 0, %s44
    %s68 = sphi 0, %s70
    %s71 = sphi 0, %s68
    %s72 = sphi 0, %s71
    %s88 = sphi 0, %s72
    %s94 = sphi 0, %s96
    %s97 = sphi 0, %s94
    %s98 = sphi 0, %s97
    %s114 = sphi 0, %s98
    %s122 = sphi 0, %s124
    %s125 = sphi 0, %s122
    %s126 = sphi 0, %s125
    %s142 = sphi 0, %s126
  $region4: #{simple_cnn_forward.7} parent=0 // loop_header_branch
    %12 = sbr.rel (%p10) target = $region8
  $region5: #{simple_cnn_forward.7} parent=0 // loop_body
    %s14 = ssub.s32 %s9, 1
    %s15 = ssub.s32 %s9, 2
    %s25 = sadd.s32 1, %s18
    %p26 = scmp.ge.s32.totalorder %s25, 1
    %s27 = scalar_select %p26, 0, %s25
    %s28 = sadd.s32 1, %s17
    %s29 = scalar_select %p26, %s28, %s17
    %p30 = scmp.ge.s32.totalorder %s29, 1
    %s31 = scalar_select %p30, 0, %s29
    %s32 = sadd.s32 1, %s16
    %s33 = scalar_select %p30, %s32, %s16
    %p34 = scmp.ge.s32.totalorder %s33, 6
    %s35 = scalar_select %p34, 0, %s33
    %s36 = ssub.s32 %s16, %s35
    %s37 = ssub.s32 %s18, %s27
    %s38 = sor.u32 %s36, %s37
    %p39 = scmp.eq.s32.totalorder %s38, 0
    %s41 = sadd.s32 %s40, 1
    %s42 = scalar_select %p39, %s40, %s41
    %p45 = pneg %p39
    %p46 = scmp.eq.s32.totalorder %s9, 5
    %p47 = por %p45, %p46
    %p48 = scmp.ne.s32.totalorder %s40, %s43
    %p49 = scmp.eq.s32.totalorder %s9, 0
    %p50 = por %p48, %p49
    %p51 = scmp.ne.s32.totalorder %s40, %s43
    %p52 = scmp.eq.s32.totalorder %s14, 5
    %p53 = por %p51, %p52
    %p54 = scmp.ne.s32.totalorder %s43, %s44
    %p55 = scmp.eq.s32.totalorder %s14, 0
    %p56 = por %p54, %p55
    %p57 = scmp.ne.s32.totalorder %s43, %s44
    %p58 = scmp.eq.s32.totalorder %s15, 5
    %p59 = por %p57, %p58
    %p61 = scmp.ne.s32.totalorder %s44, %s60
    %p62 = scmp.eq.s32.totalorder %s15, 0
    %p63 = por %p61, %p62
    %s64 = ssub.s32 %s18, %s27
    %s65 = ssub.s32 %s17, %s31
    %s66 = sor.u32 %s64, %s65
    %p67 = scmp.eq.s32.totalorder %s66, 0
    %s69 = sadd.s32 %s68, 1
    %s70 = scalar_select %p67, %s68, %s69
    %p73 = pneg %p67
    %p74 = scmp.eq.s32.totalorder %s9, 5
    %p75 = por %p73, %p74
    %p76 = scmp.ne.s32.totalorder %s68, %s71
    %p77 = scmp.eq.s32.totalorder %s9, 0
    %p78 = por %p76, %p77
    %p79 = scmp.ne.s32.totalorder %s68, %s71
    %p80 = scmp.eq.s32.totalorder %s14, 5
    %p81 = por %p79, %p80
    %p82 = scmp.ne.s32.totalorder %s71, %s72
    %p83 = scmp.eq.s32.totalorder %s14, 0
    %p84 = por %p82, %p83
    %p85 = scmp.ne.s32.totalorder %s71, %s72
    %p86 = scmp.eq.s32.totalorder %s15, 5
    %p87 = por %p85, %p86
    %p89 = scmp.ne.s32.totalorder %s72, %s88
    %p90 = scmp.eq.s32.totalorder %s15, 0
    %p91 = por %p89, %p90
    %s92 = ssub.s32 %s17, %s31
    %p93 = scmp.eq.s32.totalorder %s92, 0
    %s95 = sadd.s32 %s94, 1
    %s96 = scalar_select %p93, %s94, %s95
    %p99 = pneg %p93
    %p100 = scmp.eq.s32.totalorder %s9, 5
    %p101 = por %p99, %p100
    %p102 = scmp.ne.s32.totalorder %s94, %s97
    %p103 = scmp.eq.s32.totalorder %s9, 0
    %p104 = por %p102, %p103
    %p105 = scmp.ne.s32.totalorder %s94, %s97
    %p106 = scmp.eq.s32.totalorder %s14, 5
    %p107 = por %p105, %p106
    %p108 = scmp.ne.s32.totalorder %s97, %s98
    %p109 = scmp.eq.s32.totalorder %s14, 0
    %p110 = por %p108, %p109
    %p111 = scmp.ne.s32.totalorder %s97, %s98
    %p112 = scmp.eq.s32.totalorder %s15, 5
    %p113 = por %p111, %p112
    %p115 = scmp.ne.s32.totalorder %s98, %s114
    %p116 = scmp.eq.s32.totalorder %s15, 0
    %p117 = por %p115, %p116
    %s118 = ssub.s32 %s16, %s35
    %s119 = ssub.s32 %s17, %s31
    %s120 = sor.u32 %s118, %s119
    %p121 = scmp.eq.s32.totalorder %s120, 0
    %s123 = sadd.s32 %s122, 1
    %s124 = scalar_select %p121, %s122, %s123
    %p127 = pneg %p121
    %p128 = scmp.eq.s32.totalorder %s9, 5
    %p129 = por %p127, %p128
    %p130 = scmp.ne.s32.totalorder %s122, %s125
    %p131 = scmp.eq.s32.totalorder %s9, 0
    %p132 = por %p130, %p131
    %p133 = scmp.ne.s32.totalorder %s122, %s125
    %p134 = scmp.eq.s32.totalorder %s14, 5
    %p135 = por %p133, %p134
    %p136 = scmp.ne.s32.totalorder %s125, %s126
    %p137 = scmp.eq.s32.totalorder %s14, 0
    %p138 = por %p136, %p137
    %p139 = scmp.ne.s32.totalorder %s125, %s126
    %p140 = scmp.eq.s32.totalorder %s15, 5
    %p141 = por %p139, %p140
    %p143 = scmp.ne.s32.totalorder %s126, %s142
    %p144 = scmp.eq.s32.totalorder %s15, 0
    %p145 = por %p143, %p144
    %p146 = scmp.le.s32.totalorder 1, %s9
    %p147 = scmp.lt.s32.totalorder %s9, 7
    %p148 = pnand %p146, %p147
    %p149 = pneg %p148
    // Predicated region
    $region9: #{simple_cnn_forward.7} parent=5 // pred_check
      _
    $region10: #{simple_cnn_forward.7} parent=5 // pred_check_branch
      %151 = sbr.rel (%p148) target = $region12
    $region11: #{simple_cnn_forward.7} parent=5 // pred_region
      %s152 = ssub.s32 %s9, 1
      // Predicated region
      $region13: #{simple_cnn_forward.7} parent=11 // pred_check
        %p153 = pneg %p84
      $region14: #{simple_cnn_forward.7} parent=11 // pred_check_branch
        %155 = sbr.rel (%p153) target = $region16
      $region15: #{simple_cnn_forward.7} parent=11 // pred_region
        %s156 = smul.u32 112, %s21
        %p157 = scmp.lt.s32.totalorder %s156, 111
        %s158 = scalar_select %p157, %s156, 111
        %p159 = scmp.lt.s32.totalorder %s20, 0
        %s160 = scalar_select %p159, %s20, 0
        %s161 = sadd.s32 %s160, %s158
        %s162 = smul.addr %s161, 8
        %s163 = scalar_lea.vmem %s1, %s162
        %s164 = smul.u32 112, %s21
      $region16: #{simple_cnn_forward.7} parent=11 // pred_fallthru
        _
      // Predicated region
      $region17: #{simple_cnn_forward.7} parent=11 // pred_check
        %p165 = pneg %p110
      $region18: #{simple_cnn_forward.7} parent=11 // pred_check_branch
        %167 = sbr.rel (%p165) target = $region20
      $region19: #{simple_cnn_forward.7} parent=11 // pred_region
        %p168 = scmp.lt.s32.totalorder %s20, 0
        %s169 = scalar_select %p168, %s20, 0
        %s170 = scalar_lea.vmem %s2, %s169
      $region20: #{simple_cnn_forward.7} parent=11 // pred_fallthru
        _
    $region12: #{simple_cnn_forward.7} parent=5 // pred_fallthru
      _
    %p171 = scmp.lt.s32.totalorder %s9, 6
    // Predicated region
    $region21: #{simple_cnn_forward.7} parent=5 // pred_check
      %p172 = pneg %p171
    $region22: #{simple_cnn_forward.7} parent=5 // pred_check_branch
      %174 = sbr.rel (%p172) target = $region24
    $region23: #{simple_cnn_forward.7} parent=5 // pred_region
      // Predicated region
      $region25: #{simple_cnn_forward.7} parent=23 // pred_check
        %p175 = pneg %p50
      $region26: #{simple_cnn_forward.7} parent=23 // pred_check_branch
        %177 = sbr.rel (%p175) target = $region28
      $region27: #{simple_cnn_forward.7} parent=23 // pred_region
        %s178 = smul.u32 24, %s16
        %s179 = smul.u32 7, %s18
        %p180 = scmp.lt.s32.totalorder %s178, 143
        %s181 = scalar_select %p180, %s178, 143
        %p182 = scmp.lt.s32.totalorder %s179, 6
        %s183 = scalar_select %p182, %s179, 6
        %s184 = smul.addr %s181, 7
        %s185 = sadd.s32 %s183, %s184
        %s186 = smul.addr %s185, 8
        %s187 = scalar_lea.vmem %s0, %s186
        %s188 = smul.u32 24, %s16
        %s189 = smul.u32 7, %s18
      $region28: #{simple_cnn_forward.7} parent=23 // pred_fallthru
        _
    $region24: #{simple_cnn_forward.7} parent=5 // pred_fallthru
      _
    %p190 = scmp.le.s32.totalorder 1, %s9
    %p191 = scmp.lt.s32.totalorder %s9, 7
    %p192 = pnand %p190, %p191
    %p193 = pneg %p192
    // Predicated region
    $region29: #{simple_cnn_forward.7} parent=5 // pred_check
      _
    $region30: #{simple_cnn_forward.7} parent=5 // pred_check_branch
      %195 = sbr.rel (%p192) target = $region32
    $region31: #{simple_cnn_forward.7} parent=5 // pred_region
      %s196 = ssub.s32 %s9, 1
      %s197 = smul.u32 24, %s19
      %s198 = smul.u32 7, %s21
      %p199 = scmp.lt.s32.totalorder %s197, 143
      %s200 = scalar_select %p199, %s197, 143
      %p201 = scmp.lt.s32.totalorder %s198, 6
      %s202 = scalar_select %p201, %s198, 6
      %s203 = smul.addr %s200, 7
      %s204 = sadd.s32 %s202, %s203
      %s205 = smul.addr %s204, 8
      %s206 = scalar_lea.vmem %s0, %s205
      %p207 = pneg %p56
      %p208 = pneg %p53
      %s209 = smul.u32 112, %s21
      %p210 = scmp.lt.s32.totalorder %s209, 111
      %s211 = scalar_select %p210, %s209, 111
      %p212 = scmp.lt.s32.totalorder %s20, 0
      %s213 = scalar_select %p212, %s20, 0
      %s214 = sadd.s32 %s213, %s211
      %s215 = smul.addr %s214, 8
      %s216 = scalar_lea.vmem %s1, %s215
      %p217 = pneg %p84
      %p218 = pneg %p81
      %p219 = scmp.lt.s32.totalorder %s20, 0
      %s220 = scalar_select %p219, %s20, 0
      %s221 = scalar_lea.vmem %s2, %s220
      %p222 = pneg %p110
      %p223 = pneg %p107
      %p224 = pneg %p138
      %p225 = pneg %p135
      %s226 = smul.u32 24, %s19
      %p227 = scmp.lt.s32.totalorder %s226, 143
      %s228 = scalar_select %p227, %s226, 143
      %p229 = scmp.lt.s32.totalorder %s20, 0
      %s230 = scalar_select %p229, %s20, 0
      %s231 = sadd.s32 %s230, %s228
      %s232 = smul.addr %s231, 8
      %s233 = scalar_lea.vmem %s3, %s232
      %s234 = smul.u32 24, %s19
      %s235 = smul.u32 7, %s21
      %p236 = scmp.lt.s32.totalorder %s234, 143
      %s237 = scalar_select %p236, %s234, 143
      %p238 = scmp.lt.s32.totalorder %s235, 6
      %s239 = scalar_select %p238, %s235, 6
      %s240 = smul.addr %s237, 7
      %s241 = sadd.s32 %s239, %s240
      %s242 = smul.addr %s241, 8
      %s243 = scalar_lea.vmem %s0, %s242
      %s244 = smul.u32 24, %s19
      %s245 = smul.u32 7, %s21
      %s246 = smul.u32 112, %s21
      %p247 = scmp.lt.s32.totalorder %s246, 111
      %s248 = scalar_select %p247, %s246, 111
      %p249 = scmp.lt.s32.totalorder %s20, 0
      %s250 = scalar_select %p249, %s20, 0
      %s251 = sadd.s32 %s250, %s248
      %s252 = smul.addr %s251, 8
      %s253 = scalar_lea.vmem %s1, %s252
      %s254 = smul.u32 112, %s21
      %p255 = scmp.lt.s32.totalorder %s20, 0
      %s256 = scalar_select %p255, %s20, 0
      %s257 = scalar_lea.vmem %s2, %s256
      %s258 = smul.u32 24, %s19
      %p259 = scmp.lt.s32.totalorder %s258, 143
      %s260 = scalar_select %p259, %s258, 143
      %p261 = scmp.lt.s32.totalorder %s20, 0
      %s262 = scalar_select %p261, %s20, 0
      %s263 = sadd.s32 %s262, %s260
      %s264 = smul.addr %s263, 8
      %s265 = scalar_lea.vmem %s3, %s264
      %s266 = smul.u32 24, %s19
      %p267 = scmp.eq.s32.totalorder %s21, 0
      // Predicated region
      $region33: #{simple_cnn_forward.7} parent=31 // pred_check
        %p268 = pneg %p267
      $region34: #{simple_cnn_forward.7} parent=31 // pred_check_branch
        %270 = sbr.rel (%p268) target = $region36
      $region35: #{simple_cnn_forward.7} parent=31 // pred_region
        %271 = vst [vmem:[#allocation2] sm:$0xff] 0.0
        %272 = vst [vmem:[#allocation2 + $0x8] sm:$0xff] 0.0
        %273 = vst [vmem:[#allocation2 + $0x10] sm:$0xff] 0.0
        %274 = vst [vmem:[#allocation2 + $0x18] sm:$0xff] 0.0
        %275 = vst [vmem:[#allocation2 + $0x20] sm:$0xff] 0.0
        %276 = vst [vmem:[#allocation2 + $0x28] sm:$0xff] 0.0
        %277 = vst [vmem:[#allocation2 + $0x30] sm:$0xff] 0.0
        %278 = vst [vmem:[#allocation2 + $0x38] sm:$0xff] 0.0
        %279 = vst [vmem:[#allocation2 + $0x40] sm:$0xff] 0.0
        %280 = vst [vmem:[#allocation2 + $0x48] sm:$0xff] 0.0
        %281 = vst [vmem:[#allocation2 + $0x50] sm:$0xff] 0.0
        %282 = vst [vmem:[#allocation2 + $0x58] sm:$0xff] 0.0
        %283 = vst [vmem:[#allocation2 + $0x60] sm:$0xff] 0.0
        %284 = vst [vmem:[#allocation2 + $0x68] sm:$0xff] 0.0
        %285 = vst [vmem:[#allocation2 + $0x70] sm:$0xff] 0.0
        %286 = vst [vmem:[#allocation2 + $0x78] sm:$0xff] 0.0
        %287 = vst [vmem:[#allocation2 + $0x80] sm:$0xff] 0.0
        %288 = vst [vmem:[#allocation2 + $0x88] sm:$0xff] 0.0
        %289 = vst [vmem:[#allocation2 + $0x90] sm:$0xff] 0.0
        %290 = vst [vmem:[#allocation2 + $0x98] sm:$0xff] 0.0
        %291 = vst [vmem:[#allocation2 + $0xa0] sm:$0xff] 0.0
        %292 = vst [vmem:[#allocation2 + $0xa8] sm:$0xff] 0.0
        %293 = vst [vmem:[#allocation2 + $0xb0] sm:$0xff] 0.0
        %294 = vst [vmem:[#allocation2 + $0xb8] sm:$0xff] 0.0
      $region36: #{simple_cnn_forward.7} parent=31 // pred_fallthru
        _
      %v295 = vld [vmem:[#allocation2] sm:$0xff]
      %v296 = vld [vmem:[#allocation2 + $0x8] sm:$0xff]
      %v297 = vld [vmem:[#allocation2 + $0x10] sm:$0xff]
      %v298 = vld [vmem:[#allocation2 + $0x18] sm:$0xff]
      %v299 = vld [vmem:[#allocation2 + $0x20] sm:$0xff]
      %v300 = vld [vmem:[#allocation2 + $0x28] sm:$0xff]
      %v301 = vld [vmem:[#allocation2 + $0x30] sm:$0xff]
      %v302 = vld [vmem:[#allocation2 + $0x38] sm:$0xff]
      %v303 = vld [vmem:[#allocation2 + $0x40] sm:$0xff]
      %v304 = vld [vmem:[#allocation2 + $0x48] sm:$0xff]
      %v305 = vld [vmem:[#allocation2 + $0x50] sm:$0xff]
      %v306 = vld [vmem:[#allocation2 + $0x58] sm:$0xff]
      %v307 = vld [vmem:[#allocation2 + $0x60] sm:$0xff]
      %v308 = vld [vmem:[#allocation2 + $0x68] sm:$0xff]
      %v309 = vld [vmem:[#allocation2 + $0x70] sm:$0xff]
      %v310 = vld [vmem:[#allocation2 + $0x78] sm:$0xff]
      %v311 = vld [vmem:[#allocation2 + $0x80] sm:$0xff]
      %v312 = vld [vmem:[#allocation2 + $0x88] sm:$0xff]
      %v313 = vld [vmem:[#allocation2 + $0x90] sm:$0xff]
      %v314 = vld [vmem:[#allocation2 + $0x98] sm:$0xff]
      %v315 = vld [vmem:[#allocation2 + $0xa0] sm:$0xff]
      %v316 = vld [vmem:[#allocation2 + $0xa8] sm:$0xff]
      %v317 = vld [vmem:[#allocation2 + $0xb0] sm:$0xff]
      %v318 = vld [vmem:[#allocation2 + $0xb8] sm:$0xff]
      %v319 = vld [vmem:[%s243] sm:$0xff]
      %v320 = vld [vmem:[%s243 + $0x8] sm:$0xff]
      %v321 = vld [vmem:[%s243 + $0x10] sm:$0xff]
      %v322 = vld [vmem:[%s243 + $0x18] sm:$0xff]
      %v323 = vld [vmem:[%s243 + $0x20] sm:$0xff]
      %v324 = vld [vmem:[%s243 + $0x28] sm:$0xff]
      %v325 = vld [vmem:[%s243 + $0x30] sm:$0xff]
      %v326 = vld [vmem:[%s243 + $0x38] sm:$0xff]
      %v327 = vld [vmem:[%s243 + $0x40] sm:$0xff]
      %v328 = vld [vmem:[%s243 + $0x48] sm:$0xff]
      %v329 = vld [vmem:[%s243 + $0x50] sm:$0xff]
      %v330 = vld [vmem:[%s243 + $0x58] sm:$0xff]
      %v331 = vld [vmem:[%s243 + $0x60] sm:$0xff]
      %v332 = vld [vmem:[%s243 + $0x68] sm:$0xff]
      %v333 = vld [vmem:[%s243 + $0x70] sm:$0xff]
      %v334 = vld [vmem:[%s243 + $0x78] sm:$0xff]
      %v335 = vld [vmem:[%s243 + $0x80] sm:$0xff]
      %v336 = vld [vmem:[%s243 + $0x88] sm:$0xff]
      %v337 = vld [vmem:[%s243 + $0x90] sm:$0xff]
      %v338 = vld [vmem:[%s243 + $0x98] sm:$0xff]
      %v339 = vld [vmem:[%s243 + $0xa0] sm:$0xff]
      %v340 = vld [vmem:[%s243 + $0xa8] sm:$0xff]
      %v341 = vld [vmem:[%s243 + $0xb0] sm:$0xff]
      %v342 = vld [vmem:[%s243 + $0xb8] sm:$0xff]
      %v343 = vld [vmem:[%s243 + $0xc0] sm:$0xff]
      %v344 = vld [vmem:[%s243 + $0xc8] sm:$0xff]
      %v345 = vld [vmem:[%s243 + $0xd0] sm:$0xff]
      %v346 = vld [vmem:[%s243 + $0xd8] sm:$0xff]
      %v347 = vld [vmem:[%s243 + $0xe0] sm:$0xff]
      %v348 = vld [vmem:[%s243 + $0xe8] sm:$0xff]
      %v349 = vld [vmem:[%s243 + $0xf0] sm:$0xff]
      %v350 = vld [vmem:[%s243 + $0xf8] sm:$0xff]
      %v351 = vld [vmem:[%s243 + $0x100] sm:$0xff]
      %v352 = vld [vmem:[%s243 + $0x108] sm:$0xff]
      %v353 = vld [vmem:[%s243 + $0x110] sm:$0xff]
      %v354 = vld [vmem:[%s243 + $0x118] sm:$0xff]
      %v355 = vld [vmem:[%s243 + $0x120] sm:$0xff]
      %v356 = vld [vmem:[%s243 + $0x128] sm:$0xff]
      %v357 = vld [vmem:[%s243 + $0x130] sm:$0xff]
      %v358 = vld [vmem:[%s243 + $0x138] sm:$0xff]
      %v359 = vld [vmem:[%s243 + $0x140] sm:$0xff]
      %v360 = vld [vmem:[%s243 + $0x148] sm:$0xff]
      %v361 = vld [vmem:[%s243 + $0x150] sm:$0xff]
      %v362 = vld [vmem:[%s243 + $0x158] sm:$0xff]
      %v363 = vld [vmem:[%s243 + $0x160] sm:$0xff]
      %v364 = vld [vmem:[%s243 + $0x168] sm:$0xff]
      %v365 = vld [vmem:[%s243 + $0x170] sm:$0xff]
      %v366 = vld [vmem:[%s243 + $0x178] sm:$0xff]
      %v367 = vld [vmem:[%s243 + $0x180] sm:$0xff]
      %v368 = vld [vmem:[%s243 + $0x188] sm:$0xff]
      %v369 = vld [vmem:[%s243 + $0x190] sm:$0xff]
      %v370 = vld [vmem:[%s243 + $0x198] sm:$0xff]
      %v371 = vld [vmem:[%s243 + $0x1a0] sm:$0xff]
      %v372 = vld [vmem:[%s243 + $0x1a8] sm:$0xff]
      %v373 = vld [vmem:[%s243 + $0x1b0] sm:$0xff]
      %v374 = vld [vmem:[%s243 + $0x1b8] sm:$0xff]
      %v375 = vld [vmem:[%s243 + $0x1c0] sm:$0xff]
      %v376 = vld [vmem:[%s243 + $0x1c8] sm:$0xff]
      %v377 = vld [vmem:[%s243 + $0x1d0] sm:$0xff]
      %v378 = vld [vmem:[%s243 + $0x1d8] sm:$0xff]
      %v379 = vld [vmem:[%s243 + $0x1e0] sm:$0xff]
      %v380 = vld [vmem:[%s243 + $0x1e8] sm:$0xff]
      %v381 = vld [vmem:[%s243 + $0x1f0] sm:$0xff]
      %v382 = vld [vmem:[%s243 + $0x1f8] sm:$0xff]
      %v383 = vld [vmem:[%s243 + $0x200] sm:$0xff]
      %v384 = vld [vmem:[%s243 + $0x208] sm:$0xff]
      %v385 = vld [vmem:[%s243 + $0x210] sm:$0xff]
      %v386 = vld [vmem:[%s243 + $0x218] sm:$0xff]
      %v387 = vld [vmem:[%s243 + $0x220] sm:$0xff]
      %v388 = vld [vmem:[%s243 + $0x228] sm:$0xff]
      %v389 = vld [vmem:[%s243 + $0x230] sm:$0xff]
      %v390 = vld [vmem:[%s243 + $0x238] sm:$0xff]
      %v391 = vld [vmem:[%s243 + $0x240] sm:$0xff]
      %v392 = vld [vmem:[%s243 + $0x248] sm:$0xff]
      %v393 = vld [vmem:[%s243 + $0x250] sm:$0xff]
      %v394 = vld [vmem:[%s243 + $0x258] sm:$0xff]
      %v395 = vld [vmem:[%s243 + $0x260] sm:$0xff]
      %v396 = vld [vmem:[%s243 + $0x268] sm:$0xff]
      %v397 = vld [vmem:[%s243 + $0x270] sm:$0xff]
      %v398 = vld [vmem:[%s243 + $0x278] sm:$0xff]
      %v399 = vld [vmem:[%s243 + $0x280] sm:$0xff]
      %v400 = vld [vmem:[%s243 + $0x288] sm:$0xff]
      %v401 = vld [vmem:[%s243 + $0x290] sm:$0xff]
      %v402 = vld [vmem:[%s243 + $0x298] sm:$0xff]
      %v403 = vld [vmem:[%s243 + $0x2a0] sm:$0xff]
      %v404 = vld [vmem:[%s243 + $0x2a8] sm:$0xff]
      %v405 = vld [vmem:[%s243 + $0x2b0] sm:$0xff]
      %v406 = vld [vmem:[%s243 + $0x2b8] sm:$0xff]
      %v407 = vld [vmem:[%s243 + $0x2c0] sm:$0xff]
      %v408 = vld [vmem:[%s243 + $0x2c8] sm:$0xff]
      %v409 = vld [vmem:[%s243 + $0x2d0] sm:$0xff]
      %v410 = vld [vmem:[%s243 + $0x2d8] sm:$0xff]
      %v411 = vld [vmem:[%s243 + $0x2e0] sm:$0xff]
      %v412 = vld [vmem:[%s243 + $0x2e8] sm:$0xff]
      %v413 = vld [vmem:[%s243 + $0x2f0] sm:$0xff]
      %v414 = vld [vmem:[%s243 + $0x2f8] sm:$0xff]
      %v415 = vld [vmem:[%s243 + $0x300] sm:$0xff]
      %v416 = vld [vmem:[%s243 + $0x308] sm:$0xff]
      %v417 = vld [vmem:[%s243 + $0x310] sm:$0xff]
      %v418 = vld [vmem:[%s243 + $0x318] sm:$0xff]
      %v419 = vld [vmem:[%s243 + $0x320] sm:$0xff]
      %v420 = vld [vmem:[%s243 + $0x328] sm:$0xff]
      %v421 = vld [vmem:[%s243 + $0x330] sm:$0xff]
      %v422 = vld [vmem:[%s243 + $0x338] sm:$0xff]
      %v423 = vld [vmem:[%s243 + $0x340] sm:$0xff]
      %v424 = vld [vmem:[%s243 + $0x348] sm:$0xff]
      %v425 = vld [vmem:[%s243 + $0x350] sm:$0xff]
      %v426 = vld [vmem:[%s243 + $0x358] sm:$0xff]
      %v427 = vld [vmem:[%s243 + $0x360] sm:$0xff]
      %v428 = vld [vmem:[%s243 + $0x368] sm:$0xff]
      %v429 = vld [vmem:[%s243 + $0x370] sm:$0xff]
      %v430 = vld [vmem:[%s243 + $0x378] sm:$0xff]
      %v431 = vld [vmem:[%s243 + $0x380] sm:$0xff]
      %v432 = vld [vmem:[%s243 + $0x388] sm:$0xff]
      %v433 = vld [vmem:[%s243 + $0x390] sm:$0xff]
      %v434 = vld [vmem:[%s243 + $0x398] sm:$0xff]
      %v435 = vld [vmem:[%s243 + $0x3a0] sm:$0xff]
      %v436 = vld [vmem:[%s243 + $0x3a8] sm:$0xff]
      %v437 = vld [vmem:[%s243 + $0x3b0] sm:$0xff]
      %v438 = vld [vmem:[%s243 + $0x3b8] sm:$0xff]
      %v439 = vld [vmem:[%s243 + $0x3c0] sm:$0xff]
      %v440 = vld [vmem:[%s243 + $0x3c8] sm:$0xff]
      %v441 = vld [vmem:[%s243 + $0x3d0] sm:$0xff]
      %v442 = vld [vmem:[%s243 + $0x3d8] sm:$0xff]
      %v443 = vld [vmem:[%s243 + $0x3e0] sm:$0xff]
      %v444 = vld [vmem:[%s243 + $0x3e8] sm:$0xff]
      %v445 = vld [vmem:[%s243 + $0x3f0] sm:$0xff]
      %v446 = vld [vmem:[%s243 + $0x3f8] sm:$0xff]
      %v447 = vld [vmem:[%s243 + $0x400] sm:$0xff]
      %v448 = vld [vmem:[%s243 + $0x408] sm:$0xff]
      %v449 = vld [vmem:[%s243 + $0x410] sm:$0xff]
      %v450 = vld [vmem:[%s243 + $0x418] sm:$0xff]
      %v451 = vld [vmem:[%s243 + $0x420] sm:$0xff]
      %v452 = vld [vmem:[%s243 + $0x428] sm:$0xff]
      %v453 = vld [vmem:[%s243 + $0x430] sm:$0xff]
      %v454 = vld [vmem:[%s243 + $0x438] sm:$0xff]
      %v455 = vld [vmem:[%s243 + $0x440] sm:$0xff]
      %v456 = vld [vmem:[%s243 + $0x448] sm:$0xff]
      %v457 = vld [vmem:[%s243 + $0x450] sm:$0xff]
      %v458 = vld [vmem:[%s243 + $0x458] sm:$0xff]
      %v459 = vld [vmem:[%s243 + $0x460] sm:$0xff]
      %v460 = vld [vmem:[%s243 + $0x468] sm:$0xff]
      %v461 = vld [vmem:[%s243 + $0x470] sm:$0xff]
      %v462 = vld [vmem:[%s243 + $0x478] sm:$0xff]
      %v463 = vld [vmem:[%s243 + $0x480] sm:$0xff]
      %v464 = vld [vmem:[%s243 + $0x488] sm:$0xff]
      %v465 = vld [vmem:[%s243 + $0x490] sm:$0xff]
      %v466 = vld [vmem:[%s243 + $0x498] sm:$0xff]
      %v467 = vld [vmem:[%s243 + $0x4a0] sm:$0xff]
      %v468 = vld [vmem:[%s243 + $0x4a8] sm:$0xff]
      %v469 = vld [vmem:[%s243 + $0x4b0] sm:$0xff]
      %v470 = vld [vmem:[%s243 + $0x4b8] sm:$0xff]
      %v471 = vld [vmem:[%s243 + $0x4c0] sm:$0xff]
      %v472 = vld [vmem:[%s243 + $0x4c8] sm:$0xff]
      %v473 = vld [vmem:[%s243 + $0x4d0] sm:$0xff]
      %v474 = vld [vmem:[%s243 + $0x4d8] sm:$0xff]
      %v475 = vld [vmem:[%s243 + $0x4e0] sm:$0xff]
      %v476 = vld [vmem:[%s243 + $0x4e8] sm:$0xff]
      %v477 = vld [vmem:[%s243 + $0x4f0] sm:$0xff]
      %v478 = vld [vmem:[%s243 + $0x4f8] sm:$0xff]
      %v479 = vld [vmem:[%s243 + $0x500] sm:$0xff]
      %v480 = vld [vmem:[%s243 + $0x508] sm:$0xff]
      %v481 = vld [vmem:[%s243 + $0x510] sm:$0xff]
      %v482 = vld [vmem:[%s243 + $0x518] sm:$0xff]
      %v483 = vld [vmem:[%s243 + $0x520] sm:$0xff]
      %v484 = vld [vmem:[%s243 + $0x528] sm:$0xff]
      %v485 = vld [vmem:[%s243 + $0x530] sm:$0xff]
      %v486 = vld [vmem:[%s243 + $0x538] sm:$0xff]
      %v487 = vld [vmem:[%s253] sm:$0xff]
      %v488 = vld [vmem:[%s253 + $0x8] sm:$0xff]
      %v489 = vld [vmem:[%s253 + $0x10] sm:$0xff]
      %v490 = vld [vmem:[%s253 + $0x18] sm:$0xff]
      %v491 = vld [vmem:[%s253 + $0x20] sm:$0xff]
      %v492 = vld [vmem:[%s253 + $0x28] sm:$0xff]
      %v493 = vld [vmem:[%s253 + $0x30] sm:$0xff]
      %v494 = vld [vmem:[%s253 + $0x38] sm:$0xff]
      %v495 = vld [vmem:[%s253 + $0x40] sm:$0xff]
      %v496 = vld [vmem:[%s253 + $0x48] sm:$0xff]
      %v497 = vld [vmem:[%s253 + $0x50] sm:$0xff]
      %v498 = vld [vmem:[%s253 + $0x58] sm:$0xff]
      %v499 = vld [vmem:[%s253 + $0x60] sm:$0xff]
      %v500 = vld [vmem:[%s253 + $0x68] sm:$0xff]
      %v501 = vld [vmem:[%s253 + $0x70] sm:$0xff]
      %v502 = vld [vmem:[%s253 + $0x78] sm:$0xff]
      %v503 = vld [vmem:[%s253 + $0x80] sm:$0xff]
      %v504 = vld [vmem:[%s253 + $0x88] sm:$0xff]
      %v505 = vld [vmem:[%s253 + $0x90] sm:$0xff]
      %v506 = vld [vmem:[%s253 + $0x98] sm:$0xff]
      %v507 = vld [vmem:[%s253 + $0xa0] sm:$0xff]
      %v508 = vld [vmem:[%s253 + $0xa8] sm:$0xff]
      %v509 = vld [vmem:[%s253 + $0xb0] sm:$0xff]
      %v510 = vld [vmem:[%s253 + $0xb8] sm:$0xff]
      %v511 = vld [vmem:[%s253 + $0xc0] sm:$0xff]
      %v512 = vld [vmem:[%s253 + $0xc8] sm:$0xff]
      %v513 = vld [vmem:[%s253 + $0xd0] sm:$0xff]
      %v514 = vld [vmem:[%s253 + $0xd8] sm:$0xff]
      %v515 = vld [vmem:[%s253 + $0xe0] sm:$0xff]
      %v516 = vld [vmem:[%s253 + $0xe8] sm:$0xff]
      %v517 = vld [vmem:[%s253 + $0xf0] sm:$0xff]
      %v518 = vld [vmem:[%s253 + $0xf8] sm:$0xff]
      %v519 = vld [vmem:[%s253 + $0x100] sm:$0xff]
      %v520 = vld [vmem:[%s253 + $0x108] sm:$0xff]
      %v521 = vld [vmem:[%s253 + $0x110] sm:$0xff]
      %v522 = vld [vmem:[%s253 + $0x118] sm:$0xff]
      %v523 = vld [vmem:[%s253 + $0x120] sm:$0xff]
      %v524 = vld [vmem:[%s253 + $0x128] sm:$0xff]
      %v525 = vld [vmem:[%s253 + $0x130] sm:$0xff]
      %v526 = vld [vmem:[%s253 + $0x138] sm:$0xff]
      %v527 = vld [vmem:[%s253 + $0x140] sm:$0xff]
      %v528 = vld [vmem:[%s253 + $0x148] sm:$0xff]
      %v529 = vld [vmem:[%s253 + $0x150] sm:$0xff]
      %v530 = vld [vmem:[%s253 + $0x158] sm:$0xff]
      %v531 = vld [vmem:[%s253 + $0x160] sm:$0xff]
      %v532 = vld [vmem:[%s253 + $0x168] sm:$0xff]
      %v533 = vld [vmem:[%s253 + $0x170] sm:$0xff]
      %v534 = vld [vmem:[%s253 + $0x178] sm:$0xff]
      %v535 = vld [vmem:[%s253 + $0x180] sm:$0xff]
      %v536 = vld [vmem:[%s253 + $0x188] sm:$0xff]
      %v537 = vld [vmem:[%s253 + $0x190] sm:$0xff]
      %v538 = vld [vmem:[%s253 + $0x198] sm:$0xff]
      %v539 = vld [vmem:[%s253 + $0x1a0] sm:$0xff]
      %v540 = vld [vmem:[%s253 + $0x1a8] sm:$0xff]
      %v541 = vld [vmem:[%s253 + $0x1b0] sm:$0xff]
      %v542 = vld [vmem:[%s253 + $0x1b8] sm:$0xff]
      %v543 = vld [vmem:[%s253 + $0x1c0] sm:$0xff]
      %v544 = vld [vmem:[%s253 + $0x1c8] sm:$0xff]
      %v545 = vld [vmem:[%s253 + $0x1d0] sm:$0xff]
      %v546 = vld [vmem:[%s253 + $0x1d8] sm:$0xff]
      %v547 = vld [vmem:[%s253 + $0x1e0] sm:$0xff]
      %v548 = vld [vmem:[%s253 + $0x1e8] sm:$0xff]
      %v549 = vld [vmem:[%s253 + $0x1f0] sm:$0xff]
      %v550 = vld [vmem:[%s253 + $0x1f8] sm:$0xff]
      %v551 = vld [vmem:[%s253 + $0x200] sm:$0xff]
      %v552 = vld [vmem:[%s253 + $0x208] sm:$0xff]
      %v553 = vld [vmem:[%s253 + $0x210] sm:$0xff]
      %v554 = vld [vmem:[%s253 + $0x218] sm:$0xff]
      %v555 = vld [vmem:[%s253 + $0x220] sm:$0xff]
      %v556 = vld [vmem:[%s253 + $0x228] sm:$0xff]
      %v557 = vld [vmem:[%s253 + $0x230] sm:$0xff]
      %v558 = vld [vmem:[%s253 + $0x238] sm:$0xff]
      %v559 = vld [vmem:[%s253 + $0x240] sm:$0xff]
      %v560 = vld [vmem:[%s253 + $0x248] sm:$0xff]
      %v561 = vld [vmem:[%s253 + $0x250] sm:$0xff]
      %v562 = vld [vmem:[%s253 + $0x258] sm:$0xff]
      %v563 = vld [vmem:[%s253 + $0x260] sm:$0xff]
      %v564 = vld [vmem:[%s253 + $0x268] sm:$0xff]
      %v565 = vld [vmem:[%s253 + $0x270] sm:$0xff]
      %v566 = vld [vmem:[%s253 + $0x278] sm:$0xff]
      %v567 = vld [vmem:[%s253 + $0x280] sm:$0xff]
      %v568 = vld [vmem:[%s253 + $0x288] sm:$0xff]
      %v569 = vld [vmem:[%s253 + $0x290] sm:$0xff]
      %v570 = vld [vmem:[%s253 + $0x298] sm:$0xff]
      %v571 = vld [vmem:[%s253 + $0x2a0] sm:$0xff]
      %v572 = vld [vmem:[%s253 + $0x2a8] sm:$0xff]
      %v573 = vld [vmem:[%s253 + $0x2b0] sm:$0xff]
      %v574 = vld [vmem:[%s253 + $0x2b8] sm:$0xff]
      %v575 = vld [vmem:[%s253 + $0x2c0] sm:$0xff]
      %v576 = vld [vmem:[%s253 + $0x2c8] sm:$0xff]
      %v577 = vld [vmem:[%s253 + $0x2d0] sm:$0xff]
      %v578 = vld [vmem:[%s253 + $0x2d8] sm:$0xff]
      %v579 = vld [vmem:[%s253 + $0x2e0] sm:$0xff]
      %v580 = vld [vmem:[%s253 + $0x2e8] sm:$0xff]
      %v581 = vld [vmem:[%s253 + $0x2f0] sm:$0xff]
      %v582 = vld [vmem:[%s253 + $0x2f8] sm:$0xff]
      %v583 = vld [vmem:[%s253 + $0x300] sm:$0xff]
      %v584 = vld [vmem:[%s253 + $0x308] sm:$0xff]
      %v585 = vld [vmem:[%s253 + $0x310] sm:$0xff]
      %v586 = vld [vmem:[%s253 + $0x318] sm:$0xff]
      %v587 = vld [vmem:[%s253 + $0x320] sm:$0xff]
      %v588 = vld [vmem:[%s253 + $0x328] sm:$0xff]
      %v589 = vld [vmem:[%s253 + $0x330] sm:$0xff]
      %v590 = vld [vmem:[%s253 + $0x338] sm:$0xff]
      %v591 = vld [vmem:[%s253 + $0x340] sm:$0xff]
      %v592 = vld [vmem:[%s253 + $0x348] sm:$0xff]
      %v593 = vld [vmem:[%s253 + $0x350] sm:$0xff]
      %v594 = vld [vmem:[%s253 + $0x358] sm:$0xff]
      %v595 = vld [vmem:[%s253 + $0x360] sm:$0xff]
      %v596 = vld [vmem:[%s253 + $0x368] sm:$0xff]
      %v597 = vld [vmem:[%s253 + $0x370] sm:$0xff]
      %v598 = vld [vmem:[%s253 + $0x378] sm:$0xff]
      %599 = vmatprep.subr.mxu0 0.0
      %600 = vmatpush1.msra.mxu0 %v487
      %601 = vmatprep.subr.mxu0 0.0
      %602 = vmatpush1.msra.mxu0 %v488
      %603 = vmatprep.subr.mxu0 0.0
      %604 = vmatpush1.msra.mxu0 %v489
      %605 = vmatprep.subr.mxu0 0.0
      %606 = vmatpush1.msra.mxu0 %v490
      %607 = vmatprep.subr.mxu0 0.0
      %608 = vmatpush1.msra.mxu0 %v491
      %609 = vmatprep.subr.mxu0 0.0
      %610 = vmatpush1.msra.mxu0 %v492
      %611 = vmatprep.subr.mxu0 0.0
      %612 = vmatpush1.msra.mxu0 %v493
      %613 = vmatprep.subr.mxu0 0.0
      %614 = vmatpush1.msra.mxu0 %v494
      %615 = vmatprep.subr.mxu0 0.0
      %616 = vmatpush1.msra.mxu0 %v495
      %617 = vmatprep.subr.mxu0 0.0
      %618 = vmatpush1.msra.mxu0 %v496
      %619 = vmatprep.subr.mxu0 0.0
      %620 = vmatpush1.msra.mxu0 %v497
      %621 = vmatprep.subr.mxu0 0.0
      %622 = vmatpush1.msra.mxu0 %v498
      %623 = vmatprep.subr.mxu0 0.0
      %624 = vmatpush1.msra.mxu0 %v499
      %625 = vmatprep.subr.mxu0 0.0
      %626 = vmatpush1.msra.mxu0 %v500
      %627 = vmatprep.subr.mxu0 0.0
      %628 = vmatpush1.msra.mxu0 %v501
      %629 = vmatprep.subr.mxu0 0.0
      %630 = vmatpush1.msra.mxu0 %v502
      %631 = vmatprep.subr.mxu0 0.0
      %632 = vmatpush1.msra.mxu0 %v503
      %633 = vmatprep.subr.mxu0 0.0
      %634 = vmatpush1.msra.mxu0 %v504
      %635 = vmatprep.subr.mxu0 0.0
      %636 = vmatpush1.msra.mxu0 %v505
      %637 = vmatprep.subr.mxu0 0.0
      %638 = vmatpush1.msra.mxu0 %v506
      %639 = vmatprep.subr.mxu0 0.0
      %640 = vmatpush1.msra.mxu0 %v507
      %641 = vmatprep.subr.mxu0 0.0
      %642 = vmatpush1.msra.mxu0 %v508
      %643 = vmatprep.subr.mxu0 0.0
      %644 = vmatpush1.msra.mxu0 %v509
      %645 = vmatprep.subr.mxu0 0.0
      %646 = vmatpush1.msra.mxu0 %v510
      %647 = vmatprep.subr.mxu0 0.0
      %648 = vmatpush1.msra.mxu0 %v511
      %649 = vmatprep.subr.mxu0 0.0
      %650 = vmatpush1.msra.mxu0 %v512
      %651 = vmatprep.subr.mxu0 0.0
      %652 = vmatpush1.msra.mxu0 %v513
      %653 = vmatprep.subr.mxu0 0.0
      %654 = vmatpush1.msra.mxu0 %v514
      %655 = vmatprep.subr.mxu0 0.0
      %656 = vmatpush1.msra.mxu0 %v515
      %657 = vmatprep.subr.mxu0 0.0
      %658 = vmatpush1.msra.mxu0 %v516
      %659 = vmatprep.subr.mxu0 0.0
      %660 = vmatpush1.msra.mxu0 %v517
      %661 = vmatprep.subr.mxu0 0.0
      %662 = vmatpush1.msra.mxu0 %v518
      %663 = vmatprep.mubr.f32.mxu0 %v320
      %664 = vmatmul.mubr.f32.gmra.mrb[0].mxu0 %v319
      %v665 = vpop.f32.mrb[0].mxu0
      %v666 = vadd.f32 0.0, %v665
      %v667 = vpop.f32.mrb[0].mxu0
      %668 = vmatprep.mubr.f32.mxu0 %v327
      %669 = vmatmul.mubr.f32.gmra.mrb[0].mxu0 %v326
      %v670 = vpop.f32.mrb[0].mxu0
      %v671 = vadd.f32 0.0, %v670
      %v672 = vpop.f32.mrb[0].mxu0
      %673 = vmatprep.mubr.f32.mxu0 %v334
      %674 = vmatmul.mubr.f32.gmra.mrb[0].mxu0 %v333
      %v675 = vpop.f32.mrb[0].mxu0
      %v676 = vadd.f32 0.0, %v675
      %v677 = vpop.f32.mrb[0].mxu0
      %678 = vmatprep.mubr.f32.mxu0 %v341
      %679 = vmatmul.mubr.f32.gmra.mrb[0].mxu0 %v340
      %v680 = vpop.f32.mrb[0].mxu0
      %v681 = vadd.f32 0.0, %v680
      %v682 = vpop.f32.mrb[0].mxu0
      %683 = vmatprep.mubr.f32.mxu0 %v348
      %684 = vmatmul.mubr.f32.gmra.mrb[0].mxu0 %v347
      %v685 = vpop.f32.mrb[0].mxu0
      %v686 = vadd.f32 0.0, %v685
      %v687 = vpop.f32.mrb[0].mxu0
      %688 = vmatprep.mubr.f32.mxu0 %v355
      %689 = vmatmul.mubr.f32.gmra.mrb[0].mxu0 %v354
      %v690 = vpop.f32.mrb[0].mxu0
      %v691 = vadd.f32 0.0, %v690
      %v692 = vpop.f32.mrb[0].mxu0
      %693 = vmatprep.mubr.f32.mxu0 %v362
      %694 = vmatmul.mubr.f32.gmra.mrb[0].mxu0 %v361
      %v695 = vpop.f32.mrb[0].mxu0
      %v696 = vadd.f32 0.0, %v695
      %v697 = vpop.f32.mrb[0].mxu0
      %698 = vmatprep.mubr.f32.mxu0 %v369
      %699 = vmatmul.mubr.f32.gmra.mrb[0].mxu0 %v368
      %v700 = vpop.f32.mrb[0].mxu0
      %v701 = vadd.f32 0.0, %v700
      %v702 = vpop.f32.mrb[0].mxu0
      %703 = vmatprep.mubr.f32.mxu0 %v376
      %704 = vmatmul.mubr.f32.gmra.mrb[0].mxu0 %v375
      %v705 = vpop.f32.mrb[0].mxu0
      %v706 = vadd.f32 0.0, %v705
      %v707 = vpop.f32.mrb[0].mxu0
      %708 = vmatprep.mubr.f32.mxu0 %v383
      %709 = vmatmul.mubr.f32.gmra.mrb[0].mxu0 %v382
      %v710 = vpop.f32.mrb[0].mxu0
      %v711 = vadd.f32 0.0, %v710
      %v712 = vpop.f32.mrb[0].mxu0
      %713 = vmatprep.mubr.f32.mxu0 %v390
      %714 = vmatmul.mubr.f32.gmra.mrb[0].mxu0 %v389
      %v715 = vpop.f32.mrb[0].mxu0
      %v716 = vadd.f32 0.0, %v715
      %v717 = vpop.f32.mrb[0].mxu0
      %718 = vmatprep.mubr.f32.mxu0 %v397
      %719 = vmatmul.mubr.f32.gmra.mrb[0].mxu0 %v396
      %v720 = vpop.f32.mrb[0].mxu0
      %v721 = vadd.f32 0.0, %v720
      %v722 = vpop.f32.mrb[0].mxu0
      %723 = vmatprep.mubr.f32.mxu0 %v404
      %724 = vmatmul.mubr.f32.gmra.mrb[0].mxu0 %v403
      %v725 = vpop.f32.mrb[0].mxu0
      %v726 = vadd.f32 0.0, %v725
      %v727 = vpop.f32.mrb[0].mxu0
      %728 = vmatprep.mubr.f32.mxu0 %v411
      %729 = vmatmul.mubr.f32.gmra.mrb[0].mxu0 %v410
      %v730 = vpop.f32.mrb[0].mxu0
      %v731 = vadd.f32 0.0, %v730
      %v732 = vpop.f32.mrb[0].mxu0
      %733 = vmatprep.mubr.f32.mxu0 %v418
      %734 = vmatmul.mubr.f32.gmra.mrb[0].mxu0 %v417
      %v735 = vpop.f32.mrb[0].mxu0
      %v736 = vadd.f32 0.0, %v735
      %v737 = vpop.f32.mrb[0].mxu0
      %738 = vmatprep.mubr.f32.mxu0 %v425
      %739 = vmatmul.mubr.f32.gmra.mrb[0].mxu0 %v424
      %v740 = vpop.f32.mrb[0].mxu0
      %v741 = vadd.f32 0.0, %v740
      %v742 = vpop.f32.mrb[0].mxu0
      %743 = vmatprep.mubr.f32.mxu0 %v432
      %744 = vmatmul.mubr.f32.gmra.mrb[0].mxu0 %v431
      %v745 = vpop.f32.mrb[0].mxu0
      %v746 = vadd.f32 0.0, %v745
      %v747 = vpop.f32.mrb[0].mxu0
      %748 = vmatprep.mubr.f32.mxu0 %v439
      %749 = vmatmul.mubr.f32.gmra.mrb[0].mxu0 %v438
      %v750 = vpop.f32.mrb[0].mxu0
      %v751 = vadd.f32 0.0, %v750
      %v752 = vpop.f32.mrb[0].mxu0
      %753 = vmatprep.mubr.f32.mxu0 %v446
      %754 = vmatmul.mubr.f32.gmra.mrb[0].mxu0 %v445
      %v755 = vpop.f32.mrb[0].mxu0
      %v756 = vadd.f32 0.0, %v755
      %v757 = vpop.f32.mrb[0].mxu0
      %758 = vmatprep.mubr.f32.mxu0 %v453
      %759 = vmatmul.mubr.f32.gmra.mrb[0].mxu0 %v452
      %v760 = vpop.f32.mrb[0].mxu0
      %v761 = vadd.f32 0.0, %v760
      %v762 = vpop.f32.mrb[0].mxu0
      %763 = vmatprep.mubr.f32.mxu0 %v460
      %764 = vmatmul.mubr.f32.gmra.mrb[0].mxu0 %v459
      %v765 = vpop.f32.mrb[0].mxu0
      %v766 = vadd.f32 0.0, %v765
      %v767 = vpop.f32.mrb[0].mxu0
      %768 = vmatprep.mubr.f32.mxu0 %v467
      %769 = vmatmul.mubr.f32.gmra.mrb[0].mxu0 %v466
      %v770 = vpop.f32.mrb[0].mxu0
      %v771 = vadd.f32 0.0, %v770
      %v772 = vpop.f32.mrb[0].mxu0
      %773 = vmatprep.mubr.f32.mxu0 %v474
      %774 = vmatmul.mubr.f32.gmra.mrb[0].mxu0 %v473
      %v775 = vpop.f32.mrb[0].mxu0
      %v776 = vadd.f32 0.0, %v775
      %v777 = vpop.f32.mrb[0].mxu0
      %778 = vmatprep.mubr.f32.mxu0 %v481
      %779 = vmatmul.mubr.f32.gmra.mrb[0].mxu0 %v480
      %v780 = vpop.f32.mrb[0].mxu0
      %v781 = vadd.f32 0.0, %v780
      %v782 = vpop.f32.mrb[0].mxu0
      %783 = vdwg.mxu0
      %784 = vmatprep.subr.mxu0 0.0
      %785 = vmatpush1.msra.mxu0 %v519
      %786 = vmatprep.subr.mxu0 0.0
      %787 = vmatpush1.msra.mxu0 %v520
      %788 = vmatprep.subr.mxu0 0.0
      %789 = vmatpush1.msra.mxu0 %v521
      %790 = vmatprep.subr.mxu0 0.0
      %791 = vmatpush1.msra.mxu0 %v522
      %792 = vmatprep.subr.mxu0 0.0
      %793 = vmatpush1.msra.mxu0 %v523
      %794 = vmatprep.subr.mxu0 0.0
      %795 = vmatpush1.msra.mxu0 %v524
      %796 = vmatprep.subr.mxu0 0.0
      %797 = vmatpush1.msra.mxu0 %v525
      %798 = vmatprep.subr.mxu0 0.0
      %799 = vmatpush1.msra.mxu0 %v526
      %800 = vmatprep.subr.mxu0 0.0
      %801 = vmatpush1.msra.mxu0 %v527
      %802 = vmatprep.subr.mxu0 0.0
      %803 = vmatpush1.msra.mxu0 %v528
      %804 = vmatprep.subr.mxu0 0.0
      %805 = vmatpush1.msra.mxu0 %v529
      %806 = vmatprep.subr.mxu0 0.0
      %807 = vmatpush1.msra.mxu0 %v530
      %808 = vmatprep.subr.mxu0 0.0
      %809 = vmatpush1.msra.mxu0 %v531
      %810 = vmatprep.subr.mxu0 0.0
      %811 = vmatpush1.msra.mxu0 %v532
      %812 = vmatprep.subr.mxu0 0.0
      %813 = vmatpush1.msra.mxu0 %v533
      %814 = vmatprep.subr.mxu0 0.0
      %815 = vmatpush1.msra.mxu0 %v534
      %816 = vmatprep.subr.mxu0 0.0
      %817 = vmatpush1.msra.mxu0 %v535
      %818 = vmatprep.subr.mxu0 0.0
      %819 = vmatpush1.msra.mxu0 %v536
      %820 = vmatprep.subr.mxu0 0.0
      %821 = vmatpush1.msra.mxu0 %v537
      %822 = vmatprep.subr.mxu0 0.0
      %823 = vmatpush1.msra.mxu0 %v538
      %824 = vmatprep.subr.mxu0 0.0
      %825 = vmatpush1.msra.mxu0 %v539
      %826 = vmatprep.subr.mxu0 0.0
      %827 = vmatpush1.msra.mxu0 %v540
      %828 = vmatprep.subr.mxu0 0.0
      %829 = vmatpush1.msra.mxu0 %v541
      %830 = vmatprep.subr.mxu0 0.0
      %831 = vmatpush1.msra.mxu0 %v542
      %832 = vmatprep.subr.mxu0 0.0
      %833 = vmatpush1.msra.mxu0 %v543
      %834 = vmatprep.subr.mxu0 0.0
      %835 = vmatpush1.msra.mxu0 %v544
      %836 = vmatprep.subr.mxu0 0.0
      %837 = vmatpush1.msra.mxu0 %v545
      %838 = vmatprep.subr.mxu0 0.0
      %839 = vmatpush1.msra.mxu0 %v546
      %840 = vmatprep.subr.mxu0 0.0
      %841 = vmatpush1.msra.mxu0 %v547
      %842 = vmatprep.subr.mxu0 0.0
      %843 = vmatpush1.msra.mxu0 %v548
      %844 = vmatprep.subr.mxu0 0.0
      %845 = vmatpush1.msra.mxu0 %v549
      %846 = vmatprep.subr.mxu0 0.0
      %847 = vmatpush1.msra.mxu0 %v550
      %848 = vmatprep.mubr.f32.mxu0 %v322
      %849 = vmatmul.mubr.f32.gmra.mrb[0].mxu0 %v321
      %v850 = vpop.f32.mrb[0].mxu0
      %v851 = vadd.f32 %v666, %v850
      %v852 = vpop.f32.mrb[0].mxu0
      %853 = vmatprep.mubr.f32.mxu0 %v329
      %854 = vmatmul.mubr.f32.gmra.mrb[0].mxu0 %v328
      %v855 = vpop.f32.mrb[0].mxu0
      %v856 = vadd.f32 %v671, %v855
      %v857 = vpop.f32.mrb[0].mxu0
      %858 = vmatprep.mubr.f32.mxu0 %v336
      %859 = vmatmul.mubr.f32.gmra.mrb[0].mxu0 %v335
      %v860 = vpop.f32.mrb[0].mxu0
      %v861 = vadd.f32 %v676, %v860
      %v862 = vpop.f32.mrb[0].mxu0
      %863 = vmatprep.mubr.f32.mxu0 %v343
      %864 = vmatmul.mubr.f32.gmra.mrb[0].mxu0 %v342
      %v865 = vpop.f32.mrb[0].mxu0
      %v866 = vadd.f32 %v681, %v865
      %v867 = vpop.f32.mrb[0].mxu0
      %868 = vmatprep.mubr.f32.mxu0 %v350
      %869 = vmatmul.mubr.f32.gmra.mrb[0].mxu0 %v349
      %v870 = vpop.f32.mrb[0].mxu0
      %v871 = vadd.f32 %v686, %v870
      %v872 = vpop.f32.mrb[0].mxu0
      %873 = vmatprep.mubr.f32.mxu0 %v357
      %874 = vmatmul.mubr.f32.gmra.mrb[0].mxu0 %v356
      %v875 = vpop.f32.mrb[0].mxu0
      %v876 = vadd.f32 %v691, %v875
      %v877 = vpop.f32.mrb[0].mxu0
      %878 = vmatprep.mubr.f32.mxu0 %v364
      %879 = vmatmul.mubr.f32.gmra.mrb[0].mxu0 %v363
      %v880 = vpop.f32.mrb[0].mxu0
      %v881 = vadd.f32 %v696, %v880
      %v882 = vpop.f32.mrb[0].mxu0
      %883 = vmatprep.mubr.f32.mxu0 %v371
      %884 = vmatmul.mubr.f32.gmra.mrb[0].mxu0 %v370
      %v885 = vpop.f32.mrb[0].mxu0
      %v886 = vadd.f32 %v701, %v885
      %v887 = vpop.f32.mrb[0].mxu0
      %888 = vmatprep.mubr.f32.mxu0 %v378
      %889 = vmatmul.mubr.f32.gmra.mrb[0].mxu0 %v377
      %v890 = vpop.f32.mrb[0].mxu0
      %v891 = vadd.f32 %v706, %v890
      %v892 = vpop.f32.mrb[0].mxu0
      %893 = vmatprep.mubr.f32.mxu0 %v385
      %894 = vmatmul.mubr.f32.gmra.mrb[0].mxu0 %v384
      %v895 = vpop.f32.mrb[0].mxu0
      %v896 = vadd.f32 %v711, %v895
      %v897 = vpop.f32.mrb[0].mxu0
      %898 = vmatprep.mubr.f32.mxu0 %v392
      %899 = vmatmul.mubr.f32.gmra.mrb[0].mxu0 %v391
      %v900 = vpop.f32.mrb[0].mxu0
      %v901 = vadd.f32 %v716, %v900
      %v902 = vpop.f32.mrb[0].mxu0
      %903 = vmatprep.mubr.f32.mxu0 %v399
      %904 = vmatmul.mubr.f32.gmra.mrb[0].mxu0 %v398
      %v905 = vpop.f32.mrb[0].mxu0
      %v906 = vadd.f32 %v721, %v905
      %v907 = vpop.f32.mrb[0].mxu0
      %908 = vmatprep.mubr.f32.mxu0 %v406
      %909 = vmatmul.mubr.f32.gmra.mrb[0].mxu0 %v405
      %v910 = vpop.f32.mrb[0].mxu0
      %v911 = vadd.f32 %v726, %v910
      %v912 = vpop.f32.mrb[0].mxu0
      %913 = vmatprep.mubr.f32.mxu0 %v413
      %914 = vmatmul.mubr.f32.gmra.mrb[0].mxu0 %v412
      %v915 = vpop.f32.mrb[0].mxu0
      %v916 = vadd.f32 %v731, %v915
      %v917 = vpop.f32.mrb[0].mxu0
      %918 = vmatprep.mubr.f32.mxu0 %v420
      %919 = vmatmul.mubr.f32.gmra.mrb[0].mxu0 %v419
      %v920 = vpop.f32.mrb[0].mxu0
      %v921 = vadd.f32 %v736, %v920
      %v922 = vpop.f32.mrb[0].mxu0
      %923 = vmatprep.mubr.f32.mxu0 %v427
      %924 = vmatmul.mubr.f32.gmra.mrb[0].mxu0 %v426
      %v925 = vpop.f32.mrb[0].mxu0
      %v926 = vadd.f32 %v741, %v925
      %v927 = vpop.f32.mrb[0].mxu0
      %928 = vmatprep.mubr.f32.mxu0 %v434
      %929 = vmatmul.mubr.f32.gmra.mrb[0].mxu0 %v433
      %v930 = vpop.f32.mrb[0].mxu0
      %v931 = vadd.f32 %v746, %v930
      %v932 = vpop.f32.mrb[0].mxu0
      %933 = vmatprep.mubr.f32.mxu0 %v441
      %934 = vmatmul.mubr.f32.gmra.mrb[0].mxu0 %v440
      %v935 = vpop.f32.mrb[0].mxu0
      %v936 = vadd.f32 %v751, %v935
      %v937 = vpop.f32.mrb[0].mxu0
      %938 = vmatprep.mubr.f32.mxu0 %v448
      %939 = vmatmul.mubr.f32.gmra.mrb[0].mxu0 %v447
      %v940 = vpop.f32.mrb[0].mxu0
      %v941 = vadd.f32 %v756, %v940
      %v942 = vpop.f32.mrb[0].mxu0
      %943 = vmatprep.mubr.f32.mxu0 %v455
      %944 = vmatmul.mubr.f32.gmra.mrb[0].mxu0 %v454
      %v945 = vpop.f32.mrb[0].mxu0
      %v946 = vadd.f32 %v761, %v945
      %v947 = vpop.f32.mrb[0].mxu0
      %948 = vmatprep.mubr.f32.mxu0 %v462
      %949 = vmatmul.mubr.f32.gmra.mrb[0].mxu0 %v461
      %v950 = vpop.f32.mrb[0].mxu0
      %v951 = vadd.f32 %v766, %v950
      %v952 = vpop.f32.mrb[0].mxu0
      %953 = vmatprep.mubr.f32.mxu0 %v469
      %954 = vmatmul.mubr.f32.gmra.mrb[0].mxu0 %v468
      %v955 = vpop.f32.mrb[0].mxu0
      %v956 = vadd.f32 %v771, %v955
      %v957 = vpop.f32.mrb[0].mxu0
      %958 = vmatprep.mubr.f32.mxu0 %v476
      %959 = vmatmul.mubr.f32.gmra.mrb[0].mxu0 %v475
      %v960 = vpop.f32.mrb[0].mxu0
      %v961 = vadd.f32 %v776, %v960
      %v962 = vpop.f32.mrb[0].mxu0
      %963 = vmatprep.mubr.f32.mxu0 %v483
      %964 = vmatmul.mubr.f32.gmra.mrb[0].mxu0 %v482
      %v965 = vpop.f32.mrb[0].mxu0
      %v966 = vadd.f32 %v781, %v965
      %v967 = vpop.f32.mrb[0].mxu0
      %968 = vdwg.mxu0
      %969 = vmatprep.subr.mxu0 0.0
      %970 = vmatpush1.msra.mxu0 %v551
      %971 = vmatprep.subr.mxu0 0.0
      %972 = vmatpush1.msra.mxu0 %v552
      %973 = vmatprep.subr.mxu0 0.0
      %974 = vmatpush1.msra.mxu0 %v553
      %975 = vmatprep.subr.mxu0 0.0
      %976 = vmatpush1.msra.mxu0 %v554
      %977 = vmatprep.subr.mxu0 0.0
      %978 = vmatpush1.msra.mxu0 %v555
      %979 = vmatprep.subr.mxu0 0.0
      %980 = vmatpush1.msra.mxu0 %v556
      %981 = vmatprep.subr.mxu0 0.0
      %982 = vmatpush1.msra.mxu0 %v557
      %983 = vmatprep.subr.mxu0 0.0
      %984 = vmatpush1.msra.mxu0 %v558
      %985 = vmatprep.subr.mxu0 0.0
      %986 = vmatpush1.msra.mxu0 %v559
      %987 = vmatprep.subr.mxu0 0.0
      %988 = vmatpush1.msra.mxu0 %v560
      %989 = vmatprep.subr.mxu0 0.0
      %990 = vmatpush1.msra.mxu0 %v561
      %991 = vmatprep.subr.mxu0 0.0
      %992 = vmatpush1.msra.mxu0 %v562
      %993 = vmatprep.subr.mxu0 0.0
      %994 = vmatpush1.msra.mxu0 %v563
      %995 = vmatprep.subr.mxu0 0.0
      %996 = vmatpush1.msra.mxu0 %v564
      %997 = vmatprep.subr.mxu0 0.0
      %998 = vmatpush1.msra.mxu0 %v565
      %999 = vmatprep.subr.mxu0 0.0
      %1000 = vmatpush1.msra.mxu0 %v566
      %1001 = vmatprep.subr.mxu0 0.0
      %1002 = vmatpush1.msra.mxu0 %v567
      %1003 = vmatprep.subr.mxu0 0.0
      %1004 = vmatpush1.msra.mxu0 %v568
      %1005 = vmatprep.subr.mxu0 0.0
      %1006 = vmatpush1.msra.mxu0 %v569
      %1007 = vmatprep.subr.mxu0 0.0
      %1008 = vmatpush1.msra.mxu0 %v570
      %1009 = vmatprep.subr.mxu0 0.0
      %1010 = vmatpush1.msra.mxu0 %v571
      %1011 = vmatprep.subr.mxu0 0.0
      %1012 = vmatpush1.msra.mxu0 %v572
      %1013 = vmatprep.subr.mxu0 0.0
      %1014 = vmatpush1.msra.mxu0 %v573
      %1015 = vmatprep.subr.mxu0 0.0
      %1016 = vmatpush1.msra.mxu0 %v574
      %1017 = vmatprep.subr.mxu0 0.0
      %1018 = vmatpush1.msra.mxu0 %v575
      %1019 = vmatprep.subr.mxu0 0.0
      %1020 = vmatpush1.msra.mxu0 %v576
      %1021 = vmatprep.subr.mxu0 0.0
      %1022 = vmatpush1.msra.mxu0 %v577
      %1023 = vmatprep.subr.mxu0 0.0
      %1024 = vmatpush1.msra.mxu0 %v578
      %1025 = vmatprep.subr.mxu0 0.0
      %1026 = vmatpush1.msra.mxu0 %v579
      %1027 = vmatprep.subr.mxu0 0.0
      %1028 = vmatpush1.msra.mxu0 %v580
      %1029 = vmatprep.subr.mxu0 0.0
      %1030 = vmatpush1.msra.mxu0 %v581
      %1031 = vmatprep.subr.mxu0 0.0
      %1032 = vmatpush1.msra.mxu0 %v582
      %1033 = vmatprep.mubr.f32.mxu0 %v324
      %1034 = vmatmul.mubr.f32.gmra.mrb[0].mxu0 %v323
      %v1035 = vpop.f32.mrb[0].mxu0
      %v1036 = vadd.f32 %v851, %v1035
      %v1037 = vpop.f32.mrb[0].mxu0
      %1038 = vmatprep.mubr.f32.mxu0 %v331
      %1039 = vmatmul.mubr.f32.gmra.mrb[0].mxu0 %v330
      %v1040 = vpop.f32.mrb[0].mxu0
      %v1041 = vadd.f32 %v856, %v1040
      %v1042 = vpop.f32.mrb[0].mxu0
      %1043 = vmatprep.mubr.f32.mxu0 %v338
      %1044 = vmatmul.mubr.f32.gmra.mrb[0].mxu0 %v337
      %v1045 = vpop.f32.mrb[0].mxu0
      %v1046 = vadd.f32 %v861, %v1045
      %v1047 = vpop.f32.mrb[0].mxu0
      %1048 = vmatprep.mubr.f32.mxu0 %v345
      %1049 = vmatmul.mubr.f32.gmra.mrb[0].mxu0 %v344
      %v1050 = vpop.f32.mrb[0].mxu0
      %v1051 = vadd.f32 %v866, %v1050
      %v1052 = vpop.f32.mrb[0].mxu0
      %1053 = vmatprep.mubr.f32.mxu0 %v352
      %1054 = vmatmul.mubr.f32.gmra.mrb[0].mxu0 %v351
      %v1055 = vpop.f32.mrb[0].mxu0
      %v1056 = vadd.f32 %v871, %v1055
      %v1057 = vpop.f32.mrb[0].mxu0
      %1058 = vmatprep.mubr.f32.mxu0 %v359
      %1059 = vmatmul.mubr.f32.gmra.mrb[0].mxu0 %v358
      %v1060 = vpop.f32.mrb[0].mxu0
      %v1061 = vadd.f32 %v876, %v1060
      %v1062 = vpop.f32.mrb[0].mxu0
      %1063 = vmatprep.mubr.f32.mxu0 %v366
      %1064 = vmatmul.mubr.f32.gmra.mrb[0].mxu0 %v365
      %v1065 = vpop.f32.mrb[0].mxu0
      %v1066 = vadd.f32 %v881, %v1065
      %v1067 = vpop.f32.mrb[0].mxu0
      %1068 = vmatprep.mubr.f32.mxu0 %v373
      %1069 = vmatmul.mubr.f32.gmra.mrb[0].mxu0 %v372
      %v1070 = vpop.f32.mrb[0].mxu0
      %v1071 = vadd.f32 %v886, %v1070
      %v1072 = vpop.f32.mrb[0].mxu0
      %1073 = vmatprep.mubr.f32.mxu0 %v380
      %1074 = vmatmul.mubr.f32.gmra.mrb[0].mxu0 %v379
      %v1075 = vpop.f32.mrb[0].mxu0
      %v1076 = vadd.f32 %v891, %v1075
      %v1077 = vpop.f32.mrb[0].mxu0
      %1078 = vmatprep.mubr.f32.mxu0 %v387
      %1079 = vmatmul.mubr.f32.gmra.mrb[0].mxu0 %v386
      %v1080 = vpop.f32.mrb[0].mxu0
      %v1081 = vadd.f32 %v896, %v1080
      %v1082 = vpop.f32.mrb[0].mxu0
      %1083 = vmatprep.mubr.f32.mxu0 %v394
      %1084 = vmatmul.mubr.f32.gmra.mrb[0].mxu0 %v393
      %v1085 = vpop.f32.mrb[0].mxu0
      %v1086 = vadd.f32 %v901, %v1085
      %v1087 = vpop.f32.mrb[0].mxu0
      %1088 = vmatprep.mubr.f32.mxu0 %v401
      %1089 = vmatmul.mubr.f32.gmra.mrb[0].mxu0 %v400
      %v1090 = vpop.f32.mrb[0].mxu0
      %v1091 = vadd.f32 %v906, %v1090
      %v1092 = vpop.f32.mrb[0].mxu0
      %1093 = vmatprep.mubr.f32.mxu0 %v408
      %1094 = vmatmul.mubr.f32.gmra.mrb[0].mxu0 %v407
      %v1095 = vpop.f32.mrb[0].mxu0
      %v1096 = vadd.f32 %v911, %v1095
      %v1097 = vpop.f32.mrb[0].mxu0
      %1098 = vmatprep.mubr.f32.mxu0 %v415
      %1099 = vmatmul.mubr.f32.gmra.mrb[0].mxu0 %v414
      %v1100 = vpop.f32.mrb[0].mxu0
      %v1101 = vadd.f32 %v916, %v1100
      %v1102 = vpop.f32.mrb[0].mxu0
      %1103 = vmatprep.mubr.f32.mxu0 %v422
      %1104 = vmatmul.mubr.f32.gmra.mrb[0].mxu0 %v421
      %v1105 = vpop.f32.mrb[0].mxu0
      %v1106 = vadd.f32 %v921, %v1105
      %v1107 = vpop.f32.mrb[0].mxu0
      %1108 = vmatprep.mubr.f32.mxu0 %v429
      %1109 = vmatmul.mubr.f32.gmra.mrb[0].mxu0 %v428
      %v1110 = vpop.f32.mrb[0].mxu0
      %v1111 = vadd.f32 %v926, %v1110
      %v1112 = vpop.f32.mrb[0].mxu0
      %1113 = vmatprep.mubr.f32.mxu0 %v436
      %1114 = vmatmul.mubr.f32.gmra.mrb[0].mxu0 %v435
      %v1115 = vpop.f32.mrb[0].mxu0
      %v1116 = vadd.f32 %v931, %v1115
      %v1117 = vpop.f32.mrb[0].mxu0
      %1118 = vmatprep.mubr.f32.mxu0 %v443
      %1119 = vmatmul.mubr.f32.gmra.mrb[0].mxu0 %v442
      %v1120 = vpop.f32.mrb[0].mxu0
      %v1121 = vadd.f32 %v936, %v1120
      %v1122 = vpop.f32.mrb[0].mxu0
      %1123 = vmatprep.mubr.f32.mxu0 %v450
      %1124 = vmatmul.mubr.f32.gmra.mrb[0].mxu0 %v449
      %v1125 = vpop.f32.mrb[0].mxu0
      %v1126 = vadd.f32 %v941, %v1125
      %v1127 = vpop.f32.mrb[0].mxu0
      %1128 = vmatprep.mubr.f32.mxu0 %v457
      %1129 = vmatmul.mubr.f32.gmra.mrb[0].mxu0 %v456
      %v1130 = vpop.f32.mrb[0].mxu0
      %v1131 = vadd.f32 %v946, %v1130
      %v1132 = vpop.f32.mrb[0].mxu0
      %1133 = vmatprep.mubr.f32.mxu0 %v464
      %1134 = vmatmul.mubr.f32.gmra.mrb[0].mxu0 %v463
      %v1135 = vpop.f32.mrb[0].mxu0
      %v1136 = vadd.f32 %v951, %v1135
      %v1137 = vpop.f32.mrb[0].mxu0
      %1138 = vmatprep.mubr.f32.mxu0 %v471
      %1139 = vmatmul.mubr.f32.gmra.mrb[0].mxu0 %v470
      %v1140 = vpop.f32.mrb[0].mxu0
      %v1141 = vadd.f32 %v956, %v1140
      %v1142 = vpop.f32.mrb[0].mxu0
      %1143 = vmatprep.mubr.f32.mxu0 %v478
      %1144 = vmatmul.mubr.f32.gmra.mrb[0].mxu0 %v477
      %v1145 = vpop.f32.mrb[0].mxu0
      %v1146 = vadd.f32 %v961, %v1145
      %v1147 = vpop.f32.mrb[0].mxu0
      %1148 = vmatprep.mubr.f32.mxu0 %v485
      %1149 = vmatmul.mubr.f32.gmra.mrb[0].mxu0 %v484
      %v1150 = vpop.f32.mrb[0].mxu0
      %v1151 = vadd.f32 %v966, %v1150
      %v1152 = vpop.f32.mrb[0].mxu0
      %1153 = vdwg.mxu0
      %1154 = vmatprep.subr.mxu0 0.0
      %1155 = vmatpush1.msra.mxu0 %v583
      %1156 = vmatprep.subr.mxu0 0.0
      %1157 = vmatpush1.msra.mxu0 %v584
      %1158 = vmatprep.subr.mxu0 0.0
      %1159 = vmatpush1.msra.mxu0 %v585
      %1160 = vmatprep.subr.mxu0 0.0
      %1161 = vmatpush1.msra.mxu0 %v586
      %1162 = vmatprep.subr.mxu0 0.0
      %1163 = vmatpush1.msra.mxu0 %v587
      %1164 = vmatprep.subr.mxu0 0.0
      %1165 = vmatpush1.msra.mxu0 %v588
      %1166 = vmatprep.subr.mxu0 0.0
      %1167 = vmatpush1.msra.mxu0 %v589
      %1168 = vmatprep.subr.mxu0 0.0
      %1169 = vmatpush1.msra.mxu0 %v590
      %1170 = vmatprep.subr.mxu0 0.0
      %1171 = vmatpush1.msra.mxu0 %v591
      %1172 = vmatprep.subr.mxu0 0.0
      %1173 = vmatpush1.msra.mxu0 %v592
      %1174 = vmatprep.subr.mxu0 0.0
      %1175 = vmatpush1.msra.mxu0 %v593
      %1176 = vmatprep.subr.mxu0 0.0
      %1177 = vmatpush1.msra.mxu0 %v594
      %1178 = vmatprep.subr.mxu0 0.0
      %1179 = vmatpush1.msra.mxu0 %v595
      %1180 = vmatprep.subr.mxu0 0.0
      %1181 = vmatpush1.msra.mxu0 %v596
      %1182 = vmatprep.subr.mxu0 0.0
      %1183 = vmatpush1.msra.mxu0 %v597
      %1184 = vmatprep.subr.mxu0 0.0
      %1185 = vmatpush1.msra.mxu0 %v598
      %1186 = vmatprep.subr.mxu0 0.0
      %1187 = vmatpush1.msra.mxu0 0.0
      %1188 = vmatprep.subr.mxu0 0.0
      %1189 = vmatpush1.msra.mxu0 0.0
      %1190 = vmatprep.subr.mxu0 0.0
      %1191 = vmatpush1.msra.mxu0 0.0
      %1192 = vmatprep.subr.mxu0 0.0
      %1193 = vmatpush1.msra.mxu0 0.0
      %1194 = vmatprep.subr.mxu0 0.0
      %1195 = vmatpush1.msra.mxu0 0.0
      %1196 = vmatprep.subr.mxu0 0.0
      %1197 = vmatpush1.msra.mxu0 0.0
      %1198 = vmatprep.subr.mxu0 0.0
      %1199 = vmatpush1.msra.mxu0 0.0
      %1200 = vmatprep.subr.mxu0 0.0
      %1201 = vmatpush1.msra.mxu0 0.0
      %1202 = vmatprep.subr.mxu0 0.0
      %1203 = vmatpush1.msra.mxu0 0.0
      %1204 = vmatprep.subr.mxu0 0.0
      %1205 = vmatpush1.msra.mxu0 0.0
      %1206 = vmatprep.subr.mxu0 0.0
      %1207 = vmatpush1.msra.mxu0 0.0
      %1208 = vmatprep.subr.mxu0 0.0
      %1209 = vmatpush1.msra.mxu0 0.0
      %1210 = vmatprep.subr.mxu0 0.0
      %1211 = vmatpush1.msra.mxu0 0.0
      %1212 = vmatprep.subr.mxu0 0.0
      %1213 = vmatpush1.msra.mxu0 0.0
      %1214 = vmatprep.subr.mxu0 0.0
      %1215 = vmatpush1.msra.mxu0 0.0
      %1216 = vmatprep.subr.mxu0 0.0
      %1217 = vmatpush1.msra.mxu0 0.0
      %1218 = vmatprep.mubr.f32.mxu0 0.0
      %1219 = vmatmul.mubr.f32.gmra.mrb[0].mxu0 %v325
      %v1220 = vpop.f32.mrb[0].mxu0
      %v1221 = vadd.f32 %v1036, %v1220
      %v1222 = vpop.f32.mrb[0].mxu0
      %1223 = vmatprep.mubr.f32.mxu0 0.0
      %1224 = vmatmul.mubr.f32.gmra.mrb[0].mxu0 %v332
      %v1225 = vpop.f32.mrb[0].mxu0
      %v1226 = vadd.f32 %v1041, %v1225
      %v1227 = vpop.f32.mrb[0].mxu0
      %1228 = vmatprep.mubr.f32.mxu0 0.0
      %1229 = vmatmul.mubr.f32.gmra.mrb[0].mxu0 %v339
      %v1230 = vpop.f32.mrb[0].mxu0
      %v1231 = vadd.f32 %v1046, %v1230
      %v1232 = vpop.f32.mrb[0].mxu0
      %1233 = vmatprep.mubr.f32.mxu0 0.0
      %1234 = vmatmul.mubr.f32.gmra.mrb[0].mxu0 %v346
      %v1235 = vpop.f32.mrb[0].mxu0
      %v1236 = vadd.f32 %v1051, %v1235
      %v1237 = vpop.f32.mrb[0].mxu0
      %1238 = vmatprep.mubr.f32.mxu0 0.0
      %1239 = vmatmul.mubr.f32.gmra.mrb[0].mxu0 %v353
      %v1240 = vpop.f32.mrb[0].mxu0
      %v1241 = vadd.f32 %v1056, %v1240
      %v1242 = vpop.f32.mrb[0].mxu0
      %1243 = vmatprep.mubr.f32.mxu0 0.0
      %1244 = vmatmul.mubr.f32.gmra.mrb[0].mxu0 %v360
      %v1245 = vpop.f32.mrb[0].mxu0
      %v1246 = vadd.f32 %v1061, %v1245
      %v1247 = vpop.f32.mrb[0].mxu0
      %1248 = vmatprep.mubr.f32.mxu0 0.0
      %1249 = vmatmul.mubr.f32.gmra.mrb[0].mxu0 %v367
      %v1250 = vpop.f32.mrb[0].mxu0
      %v1251 = vadd.f32 %v1066, %v1250
      %v1252 = vpop.f32.mrb[0].mxu0
      %1253 = vmatprep.mubr.f32.mxu0 0.0
      %1254 = vmatmul.mubr.f32.gmra.mrb[0].mxu0 %v374
      %v1255 = vpop.f32.mrb[0].mxu0
      %v1256 = vadd.f32 %v1071, %v1255
      %v1257 = vpop.f32.mrb[0].mxu0
      %1258 = vmatprep.mubr.f32.mxu0 0.0
      %1259 = vmatmul.mubr.f32.gmra.mrb[0].mxu0 %v381
      %v1260 = vpop.f32.mrb[0].mxu0
      %v1261 = vadd.f32 %v1076, %v1260
      %v1262 = vpop.f32.mrb[0].mxu0
      %1263 = vmatprep.mubr.f32.mxu0 0.0
      %1264 = vmatmul.mubr.f32.gmra.mrb[0].mxu0 %v388
      %v1265 = vpop.f32.mrb[0].mxu0
      %v1266 = vadd.f32 %v1081, %v1265
      %v1267 = vpop.f32.mrb[0].mxu0
      %1268 = vmatprep.mubr.f32.mxu0 0.0
      %1269 = vmatmul.mubr.f32.gmra.mrb[0].mxu0 %v395
      %v1270 = vpop.f32.mrb[0].mxu0
      %v1271 = vadd.f32 %v1086, %v1270
      %v1272 = vpop.f32.mrb[0].mxu0
      %1273 = vmatprep.mubr.f32.mxu0 0.0
      %1274 = vmatmul.mubr.f32.gmra.mrb[0].mxu0 %v402
      %v1275 = vpop.f32.mrb[0].mxu0
      %v1276 = vadd.f32 %v1091, %v1275
      %v1277 = vpop.f32.mrb[0].mxu0
      %1278 = vmatprep.mubr.f32.mxu0 0.0
      %1279 = vmatmul.mubr.f32.gmra.mrb[0].mxu0 %v409
      %v1280 = vpop.f32.mrb[0].mxu0
      %v1281 = vadd.f32 %v1096, %v1280
      %v1282 = vpop.f32.mrb[0].mxu0
      %1283 = vmatprep.mubr.f32.mxu0 0.0
      %1284 = vmatmul.mubr.f32.gmra.mrb[0].mxu0 %v416
      %v1285 = vpop.f32.mrb[0].mxu0
      %v1286 = vadd.f32 %v1101, %v1285
      %v1287 = vpop.f32.mrb[0].mxu0
      %1288 = vmatprep.mubr.f32.mxu0 0.0
      %1289 = vmatmul.mubr.f32.gmra.mrb[0].mxu0 %v423
      %v1290 = vpop.f32.mrb[0].mxu0
      %v1291 = vadd.f32 %v1106, %v1290
      %v1292 = vpop.f32.mrb[0].mxu0
      %1293 = vmatprep.mubr.f32.mxu0 0.0
      %1294 = vmatmul.mubr.f32.gmra.mrb[0].mxu0 %v430
      %v1295 = vpop.f32.mrb[0].mxu0
      %v1296 = vadd.f32 %v1111, %v1295
      %v1297 = vpop.f32.mrb[0].mxu0
      %1298 = vmatprep.mubr.f32.mxu0 0.0
      %1299 = vmatmul.mubr.f32.gmra.mrb[0].mxu0 %v437
      %v1300 = vpop.f32.mrb[0].mxu0
      %v1301 = vadd.f32 %v1116, %v1300
      %v1302 = vpop.f32.mrb[0].mxu0
      %1303 = vmatprep.mubr.f32.mxu0 0.0
      %1304 = vmatmul.mubr.f32.gmra.mrb[0].mxu0 %v444
      %v1305 = vpop.f32.mrb[0].mxu0
      %v1306 = vadd.f32 %v1121, %v1305
      %v1307 = vpop.f32.mrb[0].mxu0
      %1308 = vmatprep.mubr.f32.mxu0 0.0
      %1309 = vmatmul.mubr.f32.gmra.mrb[0].mxu0 %v451
      %v1310 = vpop.f32.mrb[0].mxu0
      %v1311 = vadd.f32 %v1126, %v1310
      %v1312 = vpop.f32.mrb[0].mxu0
      %1313 = vmatprep.mubr.f32.mxu0 0.0
      %1314 = vmatmul.mubr.f32.gmra.mrb[0].mxu0 %v458
      %v1315 = vpop.f32.mrb[0].mxu0
      %v1316 = vadd.f32 %v1131, %v1315
      %v1317 = vpop.f32.mrb[0].mxu0
      %1318 = vmatprep.mubr.f32.mxu0 0.0
      %1319 = vmatmul.mubr.f32.gmra.mrb[0].mxu0 %v465
      %v1320 = vpop.f32.mrb[0].mxu0
      %v1321 = vadd.f32 %v1136, %v1320
      %v1322 = vpop.f32.mrb[0].mxu0
      %1323 = vmatprep.mubr.f32.mxu0 0.0
      %1324 = vmatmul.mubr.f32.gmra.mrb[0].mxu0 %v472
      %v1325 = vpop.f32.mrb[0].mxu0
      %v1326 = vadd.f32 %v1141, %v1325
      %v1327 = vpop.f32.mrb[0].mxu0
      %1328 = vmatprep.mubr.f32.mxu0 0.0
      %1329 = vmatmul.mubr.f32.gmra.mrb[0].mxu0 %v479
      %v1330 = vpop.f32.mrb[0].mxu0
      %v1331 = vadd.f32 %v1146, %v1330
      %v1332 = vpop.f32.mrb[0].mxu0
      %1333 = vmatprep.mubr.f32.mxu0 0.0
      %1334 = vmatmul.mubr.f32.gmra.mrb[0].mxu0 %v486
      %v1335 = vpop.f32.mrb[0].mxu0
      %v1336 = vadd.f32 %v1151, %v1335
      %v1337 = vpop.f32.mrb[0].mxu0
      %1338 = vdwg.mxu0
      %v1339 = vadd.f32 %v295, %v1221
      %v1340 = vadd.f32 %v296, %v1226
      %v1341 = vadd.f32 %v297, %v1231
      %v1342 = vadd.f32 %v298, %v1236
      %v1343 = vadd.f32 %v299, %v1241
      %v1344 = vadd.f32 %v300, %v1246
      %v1345 = vadd.f32 %v301, %v1251
      %v1346 = vadd.f32 %v302, %v1256
      %v1347 = vadd.f32 %v303, %v1261
      %v1348 = vadd.f32 %v304, %v1266
      %v1349 = vadd.f32 %v305, %v1271
      %v1350 = vadd.f32 %v306, %v1276
      %v1351 = vadd.f32 %v307, %v1281
      %v1352 = vadd.f32 %v308, %v1286
      %v1353 = vadd.f32 %v309, %v1291
      %v1354 = vadd.f32 %v310, %v1296
      %v1355 = vadd.f32 %v311, %v1301
      %v1356 = vadd.f32 %v312, %v1306
      %v1357 = vadd.f32 %v313, %v1311
      %v1358 = vadd.f32 %v314, %v1316
      %v1359 = vadd.f32 %v315, %v1321
      %v1360 = vadd.f32 %v316, %v1326
      %v1361 = vadd.f32 %v317, %v1331
      %v1362 = vadd.f32 %v318, %v1336
      %1363 = vst [vmem:[#allocation2] sm:$0xff] %v1339
      %1364 = vst [vmem:[#allocation2 + $0x8] sm:$0xff] %v1340
      %1365 = vst [vmem:[#allocation2 + $0x10] sm:$0xff] %v1341
      %1366 = vst [vmem:[#allocation2 + $0x18] sm:$0xff] %v1342
      %1367 = vst [vmem:[#allocation2 + $0x20] sm:$0xff] %v1343
      %1368 = vst [vmem:[#allocation2 + $0x28] sm:$0xff] %v1344
      %1369 = vst [vmem:[#allocation2 + $0x30] sm:$0xff] %v1345
      %1370 = vst [vmem:[#allocation2 + $0x38] sm:$0xff] %v1346
      %1371 = vst [vmem:[#allocation2 + $0x40] sm:$0xff] %v1347
      %1372 = vst [vmem:[#allocation2 + $0x48] sm:$0xff] %v1348
      %1373 = vst [vmem:[#allocation2 + $0x50] sm:$0xff] %v1349
      %1374 = vst [vmem:[#allocation2 + $0x58] sm:$0xff] %v1350
      %1375 = vst [vmem:[#allocation2 + $0x60] sm:$0xff] %v1351
      %1376 = vst [vmem:[#allocation2 + $0x68] sm:$0xff] %v1352
      %1377 = vst [vmem:[#allocation2 + $0x70] sm:$0xff] %v1353
      %1378 = vst [vmem:[#allocation2 + $0x78] sm:$0xff] %v1354
      %1379 = vst [vmem:[#allocation2 + $0x80] sm:$0xff] %v1355
      %1380 = vst [vmem:[#allocation2 + $0x88] sm:$0xff] %v1356
      %1381 = vst [vmem:[#allocation2 + $0x90] sm:$0xff] %v1357
      %1382 = vst [vmem:[#allocation2 + $0x98] sm:$0xff] %v1358
      %1383 = vst [vmem:[#allocation2 + $0xa0] sm:$0xff] %v1359
      %1384 = vst [vmem:[#allocation2 + $0xa8] sm:$0xff] %v1360
      %1385 = vst [vmem:[#allocation2 + $0xb0] sm:$0xff] %v1361
      %1386 = vst [vmem:[#allocation2 + $0xb8] sm:$0xff] %v1362
      // Predicated region
      $region37: #{simple_cnn_forward.7} parent=31 // pred_check
        %p1387 = pneg %p267
      $region38: #{simple_cnn_forward.7} parent=31 // pred_check_branch
        %1389 = sbr.rel (%p1387) target = $region40
      $region39: #{simple_cnn_forward.7} parent=31 // pred_region
        %v1390 = vld [vmem:[#allocation2] sm:$0xff]
        %v1391 = vld [vmem:[#allocation2 + $0x8] sm:$0xff]
        %v1392 = vld [vmem:[#allocation2 + $0x10] sm:$0xff]
        %v1393 = vld [vmem:[#allocation2 + $0x18] sm:$0xff]
        %v1394 = vld [vmem:[#allocation2 + $0x20] sm:$0xff]
        %v1395 = vld [vmem:[#allocation2 + $0x28] sm:$0xff]
        %v1396 = vld [vmem:[#allocation2 + $0x30] sm:$0xff]
        %v1397 = vld [vmem:[#allocation2 + $0x38] sm:$0xff]
        %v1398 = vld [vmem:[#allocation2 + $0x40] sm:$0xff]
        %v1399 = vld [vmem:[#allocation2 + $0x48] sm:$0xff]
        %v1400 = vld [vmem:[#allocation2 + $0x50] sm:$0xff]
        %v1401 = vld [vmem:[#allocation2 + $0x58] sm:$0xff]
        %v1402 = vld [vmem:[#allocation2 + $0x60] sm:$0xff]
        %v1403 = vld [vmem:[#allocation2 + $0x68] sm:$0xff]
        %v1404 = vld [vmem:[#allocation2 + $0x70] sm:$0xff]
        %v1405 = vld [vmem:[#allocation2 + $0x78] sm:$0xff]
        %v1406 = vld [vmem:[#allocation2 + $0x80] sm:$0xff]
        %v1407 = vld [vmem:[#allocation2 + $0x88] sm:$0xff]
        %v1408 = vld [vmem:[#allocation2 + $0x90] sm:$0xff]
        %v1409 = vld [vmem:[#allocation2 + $0x98] sm:$0xff]
        %v1410 = vld [vmem:[#allocation2 + $0xa0] sm:$0xff]
        %v1411 = vld [vmem:[#allocation2 + $0xa8] sm:$0xff]
        %v1412 = vld [vmem:[#allocation2 + $0xb0] sm:$0xff]
        %v1413 = vld [vmem:[#allocation2 + $0xb8] sm:$0xff]
        %v1414 = vld [vmem:[%s257] sm:$0x1]
        %v1416 = vlaneseq
        %v1417 = vshrl.u32 %v1416, 7
        %v1418 = vsub.s32 0, %v1417
        %v1419 = vrot.slane %v1414, %v1418
        %v1421 = vadd.f32 %v1390, %v1419
        %v1422 = vadd.f32 %v1391, %v1419
        %v1423 = vadd.f32 %v1392, %v1419
        %v1424 = vadd.f32 %v1393, %v1419
        %v1425 = vadd.f32 %v1394, %v1419
        %v1426 = vadd.f32 %v1395, %v1419
        %v1427 = vadd.f32 %v1396, %v1419
        %v1428 = vadd.f32 %v1397, %v1419
        %v1429 = vadd.f32 %v1398, %v1419
        %v1430 = vadd.f32 %v1399, %v1419
        %v1431 = vadd.f32 %v1400, %v1419
        %v1432 = vadd.f32 %v1401, %v1419
        %v1433 = vadd.f32 %v1402, %v1419
        %v1434 = vadd.f32 %v1403, %v1419
        %v1435 = vadd.f32 %v1404, %v1419
        %v1436 = vadd.f32 %v1405, %v1419
        %v1437 = vadd.f32 %v1406, %v1419
        %v1438 = vadd.f32 %v1407, %v1419
        %v1439 = vadd.f32 %v1408, %v1419
        %v1440 = vadd.f32 %v1409, %v1419
        %v1441 = vadd.f32 %v1410, %v1419
        %v1442 = vadd.f32 %v1411, %v1419
        %v1443 = vadd.f32 %v1412, %v1419
        %v1444 = vadd.f32 %v1413, %v1419
        %v1445 = vmax.f32 %v1421, 0.0
        %v1446 = vmax.f32 %v1422, 0.0
        %v1447 = vmax.f32 %v1423, 0.0
        %v1448 = vmax.f32 %v1424, 0.0
        %v1449 = vmax.f32 %v1425, 0.0
        %v1450 = vmax.f32 %v1426, 0.0
        %v1451 = vmax.f32 %v1427, 0.0
        %v1452 = vmax.f32 %v1428, 0.0
        %v1453 = vmax.f32 %v1429, 0.0
        %v1454 = vmax.f32 %v1430, 0.0
        %v1455 = vmax.f32 %v1431, 0.0
        %v1456 = vmax.f32 %v1432, 0.0
        %v1457 = vmax.f32 %v1433, 0.0
        %v1458 = vmax.f32 %v1434, 0.0
        %v1459 = vmax.f32 %v1435, 0.0
        %v1460 = vmax.f32 %v1436, 0.0
        %v1461 = vmax.f32 %v1437, 0.0
        %v1462 = vmax.f32 %v1438, 0.0
        %v1463 = vmax.f32 %v1439, 0.0
        %v1464 = vmax.f32 %v1440, 0.0
        %v1465 = vmax.f32 %v1441, 0.0
        %v1466 = vmax.f32 %v1442, 0.0
        %v1467 = vmax.f32 %v1443, 0.0
        %v1468 = vmax.f32 %v1444, 0.0
        %1469 = vst [vmem:[%s265] sm:$0xff] %v1445
        %1470 = vst [vmem:[%s265 + $0x8] sm:$0xff] %v1446
        %1471 = vst [vmem:[%s265 + $0x10] sm:$0xff] %v1447
        %1472 = vst [vmem:[%s265 + $0x18] sm:$0xff] %v1448
        %1473 = vst [vmem:[%s265 + $0x20] sm:$0xff] %v1449
        %1474 = vst [vmem:[%s265 + $0x28] sm:$0xff] %v1450
        %1475 = vst [vmem:[%s265 + $0x30] sm:$0xff] %v1451
        %1476 = vst [vmem:[%s265 + $0x38] sm:$0xff] %v1452
        %1477 = vst [vmem:[%s265 + $0x40] sm:$0xff] %v1453
        %1478 = vst [vmem:[%s265 + $0x48] sm:$0xff] %v1454
        %1479 = vst [vmem:[%s265 + $0x50] sm:$0xff] %v1455
        %1480 = vst [vmem:[%s265 + $0x58] sm:$0xff] %v1456
        %1481 = vst [vmem:[%s265 + $0x60] sm:$0xff] %v1457
        %1482 = vst [vmem:[%s265 + $0x68] sm:$0xff] %v1458
        %1483 = vst [vmem:[%s265 + $0x70] sm:$0xff] %v1459
        %1484 = vst [vmem:[%s265 + $0x78] sm:$0xff] %v1460
        %1485 = vst [vmem:[%s265 + $0x80] sm:$0xff] %v1461
        %1486 = vst [vmem:[%s265 + $0x88] sm:$0xff] %v1462
        %1487 = vst [vmem:[%s265 + $0x90] sm:$0xff] %v1463
        %1488 = vst [vmem:[%s265 + $0x98] sm:$0xff] %v1464
        %1489 = vst [vmem:[%s265 + $0xa0] sm:$0xff] %v1465
        %1490 = vst [vmem:[%s265 + $0xa8] sm:$0xff] %v1466
        %1491 = vst [vmem:[%s265 + $0xb0] sm:$0xff] %v1467
        %1492 = vst [vmem:[%s265 + $0xb8] sm:$0xff] %v1468
      $region40: #{simple_cnn_forward.7} parent=31 // pred_fallthru
        _
      %s1493 = smul.u32 24, %s19
      %p1494 = scmp.lt.s32.totalorder %s1493, 143
      %s1495 = scalar_select %p1494, %s1493, 143
      %p1496 = scmp.lt.s32.totalorder %s20, 0
      %s1497 = scalar_select %p1496, %s20, 0
      %s1498 = sadd.s32 %s1497, %s1495
      %s1499 = smul.addr %s1498, 8
      %s1500 = scalar_lea.vmem %s3, %s1499
      // Predicated region
      $region41: #{simple_cnn_forward.7} parent=31 // pred_check
        %p1501 = pneg %p135
      $region42: #{simple_cnn_forward.7} parent=31 // pred_check_branch
        %1503 = sbr.rel (%p1501) target = $region44
      $region43: #{simple_cnn_forward.7} parent=31 // pred_region
        %s1504 = smul.u32 24, %s19
      $region44: #{simple_cnn_forward.7} parent=31 // pred_fallthru
        _
    $region32: #{simple_cnn_forward.7} parent=5 // pred_fallthru
      _
    %p1505 = scmp.le.s32.totalorder 2, %s9
    // Predicated region
    $region45: #{simple_cnn_forward.7} parent=5 // pred_check
      %p1506 = pneg %p1505
    $region46: #{simple_cnn_forward.7} parent=5 // pred_check_branch
      %1508 = sbr.rel (%p1506) target = $region48
    $region47: #{simple_cnn_forward.7} parent=5 // pred_region
      %s1509 = ssub.s32 %s9, 2
      // Predicated region
      $region49: #{simple_cnn_forward.7} parent=47 // pred_check
        %p1510 = pneg %p141
      $region50: #{simple_cnn_forward.7} parent=47 // pred_check_branch
        %1512 = sbr.rel (%p1510) target = $region52
      $region51: #{simple_cnn_forward.7} parent=47 // pred_region
        %s1513 = smul.u32 24, %s22
        %p1514 = scmp.lt.s32.totalorder %s1513, 143
        %s1515 = scalar_select %p1514, %s1513, 143
        %p1516 = scmp.lt.s32.totalorder %s23, 0
        %s1517 = scalar_select %p1516, %s23, 0
        %s1518 = sadd.s32 %s1517, %s1515
        %s1519 = smul.addr %s1518, 8
        %s1520 = scalar_lea.vmem %s3, %s1519
      $region52: #{simple_cnn_forward.7} parent=47 // pred_fallthru
        _
    $region48: #{simple_cnn_forward.7} parent=5 // pred_fallthru
      _
  $region6: #{simple_cnn_forward.7} parent=0 // loop_footer
    %s13 = sadd.s32 1, %s9
  $region7: #{simple_cnn_forward.7} parent=0 // loop_footer_branch
    %8 = sbr.rel target = $region3
  $region8: #{simple_cnn_forward.7} parent=0 // loop_exit
    _

// kernel: simple_cnn_forward.8
$region0: #{simple_cnn_forward.8}
  #allocation0 [shape = 'u32[]', space=smem, size = 0x4, offset = 0x4, fixed_abs, tag = 'smem constant byte address 0x4 - core index']
  #allocation1 [shape = 'u32[144,128]{1,0:T(1,128)}', space=vmem, size = 0x12000, scoped, tag = 'internal scratch']
  %s0 = inlined_call_operand.vmem [shape: f32[24,384], index: 0, kind: input, shape index: {}]
  %s1 = inlined_call_operand.vmem [shape: f32[24,384], index: 1, kind: input, shape index: {}]
  %s2 = inlined_call_operand.vmem [shape: f32[24,384], index: 2, kind: input, shape index: {}]
  %s3 = inlined_call_operand.vmem [shape: f32[24,384], index: 3, kind: input, shape index: {}]
  %s4 = inlined_call_operand.vmem [shape: f32[24,384], index: 4, kind: output, shape index: {}]
  %s5 = sld [smem:[#allocation0]]
  $region26: #{simple_cnn_forward.8} parent=0
    _
  %s7 = ssub.s32 1, %s5
  %s8 = scalar_select 0, %s7, %s5
  // Predicated region
  $region2: #{simple_cnn_forward.8} parent=0 // pred_check
    _
  $region3: #{simple_cnn_forward.8} parent=0 // pred_check_branch
    %10 = sbr.rel (0) target = $region5
  $region4: #{simple_cnn_forward.8} parent=0 // pred_region
    _
  $region5: #{simple_cnn_forward.8} parent=0 // pred_fallthru
    _
  // Predicated region
  $region6: #{simple_cnn_forward.8} parent=0 // pred_check
    _
  $region7: #{simple_cnn_forward.8} parent=0 // pred_check_branch
    %12 = sbr.rel (0) target = $region9
  $region8: #{simple_cnn_forward.8} parent=0 // pred_region
    _
  $region9: #{simple_cnn_forward.8} parent=0 // pred_fallthru
    _
  // Predicated region
  $region10: #{simple_cnn_forward.8} parent=0 // pred_check
    _
  $region11: #{simple_cnn_forward.8} parent=0 // pred_check_branch
    %14 = sbr.rel (0) target = $region13
  $region12: #{simple_cnn_forward.8} parent=0 // pred_region
    _
  $region13: #{simple_cnn_forward.8} parent=0 // pred_fallthru
    _
  // Predicated region
  $region14: #{simple_cnn_forward.8} parent=0 // pred_check
    _
  $region15: #{simple_cnn_forward.8} parent=0 // pred_check_branch
    %16 = sbr.rel (0) target = $region17
  $region16: #{simple_cnn_forward.8} parent=0 // pred_region
    _
  $region17: #{simple_cnn_forward.8} parent=0 // pred_fallthru
    _
  %v17 = vld [vmem:[%s0] sm:$0xff]
  %v18 = vld [vmem:[%s0 + $0x8] sm:$0xff]
  %v19 = vld [vmem:[%s0 + $0x10] sm:$0xff]
  %v20 = vld [vmem:[%s0 + $0x18] sm:$0xff]
  %v21 = vld [vmem:[%s0 + $0x20] sm:$0xff]
  %v22 = vld [vmem:[%s0 + $0x28] sm:$0xff]
  %v23 = vld [vmem:[%s0 + $0x30] sm:$0xff]
  %v24 = vld [vmem:[%s0 + $0x38] sm:$0xff]
  %v25 = vld [vmem:[%s0 + $0x40] sm:$0xff]
  %v26 = vld [vmem:[%s1] sm:$0xff]
  %v27 = vld [vmem:[%s1 + $0x8] sm:$0xff]
  %v28 = vld [vmem:[%s1 + $0x10] sm:$0xff]
  %v29 = vld [vmem:[%s1 + $0x18] sm:$0xff]
  %v30 = vld [vmem:[%s1 + $0x20] sm:$0xff]
  %v31 = vld [vmem:[%s1 + $0x28] sm:$0xff]
  %v32 = vld [vmem:[%s1 + $0x30] sm:$0xff]
  %v33 = vld [vmem:[%s1 + $0x38] sm:$0xff]
  %v34 = vld [vmem:[%s1 + $0x40] sm:$0xff]
  %v35 = vmax.f32 %v17, %v26
  %v36 = vmax.f32 %v18, %v27
  %v37 = vmax.f32 %v19, %v28
  %v38 = vmax.f32 %v20, %v29
  %v39 = vmax.f32 %v21, %v30
  %v40 = vmax.f32 %v22, %v31
  %v41 = vmax.f32 %v23, %v32
  %v42 = vmax.f32 %v24, %v33
  %v43 = vmax.f32 %v25, %v34
  %v44 = vld [vmem:[%s2] sm:$0xff]
  %v45 = vld [vmem:[%s2 + $0x8] sm:$0xff]
  %v46 = vld [vmem:[%s2 + $0x10] sm:$0xff]
  %v47 = vld [vmem:[%s2 + $0x18] sm:$0xff]
  %v48 = vld [vmem:[%s2 + $0x20] sm:$0xff]
  %v49 = vld [vmem:[%s2 + $0x28] sm:$0xff]
  %v50 = vld [vmem:[%s2 + $0x30] sm:$0xff]
  %v51 = vld [vmem:[%s2 + $0x38] sm:$0xff]
  %v52 = vld [vmem:[%s2 + $0x40] sm:$0xff]
  %v53 = vld [vmem:[%s3] sm:$0xff]
  %v54 = vld [vmem:[%s3 + $0x8] sm:$0xff]
  %v55 = vld [vmem:[%s3 + $0x10] sm:$0xff]
  %v56 = vld [vmem:[%s3 + $0x18] sm:$0xff]
  %v57 = vld [vmem:[%s3 + $0x20] sm:$0xff]
  %v58 = vld [vmem:[%s3 + $0x28] sm:$0xff]
  %v59 = vld [vmem:[%s3 + $0x30] sm:$0xff]
  %v60 = vld [vmem:[%s3 + $0x38] sm:$0xff]
  %v61 = vld [vmem:[%s3 + $0x40] sm:$0xff]
  %v62 = vmax.f32 %v44, %v53
  %v63 = vmax.f32 %v45, %v54
  %v64 = vmax.f32 %v46, %v55
  %v65 = vmax.f32 %v47, %v56
  %v66 = vmax.f32 %v48, %v57
  %v67 = vmax.f32 %v49, %v58
  %v68 = vmax.f32 %v50, %v59
  %v69 = vmax.f32 %v51, %v60
  %v70 = vmax.f32 %v52, %v61
  %v71 = vmax.f32 %v35, %v62
  %v72 = vmax.f32 %v36, %v63
  %v73 = vmax.f32 %v37, %v64
  %v74 = vmax.f32 %v38, %v65
  %v75 = vmax.f32 %v39, %v66
  %v76 = vmax.f32 %v40, %v67
  %v77 = vmax.f32 %v41, %v68
  %v78 = vmax.f32 %v42, %v69
  %v79 = vmax.f32 %v43, %v70
  %80 = vst [vmem:[%s4] sm:$0xff] %v71
  %81 = vst [vmem:[%s4 + $0x8] sm:$0xff] %v72
  %82 = vst [vmem:[%s4 + $0x10] sm:$0xff] %v73
  %83 = vst [vmem:[%s4 + $0x18] sm:$0xff] %v74
  %84 = vst [vmem:[%s4 + $0x20] sm:$0xff] %v75
  %85 = vst [vmem:[%s4 + $0x28] sm:$0xff] %v76
  %86 = vst [vmem:[%s4 + $0x30] sm:$0xff] %v77
  %87 = vst [vmem:[%s4 + $0x38] sm:$0xff] %v78
  %88 = vst [vmem:[%s4 + $0x40] sm:$0xff] %v79
  // Predicated region
  $region18: #{simple_cnn_forward.8} parent=0 // pred_check
    _
  $region19: #{simple_cnn_forward.8} parent=0 // pred_check_branch
    %90 = sbr.rel (0) target = $region21
  $region20: #{simple_cnn_forward.8} parent=0 // pred_region
    _
  $region21: #{simple_cnn_forward.8} parent=0 // pred_fallthru
    _
  // Predicated region
  $region22: #{simple_cnn_forward.8} parent=0 // pred_check
    _
  $region23: #{simple_cnn_forward.8} parent=0 // pred_check_branch
    %92 = sbr.rel (0) target = $region25
  $region24: #{simple_cnn_forward.8} parent=0 // pred_region
    _
  $region25: #{simple_cnn_forward.8} parent=0 // pred_fallthru
    _

// kernel: simple_cnn_forward.9
$region0: #{simple_cnn_forward.9}
  #allocation0 [shape = 'u32[]', space=smem, size = 0x4, offset = 0x4, fixed_abs, tag = 'smem constant byte address 0x4 - core index']
  #allocation1 [shape = 'u32[144,128]{1,0:T(1,128)}', space=vmem, size = 0x12000, scoped, tag = 'internal scratch']
  #allocation2 [shape = 'f32[128,128]{1,0:T(8,128)}', space=vmem, size = 0x10000, scoped, tag = 'scratch operand']
  %s0 = inlined_call_operand.vmem [shape: f32[128,896], index: 0, kind: input, shape index: {}]
  %s1 = inlined_call_operand.vmem [shape: f32[896,128], index: 1, kind: input, shape index: {}]
  %s2 = inlined_call_operand.vmem [shape: f32[1,128], index: 2, kind: input, shape index: {}]
  %s3 = inlined_call_operand.vmem [shape: f32[128,128], index: 3, kind: output, shape index: {}]
  %s4 = sld [smem:[#allocation0]]
  $region30: #{simple_cnn_forward.9} parent=0
    _
  %s6 = ssub.s32 1, %s4
  %s7 = scalar_select 0, %s6, %s4
  // Predicated region
  $region2: #{simple_cnn_forward.9} parent=0 // pred_check
    _
  $region3: #{simple_cnn_forward.9} parent=0 // pred_check_branch
    %9 = sbr.rel (0) target = $region5
  $region4: #{simple_cnn_forward.9} parent=0 // pred_region
    _
  $region5: #{simple_cnn_forward.9} parent=0 // pred_fallthru
    _
  // Predicated region
  $region6: #{simple_cnn_forward.9} parent=0 // pred_check
    _
  $region7: #{simple_cnn_forward.9} parent=0 // pred_check_branch
    %11 = sbr.rel (0) target = $region9
  $region8: #{simple_cnn_forward.9} parent=0 // pred_region
    _
  $region9: #{simple_cnn_forward.9} parent=0 // pred_fallthru
    _
  // Predicated region
  $region10: #{simple_cnn_forward.9} parent=0 // pred_check
    _
  $region11: #{simple_cnn_forward.9} parent=0 // pred_check_branch
    %13 = sbr.rel (0) target = $region13
  $region12: #{simple_cnn_forward.9} parent=0 // pred_region
    _
  $region13: #{simple_cnn_forward.9} parent=0 // pred_fallthru
    _
  %p14 = scmp.eq.s32.totalorder 0, 0
  // Predicated region
  $region14: #{simple_cnn_forward.9} parent=0 // pred_check
    %p15 = pneg %p14
  $region15: #{simple_cnn_forward.9} parent=0 // pred_check_branch
    %17 = sbr.rel (%p15) target = $region17
  $region16: #{simple_cnn_forward.9} parent=0 // pred_region
    %18 = vst [vmem:[#allocation2] sm:$0xff] 0.0
    %19 = vst [vmem:[#allocation2 + $0x8] sm:$0xff] 0.0
    %20 = vst [vmem:[#allocation2 + $0x10] sm:$0xff] 0.0
    %21 = vst [vmem:[#allocation2 + $0x18] sm:$0xff] 0.0
    %22 = vst [vmem:[#allocation2 + $0x20] sm:$0xff] 0.0
    %23 = vst [vmem:[#allocation2 + $0x28] sm:$0xff] 0.0
    %24 = vst [vmem:[#allocation2 + $0x30] sm:$0xff] 0.0
    %25 = vst [vmem:[#allocation2 + $0x38] sm:$0xff] 0.0
    %26 = vst [vmem:[#allocation2 + $0x40] sm:$0xff] 0.0
    %27 = vst [vmem:[#allocation2 + $0x48] sm:$0xff] 0.0
    %28 = vst [vmem:[#allocation2 + $0x50] sm:$0xff] 0.0
    %29 = vst [vmem:[#allocation2 + $0x58] sm:$0xff] 0.0
    %30 = vst [vmem:[#allocation2 + $0x60] sm:$0xff] 0.0
    %31 = vst [vmem:[#allocation2 + $0x68] sm:$0xff] 0.0
    %32 = vst [vmem:[#allocation2 + $0x70] sm:$0xff] 0.0
    %33 = vst [vmem:[#allocation2 + $0x78] sm:$0xff] 0.0
  $region17: #{simple_cnn_forward.9} parent=0 // pred_fallthru
    _
  %v34 = vld [vmem:[#allocation2] sm:$0xff]
  %v35 = vld [vmem:[#allocation2 + $0x8] sm:$0xff]
  %v36 = vld [vmem:[#allocation2 + $0x10] sm:$0xff]
  %v37 = vld [vmem:[#allocation2 + $0x18] sm:$0xff]
  %v38 = vld [vmem:[#allocation2 + $0x20] sm:$0xff]
  %v39 = vld [vmem:[#allocation2 + $0x28] sm:$0xff]
  %v40 = vld [vmem:[#allocation2 + $0x30] sm:$0xff]
  %v41 = vld [vmem:[#allocation2 + $0x38] sm:$0xff]
  %v42 = vld [vmem:[#allocation2 + $0x40] sm:$0xff]
  %v43 = vld [vmem:[#allocation2 + $0x48] sm:$0xff]
  %v44 = vld [vmem:[#allocation2 + $0x50] sm:$0xff]
  %v45 = vld [vmem:[#allocation2 + $0x58] sm:$0xff]
  %v46 = vld [vmem:[#allocation2 + $0x60] sm:$0xff]
  %v47 = vld [vmem:[#allocation2 + $0x68] sm:$0xff]
  %v48 = vld [vmem:[#allocation2 + $0x70] sm:$0xff]
  %v49 = vld [vmem:[#allocation2 + $0x78] sm:$0xff]
  %v50 = vld [vmem:[%s0] sm:$0xff]
  %v51 = vld [vmem:[%s0 + $0x8] sm:$0xff]
  %v52 = vld [vmem:[%s0 + $0x10] sm:$0xff]
  %v53 = vld [vmem:[%s0 + $0x18] sm:$0xff]
  %v54 = vld [vmem:[%s0 + $0x20] sm:$0xff]
  %v55 = vld [vmem:[%s0 + $0x28] sm:$0xff]
  %v56 = vld [vmem:[%s0 + $0x30] sm:$0xff]
  %v57 = vld [vmem:[%s0 + $0x38] sm:$0xff]
  %v58 = vld [vmem:[%s0 + $0x40] sm:$0xff]
  %v59 = vld [vmem:[%s0 + $0x48] sm:$0xff]
  %v60 = vld [vmem:[%s0 + $0x50] sm:$0xff]
  %v61 = vld [vmem:[%s0 + $0x58] sm:$0xff]
  %v62 = vld [vmem:[%s0 + $0x60] sm:$0xff]
  %v63 = vld [vmem:[%s0 + $0x68] sm:$0xff]
  %v64 = vld [vmem:[%s0 + $0x70] sm:$0xff]
  %v65 = vld [vmem:[%s0 + $0x78] sm:$0xff]
  %v66 = vld [vmem:[%s0 + $0x80] sm:$0xff]
  %v67 = vld [vmem:[%s0 + $0x88] sm:$0xff]
  %v68 = vld [vmem:[%s0 + $0x90] sm:$0xff]
  %v69 = vld [vmem:[%s0 + $0x98] sm:$0xff]
  %v70 = vld [vmem:[%s0 + $0xa0] sm:$0xff]
  %v71 = vld [vmem:[%s0 + $0xa8] sm:$0xff]
  %v72 = vld [vmem:[%s0 + $0xb0] sm:$0xff]
  %v73 = vld [vmem:[%s0 + $0xb8] sm:$0xff]
  %v74 = vld [vmem:[%s0 + $0xc0] sm:$0xff]
  %v75 = vld [vmem:[%s0 + $0xc8] sm:$0xff]
  %v76 = vld [vmem:[%s0 + $0xd0] sm:$0xff]
  %v77 = vld [vmem:[%s0 + $0xd8] sm:$0xff]
  %v78 = vld [vmem:[%s0 + $0xe0] sm:$0xff]
  %v79 = vld [vmem:[%s0 + $0xe8] sm:$0xff]
  %v80 = vld [vmem:[%s0 + $0xf0] sm:$0xff]
  %v81 = vld [vmem:[%s0 + $0xf8] sm:$0xff]
  %v82 = vld [vmem:[%s0 + $0x100] sm:$0xff]
  %v83 = vld [vmem:[%s0 + $0x108] sm:$0xff]
  %v84 = vld [vmem:[%s0 + $0x110] sm:$0xff]
  %v85 = vld [vmem:[%s0 + $0x118] sm:$0xff]
  %v86 = vld [vmem:[%s0 + $0x120] sm:$0xff]
  %v87 = vld [vmem:[%s0 + $0x128] sm:$0xff]
  %v88 = vld [vmem:[%s0 + $0x130] sm:$0xff]
  %v89 = vld [vmem:[%s0 + $0x138] sm:$0xff]
  %v90 = vld [vmem:[%s0 + $0x140] sm:$0xff]
  %v91 = vld [vmem:[%s0 + $0x148] sm:$0xff]
  %v92 = vld [vmem:[%s0 + $0x150] sm:$0xff]
  %v93 = vld [vmem:[%s0 + $0x158] sm:$0xff]
  %v94 = vld [vmem:[%s0 + $0x160] sm:$0xff]
  %v95 = vld [vmem:[%s0 + $0x168] sm:$0xff]
  %v96 = vld [vmem:[%s0 + $0x170] sm:$0xff]
  %v97 = vld [vmem:[%s0 + $0x178] sm:$0xff]
  %v98 = vld [vmem:[%s0 + $0x180] sm:$0xff]
  %v99 = vld [vmem:[%s0 + $0x188] sm:$0xff]
  %v100 = vld [vmem:[%s0 + $0x190] sm:$0xff]
  %v101 = vld [vmem:[%s0 + $0x198] sm:$0xff]
  %v102 = vld [vmem:[%s0 + $0x1a0] sm:$0xff]
  %v103 = vld [vmem:[%s0 + $0x1a8] sm:$0xff]
  %v104 = vld [vmem:[%s0 + $0x1b0] sm:$0xff]
  %v105 = vld [vmem:[%s0 + $0x1b8] sm:$0xff]
  %v106 = vld [vmem:[%s0 + $0x1c0] sm:$0xff]
  %v107 = vld [vmem:[%s0 + $0x1c8] sm:$0xff]
  %v108 = vld [vmem:[%s0 + $0x1d0] sm:$0xff]
  %v109 = vld [vmem:[%s0 + $0x1d8] sm:$0xff]
  %v110 = vld [vmem:[%s0 + $0x1e0] sm:$0xff]
  %v111 = vld [vmem:[%s0 + $0x1e8] sm:$0xff]
  %v112 = vld [vmem:[%s0 + $0x1f0] sm:$0xff]
  %v113 = vld [vmem:[%s0 + $0x1f8] sm:$0xff]
  %v114 = vld [vmem:[%s0 + $0x200] sm:$0xff]
  %v115 = vld [vmem:[%s0 + $0x208] sm:$0xff]
  %v116 = vld [vmem:[%s0 + $0x210] sm:$0xff]
  %v117 = vld [vmem:[%s0 + $0x218] sm:$0xff]
  %v118 = vld [vmem:[%s0 + $0x220] sm:$0xff]
  %v119 = vld [vmem:[%s0 + $0x228] sm:$0xff]
  %v120 = vld [vmem:[%s0 + $0x230] sm:$0xff]
  %v121 = vld [vmem:[%s0 + $0x238] sm:$0xff]
  %v122 = vld [vmem:[%s0 + $0x240] sm:$0xff]
  %v123 = vld [vmem:[%s0 + $0x248] sm:$0xff]
  %v124 = vld [vmem:[%s0 + $0x250] sm:$0xff]
  %v125 = vld [vmem:[%s0 + $0x258] sm:$0xff]
  %v126 = vld [vmem:[%s0 + $0x260] sm:$0xff]
  %v127 = vld [vmem:[%s0 + $0x268] sm:$0xff]
  %v128 = vld [vmem:[%s0 + $0x270] sm:$0xff]
  %v129 = vld [vmem:[%s0 + $0x278] sm:$0xff]
  %v130 = vld [vmem:[%s0 + $0x280] sm:$0xff]
  %v131 = vld [vmem:[%s0 + $0x288] sm:$0xff]
  %v132 = vld [vmem:[%s0 + $0x290] sm:$0xff]
  %v133 = vld [vmem:[%s0 + $0x298] sm:$0xff]
  %v134 = vld [vmem:[%s0 + $0x2a0] sm:$0xff]
  %v135 = vld [vmem:[%s0 + $0x2a8] sm:$0xff]
  %v136 = vld [vmem:[%s0 + $0x2b0] sm:$0xff]
  %v137 = vld [vmem:[%s0 + $0x2b8] sm:$0xff]
  %v138 = vld [vmem:[%s0 + $0x2c0] sm:$0xff]
  %v139 = vld [vmem:[%s0 + $0x2c8] sm:$0xff]
  %v140 = vld [vmem:[%s0 + $0x2d0] sm:$0xff]
  %v141 = vld [vmem:[%s0 + $0x2d8] sm:$0xff]
  %v142 = vld [vmem:[%s0 + $0x2e0] sm:$0xff]
  %v143 = vld [vmem:[%s0 + $0x2e8] sm:$0xff]
  %v144 = vld [vmem:[%s0 + $0x2f0] sm:$0xff]
  %v145 = vld [vmem:[%s0 + $0x2f8] sm:$0xff]
  %v146 = vld [vmem:[%s0 + $0x300] sm:$0xff]
  %v147 = vld [vmem:[%s0 + $0x308] sm:$0xff]
  %v148 = vld [vmem:[%s0 + $0x310] sm:$0xff]
  %v149 = vld [vmem:[%s0 + $0x318] sm:$0xff]
  %v150 = vld [vmem:[%s0 + $0x320] sm:$0xff]
  %v151 = vld [vmem:[%s0 + $0x328] sm:$0xff]
  %v152 = vld [vmem:[%s0 + $0x330] sm:$0xff]
  %v153 = vld [vmem:[%s0 + $0x338] sm:$0xff]
  %v154 = vld [vmem:[%s0 + $0x340] sm:$0xff]
  %v155 = vld [vmem:[%s0 + $0x348] sm:$0xff]
  %v156 = vld [vmem:[%s0 + $0x350] sm:$0xff]
  %v157 = vld [vmem:[%s0 + $0x358] sm:$0xff]
  %v158 = vld [vmem:[%s0 + $0x360] sm:$0xff]
  %v159 = vld [vmem:[%s0 + $0x368] sm:$0xff]
  %v160 = vld [vmem:[%s0 + $0x370] sm:$0xff]
  %v161 = vld [vmem:[%s0 + $0x378] sm:$0xff]
  %v162 = vld [vmem:[%s1] sm:$0xff]
  %v163 = vld [vmem:[%s1 + $0x8] sm:$0xff]
  %v164 = vld [vmem:[%s1 + $0x10] sm:$0xff]
  %v165 = vld [vmem:[%s1 + $0x18] sm:$0xff]
  %v166 = vld [vmem:[%s1 + $0x20] sm:$0xff]
  %v167 = vld [vmem:[%s1 + $0x28] sm:$0xff]
  %v168 = vld [vmem:[%s1 + $0x30] sm:$0xff]
  %v169 = vld [vmem:[%s1 + $0x38] sm:$0xff]
  %v170 = vld [vmem:[%s1 + $0x40] sm:$0xff]
  %v171 = vld [vmem:[%s1 + $0x48] sm:$0xff]
  %v172 = vld [vmem:[%s1 + $0x50] sm:$0xff]
  %v173 = vld [vmem:[%s1 + $0x58] sm:$0xff]
  %v174 = vld [vmem:[%s1 + $0x60] sm:$0xff]
  %v175 = vld [vmem:[%s1 + $0x68] sm:$0xff]
  %v176 = vld [vmem:[%s1 + $0x70] sm:$0xff]
  %v177 = vld [vmem:[%s1 + $0x78] sm:$0xff]
  %v178 = vld [vmem:[%s1 + $0x80] sm:$0xff]
  %v179 = vld [vmem:[%s1 + $0x88] sm:$0xff]
  %v180 = vld [vmem:[%s1 + $0x90] sm:$0xff]
  %v181 = vld [vmem:[%s1 + $0x98] sm:$0xff]
  %v182 = vld [vmem:[%s1 + $0xa0] sm:$0xff]
  %v183 = vld [vmem:[%s1 + $0xa8] sm:$0xff]
  %v184 = vld [vmem:[%s1 + $0xb0] sm:$0xff]
  %v185 = vld [vmem:[%s1 + $0xb8] sm:$0xff]
  %v186 = vld [vmem:[%s1 + $0xc0] sm:$0xff]
  %v187 = vld [vmem:[%s1 + $0xc8] sm:$0xff]
  %v188 = vld [vmem:[%s1 + $0xd0] sm:$0xff]
  %v189 = vld [vmem:[%s1 + $0xd8] sm:$0xff]
  %v190 = vld [vmem:[%s1 + $0xe0] sm:$0xff]
  %v191 = vld [vmem:[%s1 + $0xe8] sm:$0xff]
  %v192 = vld [vmem:[%s1 + $0xf0] sm:$0xff]
  %v193 = vld [vmem:[%s1 + $0xf8] sm:$0xff]
  %v194 = vld [vmem:[%s1 + $0x100] sm:$0xff]
  %v195 = vld [vmem:[%s1 + $0x108] sm:$0xff]
  %v196 = vld [vmem:[%s1 + $0x110] sm:$0xff]
  %v197 = vld [vmem:[%s1 + $0x118] sm:$0xff]
  %v198 = vld [vmem:[%s1 + $0x120] sm:$0xff]
  %v199 = vld [vmem:[%s1 + $0x128] sm:$0xff]
  %v200 = vld [vmem:[%s1 + $0x130] sm:$0xff]
  %v201 = vld [vmem:[%s1 + $0x138] sm:$0xff]
  %v202 = vld [vmem:[%s1 + $0x140] sm:$0xff]
  %v203 = vld [vmem:[%s1 + $0x148] sm:$0xff]
  %v204 = vld [vmem:[%s1 + $0x150] sm:$0xff]
  %v205 = vld [vmem:[%s1 + $0x158] sm:$0xff]
  %v206 = vld [vmem:[%s1 + $0x160] sm:$0xff]
  %v207 = vld [vmem:[%s1 + $0x168] sm:$0xff]
  %v208 = vld [vmem:[%s1 + $0x170] sm:$0xff]
  %v209 = vld [vmem:[%s1 + $0x178] sm:$0xff]
  %v210 = vld [vmem:[%s1 + $0x180] sm:$0xff]
  %v211 = vld [vmem:[%s1 + $0x188] sm:$0xff]
  %v212 = vld [vmem:[%s1 + $0x190] sm:$0xff]
  %v213 = vld [vmem:[%s1 + $0x198] sm:$0xff]
  %v214 = vld [vmem:[%s1 + $0x1a0] sm:$0xff]
  %v215 = vld [vmem:[%s1 + $0x1a8] sm:$0xff]
  %v216 = vld [vmem:[%s1 + $0x1b0] sm:$0xff]
  %v217 = vld [vmem:[%s1 + $0x1b8] sm:$0xff]
  %v218 = vld [vmem:[%s1 + $0x1c0] sm:$0xff]
  %v219 = vld [vmem:[%s1 + $0x1c8] sm:$0xff]
  %v220 = vld [vmem:[%s1 + $0x1d0] sm:$0xff]
  %v221 = vld [vmem:[%s1 + $0x1d8] sm:$0xff]
  %v222 = vld [vmem:[%s1 + $0x1e0] sm:$0xff]
  %v223 = vld [vmem:[%s1 + $0x1e8] sm:$0xff]
  %v224 = vld [vmem:[%s1 + $0x1f0] sm:$0xff]
  %v225 = vld [vmem:[%s1 + $0x1f8] sm:$0xff]
  %v226 = vld [vmem:[%s1 + $0x200] sm:$0xff]
  %v227 = vld [vmem:[%s1 + $0x208] sm:$0xff]
  %v228 = vld [vmem:[%s1 + $0x210] sm:$0xff]
  %v229 = vld [vmem:[%s1 + $0x218] sm:$0xff]
  %v230 = vld [vmem:[%s1 + $0x220] sm:$0xff]
  %v231 = vld [vmem:[%s1 + $0x228] sm:$0xff]
  %v232 = vld [vmem:[%s1 + $0x230] sm:$0xff]
  %v233 = vld [vmem:[%s1 + $0x238] sm:$0xff]
  %v234 = vld [vmem:[%s1 + $0x240] sm:$0xff]
  %v235 = vld [vmem:[%s1 + $0x248] sm:$0xff]
  %v236 = vld [vmem:[%s1 + $0x250] sm:$0xff]
  %v237 = vld [vmem:[%s1 + $0x258] sm:$0xff]
  %v238 = vld [vmem:[%s1 + $0x260] sm:$0xff]
  %v239 = vld [vmem:[%s1 + $0x268] sm:$0xff]
  %v240 = vld [vmem:[%s1 + $0x270] sm:$0xff]
  %v241 = vld [vmem:[%s1 + $0x278] sm:$0xff]
  %v242 = vld [vmem:[%s1 + $0x280] sm:$0xff]
  %v243 = vld [vmem:[%s1 + $0x288] sm:$0xff]
  %v244 = vld [vmem:[%s1 + $0x290] sm:$0xff]
  %v245 = vld [vmem:[%s1 + $0x298] sm:$0xff]
  %v246 = vld [vmem:[%s1 + $0x2a0] sm:$0xff]
  %v247 = vld [vmem:[%s1 + $0x2a8] sm:$0xff]
  %v248 = vld [vmem:[%s1 + $0x2b0] sm:$0xff]
  %v249 = vld [vmem:[%s1 + $0x2b8] sm:$0xff]
  %v250 = vld [vmem:[%s1 + $0x2c0] sm:$0xff]
  %v251 = vld [vmem:[%s1 + $0x2c8] sm:$0xff]
  %v252 = vld [vmem:[%s1 + $0x2d0] sm:$0xff]
  %v253 = vld [vmem:[%s1 + $0x2d8] sm:$0xff]
  %v254 = vld [vmem:[%s1 + $0x2e0] sm:$0xff]
  %v255 = vld [vmem:[%s1 + $0x2e8] sm:$0xff]
  %v256 = vld [vmem:[%s1 + $0x2f0] sm:$0xff]
  %v257 = vld [vmem:[%s1 + $0x2f8] sm:$0xff]
  %v258 = vld [vmem:[%s1 + $0x300] sm:$0xff]
  %v259 = vld [vmem:[%s1 + $0x308] sm:$0xff]
  %v260 = vld [vmem:[%s1 + $0x310] sm:$0xff]
  %v261 = vld [vmem:[%s1 + $0x318] sm:$0xff]
  %v262 = vld [vmem:[%s1 + $0x320] sm:$0xff]
  %v263 = vld [vmem:[%s1 + $0x328] sm:$0xff]
  %v264 = vld [vmem:[%s1 + $0x330] sm:$0xff]
  %v265 = vld [vmem:[%s1 + $0x338] sm:$0xff]
  %v266 = vld [vmem:[%s1 + $0x340] sm:$0xff]
  %v267 = vld [vmem:[%s1 + $0x348] sm:$0xff]
  %v268 = vld [vmem:[%s1 + $0x350] sm:$0xff]
  %v269 = vld [vmem:[%s1 + $0x358] sm:$0xff]
  %v270 = vld [vmem:[%s1 + $0x360] sm:$0xff]
  %v271 = vld [vmem:[%s1 + $0x368] sm:$0xff]
  %v272 = vld [vmem:[%s1 + $0x370] sm:$0xff]
  %v273 = vld [vmem:[%s1 + $0x378] sm:$0xff]
  %274 = vmatprep.subr.mxu0 0.0
  %275 = vmatpush1.msra.mxu0 %v162
  %276 = vmatprep.subr.mxu0 0.0
  %277 = vmatpush1.msra.mxu0 %v163
  %278 = vmatprep.subr.mxu0 0.0
  %279 = vmatpush1.msra.mxu0 %v164
  %280 = vmatprep.subr.mxu0 0.0
  %281 = vmatpush1.msra.mxu0 %v165
  %282 = vmatprep.subr.mxu0 0.0
  %283 = vmatpush1.msra.mxu0 %v166
  %284 = vmatprep.subr.mxu0 0.0
  %285 = vmatpush1.msra.mxu0 %v167
  %286 = vmatprep.subr.mxu0 0.0
  %287 = vmatpush1.msra.mxu0 %v168
  %288 = vmatprep.subr.mxu0 0.0
  %289 = vmatpush1.msra.mxu0 %v169
  %290 = vmatprep.subr.mxu0 0.0
  %291 = vmatpush1.msra.mxu0 %v170
  %292 = vmatprep.subr.mxu0 0.0
  %293 = vmatpush1.msra.mxu0 %v171
  %294 = vmatprep.subr.mxu0 0.0
  %295 = vmatpush1.msra.mxu0 %v172
  %296 = vmatprep.subr.mxu0 0.0
  %297 = vmatpush1.msra.mxu0 %v173
  %298 = vmatprep.subr.mxu0 0.0
  %299 = vmatpush1.msra.mxu0 %v174
  %300 = vmatprep.subr.mxu0 0.0
  %301 = vmatpush1.msra.mxu0 %v175
  %302 = vmatprep.subr.mxu0 0.0
  %303 = vmatpush1.msra.mxu0 %v176
  %304 = vmatprep.subr.mxu0 0.0
  %305 = vmatpush1.msra.mxu0 %v177
  %306 = vmatprep.subr.mxu0 0.0
  %307 = vmatpush1.msra.mxu0 %v178
  %308 = vmatprep.subr.mxu0 0.0
  %309 = vmatpush1.msra.mxu0 %v179
  %310 = vmatprep.subr.mxu0 0.0
  %311 = vmatpush1.msra.mxu0 %v180
  %312 = vmatprep.subr.mxu0 0.0
  %313 = vmatpush1.msra.mxu0 %v181
  %314 = vmatprep.subr.mxu0 0.0
  %315 = vmatpush1.msra.mxu0 %v182
  %316 = vmatprep.subr.mxu0 0.0
  %317 = vmatpush1.msra.mxu0 %v183
  %318 = vmatprep.subr.mxu0 0.0
  %319 = vmatpush1.msra.mxu0 %v184
  %320 = vmatprep.subr.mxu0 0.0
  %321 = vmatpush1.msra.mxu0 %v185
  %322 = vmatprep.subr.mxu0 0.0
  %323 = vmatpush1.msra.mxu0 %v186
  %324 = vmatprep.subr.mxu0 0.0
  %325 = vmatpush1.msra.mxu0 %v187
  %326 = vmatprep.subr.mxu0 0.0
  %327 = vmatpush1.msra.mxu0 %v188
  %328 = vmatprep.subr.mxu0 0.0
  %329 = vmatpush1.msra.mxu0 %v189
  %330 = vmatprep.subr.mxu0 0.0
  %331 = vmatpush1.msra.mxu0 %v190
  %332 = vmatprep.subr.mxu0 0.0
  %333 = vmatpush1.msra.mxu0 %v191
  %334 = vmatprep.subr.mxu0 0.0
  %335 = vmatpush1.msra.mxu0 %v192
  %336 = vmatprep.subr.mxu0 0.0
  %337 = vmatpush1.msra.mxu0 %v193
  %338 = vmatprep.mubr.f32.mxu0 %v51
  %339 = vmatmul.mubr.f32.gmra.mrb[0].mxu0 %v50
  %v340 = vpop.f32.mrb[0].mxu0
  %v341 = vadd.f32 0.0, %v340
  %v342 = vpop.f32.mrb[0].mxu0
  %343 = vmatprep.mubr.f32.mxu0 %v58
  %344 = vmatmul.mubr.f32.gmra.mrb[0].mxu0 %v57
  %v345 = vpop.f32.mrb[0].mxu0
  %v346 = vadd.f32 0.0, %v345
  %v347 = vpop.f32.mrb[0].mxu0
  %348 = vmatprep.mubr.f32.mxu0 %v65
  %349 = vmatmul.mubr.f32.gmra.mrb[0].mxu0 %v64
  %v350 = vpop.f32.mrb[0].mxu0
  %v351 = vadd.f32 0.0, %v350
  %v352 = vpop.f32.mrb[0].mxu0
  %353 = vmatprep.mubr.f32.mxu0 %v72
  %354 = vmatmul.mubr.f32.gmra.mrb[0].mxu0 %v71
  %v355 = vpop.f32.mrb[0].mxu0
  %v356 = vadd.f32 0.0, %v355
  %v357 = vpop.f32.mrb[0].mxu0
  %358 = vmatprep.mubr.f32.mxu0 %v79
  %359 = vmatmul.mubr.f32.gmra.mrb[0].mxu0 %v78
  %v360 = vpop.f32.mrb[0].mxu0
  %v361 = vadd.f32 0.0, %v360
  %v362 = vpop.f32.mrb[0].mxu0
  %363 = vmatprep.mubr.f32.mxu0 %v86
  %364 = vmatmul.mubr.f32.gmra.mrb[0].mxu0 %v85
  %v365 = vpop.f32.mrb[0].mxu0
  %v366 = vadd.f32 0.0, %v365
  %v367 = vpop.f32.mrb[0].mxu0
  %368 = vmatprep.mubr.f32.mxu0 %v93
  %369 = vmatmul.mubr.f32.gmra.mrb[0].mxu0 %v92
  %v370 = vpop.f32.mrb[0].mxu0
  %v371 = vadd.f32 0.0, %v370
  %v372 = vpop.f32.mrb[0].mxu0
  %373 = vmatprep.mubr.f32.mxu0 %v100
  %374 = vmatmul.mubr.f32.gmra.mrb[0].mxu0 %v99
  %v375 = vpop.f32.mrb[0].mxu0
  %v376 = vadd.f32 0.0, %v375
  %v377 = vpop.f32.mrb[0].mxu0
  %378 = vmatprep.mubr.f32.mxu0 %v107
  %379 = vmatmul.mubr.f32.gmra.mrb[0].mxu0 %v106
  %v380 = vpop.f32.mrb[0].mxu0
  %v381 = vadd.f32 0.0, %v380
  %v382 = vpop.f32.mrb[0].mxu0
  %383 = vmatprep.mubr.f32.mxu0 %v114
  %384 = vmatmul.mubr.f32.gmra.mrb[0].mxu0 %v113
  %v385 = vpop.f32.mrb[0].mxu0
  %v386 = vadd.f32 0.0, %v385
  %v387 = vpop.f32.mrb[0].mxu0
  %388 = vmatprep.mubr.f32.mxu0 %v121
  %389 = vmatmul.mubr.f32.gmra.mrb[0].mxu0 %v120
  %v390 = vpop.f32.mrb[0].mxu0
  %v391 = vadd.f32 0.0, %v390
  %v392 = vpop.f32.mrb[0].mxu0
  %393 = vmatprep.mubr.f32.mxu0 %v128
  %394 = vmatmul.mubr.f32.gmra.mrb[0].mxu0 %v127
  %v395 = vpop.f32.mrb[0].mxu0
  %v396 = vadd.f32 0.0, %v395
  %v397 = vpop.f32.mrb[0].mxu0
  %398 = vmatprep.mubr.f32.mxu0 %v135
  %399 = vmatmul.mubr.f32.gmra.mrb[0].mxu0 %v134
  %v400 = vpop.f32.mrb[0].mxu0
  %v401 = vadd.f32 0.0, %v400
  %v402 = vpop.f32.mrb[0].mxu0
  %403 = vmatprep.mubr.f32.mxu0 %v142
  %404 = vmatmul.mubr.f32.gmra.mrb[0].mxu0 %v141
  %v405 = vpop.f32.mrb[0].mxu0
  %v406 = vadd.f32 0.0, %v405
  %v407 = vpop.f32.mrb[0].mxu0
  %408 = vmatprep.mubr.f32.mxu0 %v149
  %409 = vmatmul.mubr.f32.gmra.mrb[0].mxu0 %v148
  %v410 = vpop.f32.mrb[0].mxu0
  %v411 = vadd.f32 0.0, %v410
  %v412 = vpop.f32.mrb[0].mxu0
  %413 = vmatprep.mubr.f32.mxu0 %v156
  %414 = vmatmul.mubr.f32.gmra.mrb[0].mxu0 %v155
  %v415 = vpop.f32.mrb[0].mxu0
  %v416 = vadd.f32 0.0, %v415
  %v417 = vpop.f32.mrb[0].mxu0
  %418 = vdwg.mxu0
  %419 = vmatprep.subr.mxu0 0.0
  %420 = vmatpush1.msra.mxu0 %v194
  %421 = vmatprep.subr.mxu0 0.0
  %422 = vmatpush1.msra.mxu0 %v195
  %423 = vmatprep.subr.mxu0 0.0
  %424 = vmatpush1.msra.mxu0 %v196
  %425 = vmatprep.subr.mxu0 0.0
  %426 = vmatpush1.msra.mxu0 %v197
  %427 = vmatprep.subr.mxu0 0.0
  %428 = vmatpush1.msra.mxu0 %v198
  %429 = vmatprep.subr.mxu0 0.0
  %430 = vmatpush1.msra.mxu0 %v199
  %431 = vmatprep.subr.mxu0 0.0
  %432 = vmatpush1.msra.mxu0 %v200
  %433 = vmatprep.subr.mxu0 0.0
  %434 = vmatpush1.msra.mxu0 %v201
  %435 = vmatprep.subr.mxu0 0.0
  %436 = vmatpush1.msra.mxu0 %v202
  %437 = vmatprep.subr.mxu0 0.0
  %438 = vmatpush1.msra.mxu0 %v203
  %439 = vmatprep.subr.mxu0 0.0
  %440 = vmatpush1.msra.mxu0 %v204
  %441 = vmatprep.subr.mxu0 0.0
  %442 = vmatpush1.msra.mxu0 %v205
  %443 = vmatprep.subr.mxu0 0.0
  %444 = vmatpush1.msra.mxu0 %v206
  %445 = vmatprep.subr.mxu0 0.0
  %446 = vmatpush1.msra.mxu0 %v207
  %447 = vmatprep.subr.mxu0 0.0
  %448 = vmatpush1.msra.mxu0 %v208
  %449 = vmatprep.subr.mxu0 0.0
  %450 = vmatpush1.msra.mxu0 %v209
  %451 = vmatprep.subr.mxu0 0.0
  %452 = vmatpush1.msra.mxu0 %v210
  %453 = vmatprep.subr.mxu0 0.0
  %454 = vmatpush1.msra.mxu0 %v211
  %455 = vmatprep.subr.mxu0 0.0
  %456 = vmatpush1.msra.mxu0 %v212
  %457 = vmatprep.subr.mxu0 0.0
  %458 = vmatpush1.msra.mxu0 %v213
  %459 = vmatprep.subr.mxu0 0.0
  %460 = vmatpush1.msra.mxu0 %v214
  %461 = vmatprep.subr.mxu0 0.0
  %462 = vmatpush1.msra.mxu0 %v215
  %463 = vmatprep.subr.mxu0 0.0
  %464 = vmatpush1.msra.mxu0 %v216
  %465 = vmatprep.subr.mxu0 0.0
  %466 = vmatpush1.msra.mxu0 %v217
  %467 = vmatprep.subr.mxu0 0.0
  %468 = vmatpush1.msra.mxu0 %v218
  %469 = vmatprep.subr.mxu0 0.0
  %470 = vmatpush1.msra.mxu0 %v219
  %471 = vmatprep.subr.mxu0 0.0
  %472 = vmatpush1.msra.mxu0 %v220
  %473 = vmatprep.subr.mxu0 0.0
  %474 = vmatpush1.msra.mxu0 %v221
  %475 = vmatprep.subr.mxu0 0.0
  %476 = vmatpush1.msra.mxu0 %v222
  %477 = vmatprep.subr.mxu0 0.0
  %478 = vmatpush1.msra.mxu0 %v223
  %479 = vmatprep.subr.mxu0 0.0
  %480 = vmatpush1.msra.mxu0 %v224
  %481 = vmatprep.subr.mxu0 0.0
  %482 = vmatpush1.msra.mxu0 %v225
  %483 = vmatprep.mubr.f32.mxu0 %v53
  %484 = vmatmul.mubr.f32.gmra.mrb[0].mxu0 %v52
  %v485 = vpop.f32.mrb[0].mxu0
  %v486 = vadd.f32 %v341, %v485
  %v487 = vpop.f32.mrb[0].mxu0
  %488 = vmatprep.mubr.f32.mxu0 %v60
  %489 = vmatmul.mubr.f32.gmra.mrb[0].mxu0 %v59
  %v490 = vpop.f32.mrb[0].mxu0
  %v491 = vadd.f32 %v346, %v490
  %v492 = vpop.f32.mrb[0].mxu0
  %493 = vmatprep.mubr.f32.mxu0 %v67
  %494 = vmatmul.mubr.f32.gmra.mrb[0].mxu0 %v66
  %v495 = vpop.f32.mrb[0].mxu0
  %v496 = vadd.f32 %v351, %v495
  %v497 = vpop.f32.mrb[0].mxu0
  %498 = vmatprep.mubr.f32.mxu0 %v74
  %499 = vmatmul.mubr.f32.gmra.mrb[0].mxu0 %v73
  %v500 = vpop.f32.mrb[0].mxu0
  %v501 = vadd.f32 %v356, %v500
  %v502 = vpop.f32.mrb[0].mxu0
  %503 = vmatprep.mubr.f32.mxu0 %v81
  %504 = vmatmul.mubr.f32.gmra.mrb[0].mxu0 %v80
  %v505 = vpop.f32.mrb[0].mxu0
  %v506 = vadd.f32 %v361, %v505
  %v507 = vpop.f32.mrb[0].mxu0
  %508 = vmatprep.mubr.f32.mxu0 %v88
  %509 = vmatmul.mubr.f32.gmra.mrb[0].mxu0 %v87
  %v510 = vpop.f32.mrb[0].mxu0
  %v511 = vadd.f32 %v366, %v510
  %v512 = vpop.f32.mrb[0].mxu0
  %513 = vmatprep.mubr.f32.mxu0 %v95
  %514 = vmatmul.mubr.f32.gmra.mrb[0].mxu0 %v94
  %v515 = vpop.f32.mrb[0].mxu0
  %v516 = vadd.f32 %v371, %v515
  %v517 = vpop.f32.mrb[0].mxu0
  %518 = vmatprep.mubr.f32.mxu0 %v102
  %519 = vmatmul.mubr.f32.gmra.mrb[0].mxu0 %v101
  %v520 = vpop.f32.mrb[0].mxu0
  %v521 = vadd.f32 %v376, %v520
  %v522 = vpop.f32.mrb[0].mxu0
  %523 = vmatprep.mubr.f32.mxu0 %v109
  %524 = vmatmul.mubr.f32.gmra.mrb[0].mxu0 %v108
  %v525 = vpop.f32.mrb[0].mxu0
  %v526 = vadd.f32 %v381, %v525
  %v527 = vpop.f32.mrb[0].mxu0
  %528 = vmatprep.mubr.f32.mxu0 %v116
  %529 = vmatmul.mubr.f32.gmra.mrb[0].mxu0 %v115
  %v530 = vpop.f32.mrb[0].mxu0
  %v531 = vadd.f32 %v386, %v530
  %v532 = vpop.f32.mrb[0].mxu0
  %533 = vmatprep.mubr.f32.mxu0 %v123
  %534 = vmatmul.mubr.f32.gmra.mrb[0].mxu0 %v122
  %v535 = vpop.f32.mrb[0].mxu0
  %v536 = vadd.f32 %v391, %v535
  %v537 = vpop.f32.mrb[0].mxu0
  %538 = vmatprep.mubr.f32.mxu0 %v130
  %539 = vmatmul.mubr.f32.gmra.mrb[0].mxu0 %v129
  %v540 = vpop.f32.mrb[0].mxu0
  %v541 = vadd.f32 %v396, %v540
  %v542 = vpop.f32.mrb[0].mxu0
  %543 = vmatprep.mubr.f32.mxu0 %v137
  %544 = vmatmul.mubr.f32.gmra.mrb[0].mxu0 %v136
  %v545 = vpop.f32.mrb[0].mxu0
  %v546 = vadd.f32 %v401, %v545
  %v547 = vpop.f32.mrb[0].mxu0
  %548 = vmatprep.mubr.f32.mxu0 %v144
  %549 = vmatmul.mubr.f32.gmra.mrb[0].mxu0 %v143
  %v550 = vpop.f32.mrb[0].mxu0
  %v551 = vadd.f32 %v406, %v550
  %v552 = vpop.f32.mrb[0].mxu0
  %553 = vmatprep.mubr.f32.mxu0 %v151
  %554 = vmatmul.mubr.f32.gmra.mrb[0].mxu0 %v150
  %v555 = vpop.f32.mrb[0].mxu0
  %v556 = vadd.f32 %v411, %v555
  %v557 = vpop.f32.mrb[0].mxu0
  %558 = vmatprep.mubr.f32.mxu0 %v158
  %559 = vmatmul.mubr.f32.gmra.mrb[0].mxu0 %v157
  %v560 = vpop.f32.mrb[0].mxu0
  %v561 = vadd.f32 %v416, %v560
  %v562 = vpop.f32.mrb[0].mxu0
  %563 = vdwg.mxu0
  %564 = vmatprep.subr.mxu0 0.0
  %565 = vmatpush1.msra.mxu0 %v226
  %566 = vmatprep.subr.mxu0 0.0
  %567 = vmatpush1.msra.mxu0 %v227
  %568 = vmatprep.subr.mxu0 0.0
  %569 = vmatpush1.msra.mxu0 %v228
  %570 = vmatprep.subr.mxu0 0.0
  %571 = vmatpush1.msra.mxu0 %v229
  %572 = vmatprep.subr.mxu0 0.0
  %573 = vmatpush1.msra.mxu0 %v230
  %574 = vmatprep.subr.mxu0 0.0
  %575 = vmatpush1.msra.mxu0 %v231
  %576 = vmatprep.subr.mxu0 0.0
  %577 = vmatpush1.msra.mxu0 %v232
  %578 = vmatprep.subr.mxu0 0.0
  %579 = vmatpush1.msra.mxu0 %v233
  %580 = vmatprep.subr.mxu0 0.0
  %581 = vmatpush1.msra.mxu0 %v234
  %582 = vmatprep.subr.mxu0 0.0
  %583 = vmatpush1.msra.mxu0 %v235
  %584 = vmatprep.subr.mxu0 0.0
  %585 = vmatpush1.msra.mxu0 %v236
  %586 = vmatprep.subr.mxu0 0.0
  %587 = vmatpush1.msra.mxu0 %v237
  %588 = vmatprep.subr.mxu0 0.0
  %589 = vmatpush1.msra.mxu0 %v238
  %590 = vmatprep.subr.mxu0 0.0
  %591 = vmatpush1.msra.mxu0 %v239
  %592 = vmatprep.subr.mxu0 0.0
  %593 = vmatpush1.msra.mxu0 %v240
  %594 = vmatprep.subr.mxu0 0.0
  %595 = vmatpush1.msra.mxu0 %v241
  %596 = vmatprep.subr.mxu0 0.0
  %597 = vmatpush1.msra.mxu0 %v242
  %598 = vmatprep.subr.mxu0 0.0
  %599 = vmatpush1.msra.mxu0 %v243
  %600 = vmatprep.subr.mxu0 0.0
  %601 = vmatpush1.msra.mxu0 %v244
  %602 = vmatprep.subr.mxu0 0.0
  %603 = vmatpush1.msra.mxu0 %v245
  %604 = vmatprep.subr.mxu0 0.0
  %605 = vmatpush1.msra.mxu0 %v246
  %606 = vmatprep.subr.mxu0 0.0
  %607 = vmatpush1.msra.mxu0 %v247
  %608 = vmatprep.subr.mxu0 0.0
  %609 = vmatpush1.msra.mxu0 %v248
  %610 = vmatprep.subr.mxu0 0.0
  %611 = vmatpush1.msra.mxu0 %v249
  %612 = vmatprep.subr.mxu0 0.0
  %613 = vmatpush1.msra.mxu0 %v250
  %614 = vmatprep.subr.mxu0 0.0
  %615 = vmatpush1.msra.mxu0 %v251
  %616 = vmatprep.subr.mxu0 0.0
  %617 = vmatpush1.msra.mxu0 %v252
  %618 = vmatprep.subr.mxu0 0.0
  %619 = vmatpush1.msra.mxu0 %v253
  %620 = vmatprep.subr.mxu0 0.0
  %621 = vmatpush1.msra.mxu0 %v254
  %622 = vmatprep.subr.mxu0 0.0
  %623 = vmatpush1.msra.mxu0 %v255
  %624 = vmatprep.subr.mxu0 0.0
  %625 = vmatpush1.msra.mxu0 %v256
  %626 = vmatprep.subr.mxu0 0.0
  %627 = vmatpush1.msra.mxu0 %v257
  %628 = vmatprep.mubr.f32.mxu0 %v55
  %629 = vmatmul.mubr.f32.gmra.mrb[0].mxu0 %v54
  %v630 = vpop.f32.mrb[0].mxu0
  %v631 = vadd.f32 %v486, %v630
  %v632 = vpop.f32.mrb[0].mxu0
  %633 = vmatprep.mubr.f32.mxu0 %v62
  %634 = vmatmul.mubr.f32.gmra.mrb[0].mxu0 %v61
  %v635 = vpop.f32.mrb[0].mxu0
  %v636 = vadd.f32 %v491, %v635
  %v637 = vpop.f32.mrb[0].mxu0
  %638 = vmatprep.mubr.f32.mxu0 %v69
  %639 = vmatmul.mubr.f32.gmra.mrb[0].mxu0 %v68
  %v640 = vpop.f32.mrb[0].mxu0
  %v641 = vadd.f32 %v496, %v640
  %v642 = vpop.f32.mrb[0].mxu0
  %643 = vmatprep.mubr.f32.mxu0 %v76
  %644 = vmatmul.mubr.f32.gmra.mrb[0].mxu0 %v75
  %v645 = vpop.f32.mrb[0].mxu0
  %v646 = vadd.f32 %v501, %v645
  %v647 = vpop.f32.mrb[0].mxu0
  %648 = vmatprep.mubr.f32.mxu0 %v83
  %649 = vmatmul.mubr.f32.gmra.mrb[0].mxu0 %v82
  %v650 = vpop.f32.mrb[0].mxu0
  %v651 = vadd.f32 %v506, %v650
  %v652 = vpop.f32.mrb[0].mxu0
  %653 = vmatprep.mubr.f32.mxu0 %v90
  %654 = vmatmul.mubr.f32.gmra.mrb[0].mxu0 %v89
  %v655 = vpop.f32.mrb[0].mxu0
  %v656 = vadd.f32 %v511, %v655
  %v657 = vpop.f32.mrb[0].mxu0
  %658 = vmatprep.mubr.f32.mxu0 %v97
  %659 = vmatmul.mubr.f32.gmra.mrb[0].mxu0 %v96
  %v660 = vpop.f32.mrb[0].mxu0
  %v661 = vadd.f32 %v516, %v660
  %v662 = vpop.f32.mrb[0].mxu0
  %663 = vmatprep.mubr.f32.mxu0 %v104
  %664 = vmatmul.mubr.f32.gmra.mrb[0].mxu0 %v103
  %v665 = vpop.f32.mrb[0].mxu0
  %v666 = vadd.f32 %v521, %v665
  %v667 = vpop.f32.mrb[0].mxu0
  %668 = vmatprep.mubr.f32.mxu0 %v111
  %669 = vmatmul.mubr.f32.gmra.mrb[0].mxu0 %v110
  %v670 = vpop.f32.mrb[0].mxu0
  %v671 = vadd.f32 %v526, %v670
  %v672 = vpop.f32.mrb[0].mxu0
  %673 = vmatprep.mubr.f32.mxu0 %v118
  %674 = vmatmul.mubr.f32.gmra.mrb[0].mxu0 %v117
  %v675 = vpop.f32.mrb[0].mxu0
  %v676 = vadd.f32 %v531, %v675
  %v677 = vpop.f32.mrb[0].mxu0
  %678 = vmatprep.mubr.f32.mxu0 %v125
  %679 = vmatmul.mubr.f32.gmra.mrb[0].mxu0 %v124
  %v680 = vpop.f32.mrb[0].mxu0
  %v681 = vadd.f32 %v536, %v680
  %v682 = vpop.f32.mrb[0].mxu0
  %683 = vmatprep.mubr.f32.mxu0 %v132
  %684 = vmatmul.mubr.f32.gmra.mrb[0].mxu0 %v131
  %v685 = vpop.f32.mrb[0].mxu0
  %v686 = vadd.f32 %v541, %v685
  %v687 = vpop.f32.mrb[0].mxu0
  %688 = vmatprep.mubr.f32.mxu0 %v139
  %689 = vmatmul.mubr.f32.gmra.mrb[0].mxu0 %v138
  %v690 = vpop.f32.mrb[0].mxu0
  %v691 = vadd.f32 %v546, %v690
  %v692 = vpop.f32.mrb[0].mxu0
  %693 = vmatprep.mubr.f32.mxu0 %v146
  %694 = vmatmul.mubr.f32.gmra.mrb[0].mxu0 %v145
  %v695 = vpop.f32.mrb[0].mxu0
  %v696 = vadd.f32 %v551, %v695
  %v697 = vpop.f32.mrb[0].mxu0
  %698 = vmatprep.mubr.f32.mxu0 %v153
  %699 = vmatmul.mubr.f32.gmra.mrb[0].mxu0 %v152
  %v700 = vpop.f32.mrb[0].mxu0
  %v701 = vadd.f32 %v556, %v700
  %v702 = vpop.f32.mrb[0].mxu0
  %703 = vmatprep.mubr.f32.mxu0 %v160
  %704 = vmatmul.mubr.f32.gmra.mrb[0].mxu0 %v159
  %v705 = vpop.f32.mrb[0].mxu0
  %v706 = vadd.f32 %v561, %v705
  %v707 = vpop.f32.mrb[0].mxu0
  %708 = vdwg.mxu0
  %709 = vmatprep.subr.mxu0 0.0
  %710 = vmatpush1.msra.mxu0 %v258
  %711 = vmatprep.subr.mxu0 0.0
  %712 = vmatpush1.msra.mxu0 %v259
  %713 = vmatprep.subr.mxu0 0.0
  %714 = vmatpush1.msra.mxu0 %v260
  %715 = vmatprep.subr.mxu0 0.0
  %716 = vmatpush1.msra.mxu0 %v261
  %717 = vmatprep.subr.mxu0 0.0
  %718 = vmatpush1.msra.mxu0 %v262
  %719 = vmatprep.subr.mxu0 0.0
  %720 = vmatpush1.msra.mxu0 %v263
  %721 = vmatprep.subr.mxu0 0.0
  %722 = vmatpush1.msra.mxu0 %v264
  %723 = vmatprep.subr.mxu0 0.0
  %724 = vmatpush1.msra.mxu0 %v265
  %725 = vmatprep.subr.mxu0 0.0
  %726 = vmatpush1.msra.mxu0 %v266
  %727 = vmatprep.subr.mxu0 0.0
  %728 = vmatpush1.msra.mxu0 %v267
  %729 = vmatprep.subr.mxu0 0.0
  %730 = vmatpush1.msra.mxu0 %v268
  %731 = vmatprep.subr.mxu0 0.0
  %732 = vmatpush1.msra.mxu0 %v269
  %733 = vmatprep.subr.mxu0 0.0
  %734 = vmatpush1.msra.mxu0 %v270
  %735 = vmatprep.subr.mxu0 0.0
  %736 = vmatpush1.msra.mxu0 %v271
  %737 = vmatprep.subr.mxu0 0.0
  %738 = vmatpush1.msra.mxu0 %v272
  %739 = vmatprep.subr.mxu0 0.0
  %740 = vmatpush1.msra.mxu0 %v273
  %741 = vmatprep.subr.mxu0 0.0
  %742 = vmatpush1.msra.mxu0 0.0
  %743 = vmatprep.subr.mxu0 0.0
  %744 = vmatpush1.msra.mxu0 0.0
  %745 = vmatprep.subr.mxu0 0.0
  %746 = vmatpush1.msra.mxu0 0.0
  %747 = vmatprep.subr.mxu0 0.0
  %748 = vmatpush1.msra.mxu0 0.0
  %749 = vmatprep.subr.mxu0 0.0
  %750 = vmatpush1.msra.mxu0 0.0
  %751 = vmatprep.subr.mxu0 0.0
  %752 = vmatpush1.msra.mxu0 0.0
  %753 = vmatprep.subr.mxu0 0.0
  %754 = vmatpush1.msra.mxu0 0.0
  %755 = vmatprep.subr.mxu0 0.0
  %756 = vmatpush1.msra.mxu0 0.0
  %757 = vmatprep.subr.mxu0 0.0
  %758 = vmatpush1.msra.mxu0 0.0
  %759 = vmatprep.subr.mxu0 0.0
  %760 = vmatpush1.msra.mxu0 0.0
  %761 = vmatprep.subr.mxu0 0.0
  %762 = vmatpush1.msra.mxu0 0.0
  %763 = vmatprep.subr.mxu0 0.0
  %764 = vmatpush1.msra.mxu0 0.0
  %765 = vmatprep.subr.mxu0 0.0
  %766 = vmatpush1.msra.mxu0 0.0
  %767 = vmatprep.subr.mxu0 0.0
  %768 = vmatpush1.msra.mxu0 0.0
  %769 = vmatprep.subr.mxu0 0.0
  %770 = vmatpush1.msra.mxu0 0.0
  %771 = vmatprep.subr.mxu0 0.0
  %772 = vmatpush1.msra.mxu0 0.0
  %773 = vmatprep.mubr.f32.mxu0 0.0
  %774 = vmatmul.mubr.f32.gmra.mrb[0].mxu0 %v56
  %v775 = vpop.f32.mrb[0].mxu0
  %v776 = vadd.f32 %v631, %v775
  %v777 = vpop.f32.mrb[0].mxu0
  %778 = vmatprep.mubr.f32.mxu0 0.0
  %779 = vmatmul.mubr.f32.gmra.mrb[0].mxu0 %v63
  %v780 = vpop.f32.mrb[0].mxu0
  %v781 = vadd.f32 %v636, %v780
  %v782 = vpop.f32.mrb[0].mxu0
  %783 = vmatprep.mubr.f32.mxu0 0.0
  %784 = vmatmul.mubr.f32.gmra.mrb[0].mxu0 %v70
  %v785 = vpop.f32.mrb[0].mxu0
  %v786 = vadd.f32 %v641, %v785
  %v787 = vpop.f32.mrb[0].mxu0
  %788 = vmatprep.mubr.f32.mxu0 0.0
  %789 = vmatmul.mubr.f32.gmra.mrb[0].mxu0 %v77
  %v790 = vpop.f32.mrb[0].mxu0
  %v791 = vadd.f32 %v646, %v790
  %v792 = vpop.f32.mrb[0].mxu0
  %793 = vmatprep.mubr.f32.mxu0 0.0
  %794 = vmatmul.mubr.f32.gmra.mrb[0].mxu0 %v84
  %v795 = vpop.f32.mrb[0].mxu0
  %v796 = vadd.f32 %v651, %v795
  %v797 = vpop.f32.mrb[0].mxu0
  %798 = vmatprep.mubr.f32.mxu0 0.0
  %799 = vmatmul.mubr.f32.gmra.mrb[0].mxu0 %v91
  %v800 = vpop.f32.mrb[0].mxu0
  %v801 = vadd.f32 %v656, %v800
  %v802 = vpop.f32.mrb[0].mxu0
  %803 = vmatprep.mubr.f32.mxu0 0.0
  %804 = vmatmul.mubr.f32.gmra.mrb[0].mxu0 %v98
  %v805 = vpop.f32.mrb[0].mxu0
  %v806 = vadd.f32 %v661, %v805
  %v807 = vpop.f32.mrb[0].mxu0
  %808 = vmatprep.mubr.f32.mxu0 0.0
  %809 = vmatmul.mubr.f32.gmra.mrb[0].mxu0 %v105
  %v810 = vpop.f32.mrb[0].mxu0
  %v811 = vadd.f32 %v666, %v810
  %v812 = vpop.f32.mrb[0].mxu0
  %813 = vmatprep.mubr.f32.mxu0 0.0
  %814 = vmatmul.mubr.f32.gmra.mrb[0].mxu0 %v112
  %v815 = vpop.f32.mrb[0].mxu0
  %v816 = vadd.f32 %v671, %v815
  %v817 = vpop.f32.mrb[0].mxu0
  %818 = vmatprep.mubr.f32.mxu0 0.0
  %819 = vmatmul.mubr.f32.gmra.mrb[0].mxu0 %v119
  %v820 = vpop.f32.mrb[0].mxu0
  %v821 = vadd.f32 %v676, %v820
  %v822 = vpop.f32.mrb[0].mxu0
  %823 = vmatprep.mubr.f32.mxu0 0.0
  %824 = vmatmul.mubr.f32.gmra.mrb[0].mxu0 %v126
  %v825 = vpop.f32.mrb[0].mxu0
  %v826 = vadd.f32 %v681, %v825
  %v827 = vpop.f32.mrb[0].mxu0
  %828 = vmatprep.mubr.f32.mxu0 0.0
  %829 = vmatmul.mubr.f32.gmra.mrb[0].mxu0 %v133
  %v830 = vpop.f32.mrb[0].mxu0
  %v831 = vadd.f32 %v686, %v830
  %v832 = vpop.f32.mrb[0].mxu0
  %833 = vmatprep.mubr.f32.mxu0 0.0
  %834 = vmatmul.mubr.f32.gmra.mrb[0].mxu0 %v140
  %v835 = vpop.f32.mrb[0].mxu0
  %v836 = vadd.f32 %v691, %v835
  %v837 = vpop.f32.mrb[0].mxu0
  %838 = vmatprep.mubr.f32.mxu0 0.0
  %839 = vmatmul.mubr.f32.gmra.mrb[0].mxu0 %v147
  %v840 = vpop.f32.mrb[0].mxu0
  %v841 = vadd.f32 %v696, %v840
  %v842 = vpop.f32.mrb[0].mxu0
  %843 = vmatprep.mubr.f32.mxu0 0.0
  %844 = vmatmul.mubr.f32.gmra.mrb[0].mxu0 %v154
  %v845 = vpop.f32.mrb[0].mxu0
  %v846 = vadd.f32 %v701, %v845
  %v847 = vpop.f32.mrb[0].mxu0
  %848 = vmatprep.mubr.f32.mxu0 0.0
  %849 = vmatmul.mubr.f32.gmra.mrb[0].mxu0 %v161
  %v850 = vpop.f32.mrb[0].mxu0
  %v851 = vadd.f32 %v706, %v850
  %v852 = vpop.f32.mrb[0].mxu0
  %853 = vdwg.mxu0
  %v854 = vadd.f32 %v34, %v776
  %v855 = vadd.f32 %v35, %v781
  %v856 = vadd.f32 %v36, %v786
  %v857 = vadd.f32 %v37, %v791
  %v858 = vadd.f32 %v38, %v796
  %v859 = vadd.f32 %v39, %v801
  %v860 = vadd.f32 %v40, %v806
  %v861 = vadd.f32 %v41, %v811
  %v862 = vadd.f32 %v42, %v816
  %v863 = vadd.f32 %v43, %v821
  %v864 = vadd.f32 %v44, %v826
  %v865 = vadd.f32 %v45, %v831
  %v866 = vadd.f32 %v46, %v836
  %v867 = vadd.f32 %v47, %v841
  %v868 = vadd.f32 %v48, %v846
  %v869 = vadd.f32 %v49, %v851
  %870 = vst [vmem:[#allocation2] sm:$0xff] %v854
  %871 = vst [vmem:[#allocation2 + $0x8] sm:$0xff] %v855
  %872 = vst [vmem:[#allocation2 + $0x10] sm:$0xff] %v856
  %873 = vst [vmem:[#allocation2 + $0x18] sm:$0xff] %v857
  %874 = vst [vmem:[#allocation2 + $0x20] sm:$0xff] %v858
  %875 = vst [vmem:[#allocation2 + $0x28] sm:$0xff] %v859
  %876 = vst [vmem:[#allocation2 + $0x30] sm:$0xff] %v860
  %877 = vst [vmem:[#allocation2 + $0x38] sm:$0xff] %v861
  %878 = vst [vmem:[#allocation2 + $0x40] sm:$0xff] %v862
  %879 = vst [vmem:[#allocation2 + $0x48] sm:$0xff] %v863
  %880 = vst [vmem:[#allocation2 + $0x50] sm:$0xff] %v864
  %881 = vst [vmem:[#allocation2 + $0x58] sm:$0xff] %v865
  %882 = vst [vmem:[#allocation2 + $0x60] sm:$0xff] %v866
  %883 = vst [vmem:[#allocation2 + $0x68] sm:$0xff] %v867
  %884 = vst [vmem:[#allocation2 + $0x70] sm:$0xff] %v868
  %885 = vst [vmem:[#allocation2 + $0x78] sm:$0xff] %v869
  // Predicated region
  $region18: #{simple_cnn_forward.9} parent=0 // pred_check
    %p886 = pneg %p14
  $region19: #{simple_cnn_forward.9} parent=0 // pred_check_branch
    %888 = sbr.rel (%p886) target = $region21
  $region20: #{simple_cnn_forward.9} parent=0 // pred_region
    %v889 = vld [vmem:[#allocation2] sm:$0xff]
    %v890 = vld [vmem:[#allocation2 + $0x8] sm:$0xff]
    %v891 = vld [vmem:[#allocation2 + $0x10] sm:$0xff]
    %v892 = vld [vmem:[#allocation2 + $0x18] sm:$0xff]
    %v893 = vld [vmem:[#allocation2 + $0x20] sm:$0xff]
    %v894 = vld [vmem:[#allocation2 + $0x28] sm:$0xff]
    %v895 = vld [vmem:[#allocation2 + $0x30] sm:$0xff]
    %v896 = vld [vmem:[#allocation2 + $0x38] sm:$0xff]
    %v897 = vld [vmem:[#allocation2 + $0x40] sm:$0xff]
    %v898 = vld [vmem:[#allocation2 + $0x48] sm:$0xff]
    %v899 = vld [vmem:[#allocation2 + $0x50] sm:$0xff]
    %v900 = vld [vmem:[#allocation2 + $0x58] sm:$0xff]
    %v901 = vld [vmem:[#allocation2 + $0x60] sm:$0xff]
    %v902 = vld [vmem:[#allocation2 + $0x68] sm:$0xff]
    %v903 = vld [vmem:[#allocation2 + $0x70] sm:$0xff]
    %v904 = vld [vmem:[#allocation2 + $0x78] sm:$0xff]
    %v905 = vld [vmem:[%s2] sm:$0x1]
    %v907 = vlaneseq
    %v908 = vshrl.u32 %v907, 7
    %v909 = vsub.s32 0, %v908
    %v910 = vrot.slane %v905, %v909
    %v912 = vadd.f32 %v889, %v910
    %v913 = vadd.f32 %v890, %v910
    %v914 = vadd.f32 %v891, %v910
    %v915 = vadd.f32 %v892, %v910
    %v916 = vadd.f32 %v893, %v910
    %v917 = vadd.f32 %v894, %v910
    %v918 = vadd.f32 %v895, %v910
    %v919 = vadd.f32 %v896, %v910
    %v920 = vadd.f32 %v897, %v910
    %v921 = vadd.f32 %v898, %v910
    %v922 = vadd.f32 %v899, %v910
    %v923 = vadd.f32 %v900, %v910
    %v924 = vadd.f32 %v901, %v910
    %v925 = vadd.f32 %v902, %v910
    %v926 = vadd.f32 %v903, %v910
    %v927 = vadd.f32 %v904, %v910
    %v928 = vmax.f32 %v912, 0.0
    %v929 = vmax.f32 %v913, 0.0
    %v930 = vmax.f32 %v914, 0.0
    %v931 = vmax.f32 %v915, 0.0
    %v932 = vmax.f32 %v916, 0.0
    %v933 = vmax.f32 %v917, 0.0
    %v934 = vmax.f32 %v918, 0.0
    %v935 = vmax.f32 %v919, 0.0
    %v936 = vmax.f32 %v920, 0.0
    %v937 = vmax.f32 %v921, 0.0
    %v938 = vmax.f32 %v922, 0.0
    %v939 = vmax.f32 %v923, 0.0
    %v940 = vmax.f32 %v924, 0.0
    %v941 = vmax.f32 %v925, 0.0
    %v942 = vmax.f32 %v926, 0.0
    %v943 = vmax.f32 %v927, 0.0
    %944 = vst [vmem:[%s3] sm:$0xff] %v928
    %945 = vst [vmem:[%s3 + $0x8] sm:$0xff] %v929
    %946 = vst [vmem:[%s3 + $0x10] sm:$0xff] %v930
    %947 = vst [vmem:[%s3 + $0x18] sm:$0xff] %v931
    %948 = vst [vmem:[%s3 + $0x20] sm:$0xff] %v932
    %949 = vst [vmem:[%s3 + $0x28] sm:$0xff] %v933
    %950 = vst [vmem:[%s3 + $0x30] sm:$0xff] %v934
    %951 = vst [vmem:[%s3 + $0x38] sm:$0xff] %v935
    %952 = vst [vmem:[%s3 + $0x40] sm:$0xff] %v936
    %953 = vst [vmem:[%s3 + $0x48] sm:$0xff] %v937
    %954 = vst [vmem:[%s3 + $0x50] sm:$0xff] %v938
    %955 = vst [vmem:[%s3 + $0x58] sm:$0xff] %v939
    %956 = vst [vmem:[%s3 + $0x60] sm:$0xff] %v940
    %957 = vst [vmem:[%s3 + $0x68] sm:$0xff] %v941
    %958 = vst [vmem:[%s3 + $0x70] sm:$0xff] %v942
    %959 = vst [vmem:[%s3 + $0x78] sm:$0xff] %v943
  $region21: #{simple_cnn_forward.9} parent=0 // pred_fallthru
    _
  // Predicated region
  $region22: #{simple_cnn_forward.9} parent=0 // pred_check
    _
  $region23: #{simple_cnn_forward.9} parent=0 // pred_check_branch
    %961 = sbr.rel (0) target = $region25
  $region24: #{simple_cnn_forward.9} parent=0 // pred_region
    _
  $region25: #{simple_cnn_forward.9} parent=0 // pred_fallthru
    _
  // Predicated region
  $region26: #{simple_cnn_forward.9} parent=0 // pred_check
    _
  $region27: #{simple_cnn_forward.9} parent=0 // pred_check_branch
    %963 = sbr.rel (0) target = $region29
  $region28: #{simple_cnn_forward.9} parent=0 // pred_region
    _
  $region29: #{simple_cnn_forward.9} parent=0 // pred_fallthru
    _

// kernel: simple_cnn_forward.10
$region0: #{simple_cnn_forward.10}
  #allocation0 [shape = 'u32[]', space=smem, size = 0x4, offset = 0x4, fixed_abs, tag = 'smem constant byte address 0x4 - core index']
  #allocation1 [shape = 'u32[144,128]{1,0:T(1,128)}', space=vmem, size = 0x12000, scoped, tag = 'internal scratch']
  %s0 = inlined_call_operand.vmem [shape: f32[8,128], index: 0, kind: input, shape index: {}]
  %s1 = inlined_call_operand.vmem [shape: f32[8,128], index: 1, kind: input, shape index: {}]
  %s2 = inlined_call_operand.vmem [shape: f32[8,128], index: 2, kind: input, shape index: {}]
  %s3 = inlined_call_operand.vmem [shape: f32[8,128], index: 3, kind: input, shape index: {}]
  %s4 = inlined_call_operand.vmem [shape: f32[8,128], index: 4, kind: output, shape index: {}]
  %s5 = sld [smem:[#allocation0]]
  $region26: #{simple_cnn_forward.10} parent=0
    _
  %s7 = ssub.s32 1, %s5
  %s8 = scalar_select 0, %s7, %s5
  // Predicated region
  $region2: #{simple_cnn_forward.10} parent=0 // pred_check
    _
  $region3: #{simple_cnn_forward.10} parent=0 // pred_check_branch
    %10 = sbr.rel (0) target = $region5
  $region4: #{simple_cnn_forward.10} parent=0 // pred_region
    _
  $region5: #{simple_cnn_forward.10} parent=0 // pred_fallthru
    _
  // Predicated region
  $region6: #{simple_cnn_forward.10} parent=0 // pred_check
    _
  $region7: #{simple_cnn_forward.10} parent=0 // pred_check_branch
    %12 = sbr.rel (0) target = $region9
  $region8: #{simple_cnn_forward.10} parent=0 // pred_region
    _
  $region9: #{simple_cnn_forward.10} parent=0 // pred_fallthru
    _
  // Predicated region
  $region10: #{simple_cnn_forward.10} parent=0 // pred_check
    _
  $region11: #{simple_cnn_forward.10} parent=0 // pred_check_branch
    %14 = sbr.rel (0) target = $region13
  $region12: #{simple_cnn_forward.10} parent=0 // pred_region
    _
  $region13: #{simple_cnn_forward.10} parent=0 // pred_fallthru
    _
  // Predicated region
  $region14: #{simple_cnn_forward.10} parent=0 // pred_check
    _
  $region15: #{simple_cnn_forward.10} parent=0 // pred_check_branch
    %16 = sbr.rel (0) target = $region17
  $region16: #{simple_cnn_forward.10} parent=0 // pred_region
    _
  $region17: #{simple_cnn_forward.10} parent=0 // pred_fallthru
    _
  %v17 = vld [vmem:[%s0] sm:$0xff]
  %v18 = vld [vmem:[%s1] sm:$0xff]
  %v19 = vmax.f32 %v17, %v18
  %v20 = vld [vmem:[%s2] sm:$0xff]
  %v21 = vld [vmem:[%s3] sm:$0xff]
  %v22 = vmax.f32 %v20, %v21
  %v23 = vmax.f32 %v19, %v22
  %24 = vst [vmem:[%s4] sm:$0xff] %v23
  // Predicated region
  $region18: #{simple_cnn_forward.10} parent=0 // pred_check
    _
  $region19: #{simple_cnn_forward.10} parent=0 // pred_check_branch
    %26 = sbr.rel (0) target = $region21
  $region20: #{simple_cnn_forward.10} parent=0 // pred_region
    _
  $region21: #{simple_cnn_forward.10} parent=0 // pred_fallthru
    _
  // Predicated region
  $region22: #{simple_cnn_forward.10} parent=0 // pred_check
    _
  $region23: #{simple_cnn_forward.10} parent=0 // pred_check_branch
    %28 = sbr.rel (0) target = $region25
  $region24: #{simple_cnn_forward.10} parent=0 // pred_region
    _
  $region25: #{simple_cnn_forward.10} parent=0 // pred_fallthru
    _

// kernel: simple_cnn_forward.11
$region0: #{simple_cnn_forward.11}
  #allocation0 [shape = 'u32[]', space=smem, size = 0x4, offset = 0x4, fixed_abs, tag = 'smem constant byte address 0x4 - core index']
  #allocation1 [shape = 'u32[144,128]{1,0:T(1,128)}', space=vmem, size = 0x12000, scoped, tag = 'internal scratch']
  %s0 = inlined_call_operand.vmem [shape: f32[8,512], index: 0, kind: input, shape index: {}]
  %s1 = inlined_call_operand.vmem [shape: f32[512,128], index: 1, kind: input, shape index: {}]
  %s2 = inlined_call_operand.vmem [shape: f32[1,128], index: 2, kind: input, shape index: {}]
  %s3 = inlined_call_operand.vmem [shape: f32[128,128], index: 3, kind: input, shape index: {}]
  %s4 = inlined_call_operand.vmem [shape: f32[1,128], index: 4, kind: input, shape index: {}]
  %s5 = inlined_call_operand.vmem [shape: f32[128,128], index: 5, kind: input, shape index: {}]
  %s6 = inlined_call_operand.vmem [shape: f32[1,128], index: 6, kind: input, shape index: {}]
  %s7 = inlined_call_operand.vmem [shape: f32[8,128], index: 7, kind: output, shape index: {}]
  %s8 = sld [smem:[#allocation0]]
  $region38: #{simple_cnn_forward.11} parent=0
    _
  %s10 = ssub.s32 1, %s8
  %s11 = scalar_select 0, %s10, %s8
  // Predicated region
  $region2: #{simple_cnn_forward.11} parent=0 // pred_check
    _
  $region3: #{simple_cnn_forward.11} parent=0 // pred_check_branch
    %13 = sbr.rel (0) target = $region5
  $region4: #{simple_cnn_forward.11} parent=0 // pred_region
    _
  $region5: #{simple_cnn_forward.11} parent=0 // pred_fallthru
    _
  // Predicated region
  $region6: #{simple_cnn_forward.11} parent=0 // pred_check
    _
  $region7: #{simple_cnn_forward.11} parent=0 // pred_check_branch
    %15 = sbr.rel (0) target = $region9
  $region8: #{simple_cnn_forward.11} parent=0 // pred_region
    _
  $region9: #{simple_cnn_forward.11} parent=0 // pred_fallthru
    _
  // Predicated region
  $region10: #{simple_cnn_forward.11} parent=0 // pred_check
    _
  $region11: #{simple_cnn_forward.11} parent=0 // pred_check_branch
    %17 = sbr.rel (0) target = $region13
  $region12: #{simple_cnn_forward.11} parent=0 // pred_region
    _
  $region13: #{simple_cnn_forward.11} parent=0 // pred_fallthru
    _
  // Predicated region
  $region14: #{simple_cnn_forward.11} parent=0 // pred_check
    _
  $region15: #{simple_cnn_forward.11} parent=0 // pred_check_branch
    %19 = sbr.rel (0) target = $region17
  $region16: #{simple_cnn_forward.11} parent=0 // pred_region
    _
  $region17: #{simple_cnn_forward.11} parent=0 // pred_fallthru
    _
  // Predicated region
  $region18: #{simple_cnn_forward.11} parent=0 // pred_check
    _
  $region19: #{simple_cnn_forward.11} parent=0 // pred_check_branch
    %21 = sbr.rel (0) target = $region21
  $region20: #{simple_cnn_forward.11} parent=0 // pred_region
    _
  $region21: #{simple_cnn_forward.11} parent=0 // pred_fallthru
    _
  // Predicated region
  $region22: #{simple_cnn_forward.11} parent=0 // pred_check
    _
  $region23: #{simple_cnn_forward.11} parent=0 // pred_check_branch
    %23 = sbr.rel (0) target = $region25
  $region24: #{simple_cnn_forward.11} parent=0 // pred_region
    _
  $region25: #{simple_cnn_forward.11} parent=0 // pred_fallthru
    _
  // Predicated region
  $region26: #{simple_cnn_forward.11} parent=0 // pred_check
    _
  $region27: #{simple_cnn_forward.11} parent=0 // pred_check_branch
    %25 = sbr.rel (0) target = $region29
  $region28: #{simple_cnn_forward.11} parent=0 // pred_region
    _
  $region29: #{simple_cnn_forward.11} parent=0 // pred_fallthru
    _
  %v26 = vld [vmem:[%s0] sm:$0xff]
  %v27 = vld [vmem:[%s0 + $0x8] sm:$0xff]
  %v28 = vld [vmem:[%s0 + $0x10] sm:$0xff]
  %v29 = vld [vmem:[%s0 + $0x18] sm:$0xff]
  %v30 = vld [vmem:[%s1] sm:$0xff]
  %v31 = vld [vmem:[%s1 + $0x8] sm:$0xff]
  %v32 = vld [vmem:[%s1 + $0x10] sm:$0xff]
  %v33 = vld [vmem:[%s1 + $0x18] sm:$0xff]
  %v34 = vld [vmem:[%s1 + $0x20] sm:$0xff]
  %v35 = vld [vmem:[%s1 + $0x28] sm:$0xff]
  %v36 = vld [vmem:[%s1 + $0x30] sm:$0xff]
  %v37 = vld [vmem:[%s1 + $0x38] sm:$0xff]
  %v38 = vld [vmem:[%s1 + $0x40] sm:$0xff]
  %v39 = vld [vmem:[%s1 + $0x48] sm:$0xff]
  %v40 = vld [vmem:[%s1 + $0x50] sm:$0xff]
  %v41 = vld [vmem:[%s1 + $0x58] sm:$0xff]
  %v42 = vld [vmem:[%s1 + $0x60] sm:$0xff]
  %v43 = vld [vmem:[%s1 + $0x68] sm:$0xff]
  %v44 = vld [vmem:[%s1 + $0x70] sm:$0xff]
  %v45 = vld [vmem:[%s1 + $0x78] sm:$0xff]
  %v46 = vld [vmem:[%s1 + $0x80] sm:$0xff]
  %v47 = vld [vmem:[%s1 + $0x88] sm:$0xff]
  %v48 = vld [vmem:[%s1 + $0x90] sm:$0xff]
  %v49 = vld [vmem:[%s1 + $0x98] sm:$0xff]
  %v50 = vld [vmem:[%s1 + $0xa0] sm:$0xff]
  %v51 = vld [vmem:[%s1 + $0xa8] sm:$0xff]
  %v52 = vld [vmem:[%s1 + $0xb0] sm:$0xff]
  %v53 = vld [vmem:[%s1 + $0xb8] sm:$0xff]
  %v54 = vld [vmem:[%s1 + $0xc0] sm:$0xff]
  %v55 = vld [vmem:[%s1 + $0xc8] sm:$0xff]
  %v56 = vld [vmem:[%s1 + $0xd0] sm:$0xff]
  %v57 = vld [vmem:[%s1 + $0xd8] sm:$0xff]
  %v58 = vld [vmem:[%s1 + $0xe0] sm:$0xff]
  %v59 = vld [vmem:[%s1 + $0xe8] sm:$0xff]
  %v60 = vld [vmem:[%s1 + $0xf0] sm:$0xff]
  %v61 = vld [vmem:[%s1 + $0xf8] sm:$0xff]
  %v62 = vld [vmem:[%s1 + $0x100] sm:$0xff]
  %v63 = vld [vmem:[%s1 + $0x108] sm:$0xff]
  %v64 = vld [vmem:[%s1 + $0x110] sm:$0xff]
  %v65 = vld [vmem:[%s1 + $0x118] sm:$0xff]
  %v66 = vld [vmem:[%s1 + $0x120] sm:$0xff]
  %v67 = vld [vmem:[%s1 + $0x128] sm:$0xff]
  %v68 = vld [vmem:[%s1 + $0x130] sm:$0xff]
  %v69 = vld [vmem:[%s1 + $0x138] sm:$0xff]
  %v70 = vld [vmem:[%s1 + $0x140] sm:$0xff]
  %v71 = vld [vmem:[%s1 + $0x148] sm:$0xff]
  %v72 = vld [vmem:[%s1 + $0x150] sm:$0xff]
  %v73 = vld [vmem:[%s1 + $0x158] sm:$0xff]
  %v74 = vld [vmem:[%s1 + $0x160] sm:$0xff]
  %v75 = vld [vmem:[%s1 + $0x168] sm:$0xff]
  %v76 = vld [vmem:[%s1 + $0x170] sm:$0xff]
  %v77 = vld [vmem:[%s1 + $0x178] sm:$0xff]
  %v78 = vld [vmem:[%s1 + $0x180] sm:$0xff]
  %v79 = vld [vmem:[%s1 + $0x188] sm:$0xff]
  %v80 = vld [vmem:[%s1 + $0x190] sm:$0xff]
  %v81 = vld [vmem:[%s1 + $0x198] sm:$0xff]
  %v82 = vld [vmem:[%s1 + $0x1a0] sm:$0xff]
  %v83 = vld [vmem:[%s1 + $0x1a8] sm:$0xff]
  %v84 = vld [vmem:[%s1 + $0x1b0] sm:$0xff]
  %v85 = vld [vmem:[%s1 + $0x1b8] sm:$0xff]
  %v86 = vld [vmem:[%s1 + $0x1c0] sm:$0xff]
  %v87 = vld [vmem:[%s1 + $0x1c8] sm:$0xff]
  %v88 = vld [vmem:[%s1 + $0x1d0] sm:$0xff]
  %v89 = vld [vmem:[%s1 + $0x1d8] sm:$0xff]
  %v90 = vld [vmem:[%s1 + $0x1e0] sm:$0xff]
  %v91 = vld [vmem:[%s1 + $0x1e8] sm:$0xff]
  %v92 = vld [vmem:[%s1 + $0x1f0] sm:$0xff]
  %v93 = vld [vmem:[%s1 + $0x1f8] sm:$0xff]
  %v94 = vld [vmem:[%s2] sm:$0x1]
  %v96 = vlaneseq
  %v97 = vshrl.u32 %v96, 7
  %v98 = vsub.s32 0, %v97
  %v99 = vrot.slane %v94, %v98
  %101 = vmatprep.subr.mxu0 0.0
  %102 = vmatpush1.msra.mxu0 %v30
  %103 = vmatprep.subr.mxu0 0.0
  %104 = vmatpush1.msra.mxu0 %v31
  %105 = vmatprep.subr.mxu0 0.0
  %106 = vmatpush1.msra.mxu0 %v32
  %107 = vmatprep.subr.mxu0 0.0
  %108 = vmatpush1.msra.mxu0 %v33
  %109 = vmatprep.subr.mxu0 0.0
  %110 = vmatpush1.msra.mxu0 %v34
  %111 = vmatprep.subr.mxu0 0.0
  %112 = vmatpush1.msra.mxu0 %v35
  %113 = vmatprep.subr.mxu0 0.0
  %114 = vmatpush1.msra.mxu0 %v36
  %115 = vmatprep.subr.mxu0 0.0
  %116 = vmatpush1.msra.mxu0 %v37
  %117 = vmatprep.subr.mxu0 0.0
  %118 = vmatpush1.msra.mxu0 %v38
  %119 = vmatprep.subr.mxu0 0.0
  %120 = vmatpush1.msra.mxu0 %v39
  %121 = vmatprep.subr.mxu0 0.0
  %122 = vmatpush1.msra.mxu0 %v40
  %123 = vmatprep.subr.mxu0 0.0
  %124 = vmatpush1.msra.mxu0 %v41
  %125 = vmatprep.subr.mxu0 0.0
  %126 = vmatpush1.msra.mxu0 %v42
  %127 = vmatprep.subr.mxu0 0.0
  %128 = vmatpush1.msra.mxu0 %v43
  %129 = vmatprep.subr.mxu0 0.0
  %130 = vmatpush1.msra.mxu0 %v44
  %131 = vmatprep.subr.mxu0 0.0
  %132 = vmatpush1.msra.mxu0 %v45
  %133 = vmatprep.subr.mxu0 0.0
  %134 = vmatpush1.msra.mxu0 %v46
  %135 = vmatprep.subr.mxu0 0.0
  %136 = vmatpush1.msra.mxu0 %v47
  %137 = vmatprep.subr.mxu0 0.0
  %138 = vmatpush1.msra.mxu0 %v48
  %139 = vmatprep.subr.mxu0 0.0
  %140 = vmatpush1.msra.mxu0 %v49
  %141 = vmatprep.subr.mxu0 0.0
  %142 = vmatpush1.msra.mxu0 %v50
  %143 = vmatprep.subr.mxu0 0.0
  %144 = vmatpush1.msra.mxu0 %v51
  %145 = vmatprep.subr.mxu0 0.0
  %146 = vmatpush1.msra.mxu0 %v52
  %147 = vmatprep.subr.mxu0 0.0
  %148 = vmatpush1.msra.mxu0 %v53
  %149 = vmatprep.subr.mxu0 0.0
  %150 = vmatpush1.msra.mxu0 %v54
  %151 = vmatprep.subr.mxu0 0.0
  %152 = vmatpush1.msra.mxu0 %v55
  %153 = vmatprep.subr.mxu0 0.0
  %154 = vmatpush1.msra.mxu0 %v56
  %155 = vmatprep.subr.mxu0 0.0
  %156 = vmatpush1.msra.mxu0 %v57
  %157 = vmatprep.subr.mxu0 0.0
  %158 = vmatpush1.msra.mxu0 %v58
  %159 = vmatprep.subr.mxu0 0.0
  %160 = vmatpush1.msra.mxu0 %v59
  %161 = vmatprep.subr.mxu0 0.0
  %162 = vmatpush1.msra.mxu0 %v60
  %163 = vmatprep.subr.mxu0 0.0
  %164 = vmatpush1.msra.mxu0 %v61
  %165 = vmatprep.mubr.f32.mxu0 %v27
  %166 = vmatmul.mubr.f32.gmra.mrb[0].mxu0 %v26
  %v167 = vpop.f32.mrb[0].mxu0
  %v168 = vadd.f32 %v99, %v167
  %v169 = vpop.f32.mrb[0].mxu0
  %170 = vdwg.mxu0
  %171 = vmatprep.subr.mxu0 0.0
  %172 = vmatpush1.msra.mxu0 %v62
  %173 = vmatprep.subr.mxu0 0.0
  %174 = vmatpush1.msra.mxu0 %v63
  %175 = vmatprep.subr.mxu0 0.0
  %176 = vmatpush1.msra.mxu0 %v64
  %177 = vmatprep.subr.mxu0 0.0
  %178 = vmatpush1.msra.mxu0 %v65
  %179 = vmatprep.subr.mxu0 0.0
  %180 = vmatpush1.msra.mxu0 %v66
  %181 = vmatprep.subr.mxu0 0.0
  %182 = vmatpush1.msra.mxu0 %v67
  %183 = vmatprep.subr.mxu0 0.0
  %184 = vmatpush1.msra.mxu0 %v68
  %185 = vmatprep.subr.mxu0 0.0
  %186 = vmatpush1.msra.mxu0 %v69
  %187 = vmatprep.subr.mxu0 0.0
  %188 = vmatpush1.msra.mxu0 %v70
  %189 = vmatprep.subr.mxu0 0.0
  %190 = vmatpush1.msra.mxu0 %v71
  %191 = vmatprep.subr.mxu0 0.0
  %192 = vmatpush1.msra.mxu0 %v72
  %193 = vmatprep.subr.mxu0 0.0
  %194 = vmatpush1.msra.mxu0 %v73
  %195 = vmatprep.subr.mxu0 0.0
  %196 = vmatpush1.msra.mxu0 %v74
  %197 = vmatprep.subr.mxu0 0.0
  %198 = vmatpush1.msra.mxu0 %v75
  %199 = vmatprep.subr.mxu0 0.0
  %200 = vmatpush1.msra.mxu0 %v76
  %201 = vmatprep.subr.mxu0 0.0
  %202 = vmatpush1.msra.mxu0 %v77
  %203 = vmatprep.subr.mxu0 0.0
  %204 = vmatpush1.msra.mxu0 %v78
  %205 = vmatprep.subr.mxu0 0.0
  %206 = vmatpush1.msra.mxu0 %v79
  %207 = vmatprep.subr.mxu0 0.0
  %208 = vmatpush1.msra.mxu0 %v80
  %209 = vmatprep.subr.mxu0 0.0
  %210 = vmatpush1.msra.mxu0 %v81
  %211 = vmatprep.subr.mxu0 0.0
  %212 = vmatpush1.msra.mxu0 %v82
  %213 = vmatprep.subr.mxu0 0.0
  %214 = vmatpush1.msra.mxu0 %v83
  %215 = vmatprep.subr.mxu0 0.0
  %216 = vmatpush1.msra.mxu0 %v84
  %217 = vmatprep.subr.mxu0 0.0
  %218 = vmatpush1.msra.mxu0 %v85
  %219 = vmatprep.subr.mxu0 0.0
  %220 = vmatpush1.msra.mxu0 %v86
  %221 = vmatprep.subr.mxu0 0.0
  %222 = vmatpush1.msra.mxu0 %v87
  %223 = vmatprep.subr.mxu0 0.0
  %224 = vmatpush1.msra.mxu0 %v88
  %225 = vmatprep.subr.mxu0 0.0
  %226 = vmatpush1.msra.mxu0 %v89
  %227 = vmatprep.subr.mxu0 0.0
  %228 = vmatpush1.msra.mxu0 %v90
  %229 = vmatprep.subr.mxu0 0.0
  %230 = vmatpush1.msra.mxu0 %v91
  %231 = vmatprep.subr.mxu0 0.0
  %232 = vmatpush1.msra.mxu0 %v92
  %233 = vmatprep.subr.mxu0 0.0
  %234 = vmatpush1.msra.mxu0 %v93
  %235 = vmatprep.mubr.f32.mxu0 %v29
  %236 = vmatmul.mubr.f32.gmra.mrb[0].mxu0 %v28
  %v237 = vpop.f32.mrb[0].mxu0
  %v238 = vadd.f32 %v168, %v237
  %v239 = vpop.f32.mrb[0].mxu0
  %240 = vdwg.mxu0
  %v241 = vmax.f32 %v238, 0.0
  %v242 = vld [vmem:[%s3] sm:$0xff]
  %v243 = vld [vmem:[%s3 + $0x8] sm:$0xff]
  %v244 = vld [vmem:[%s3 + $0x10] sm:$0xff]
  %v245 = vld [vmem:[%s3 + $0x18] sm:$0xff]
  %v246 = vld [vmem:[%s3 + $0x20] sm:$0xff]
  %v247 = vld [vmem:[%s3 + $0x28] sm:$0xff]
  %v248 = vld [vmem:[%s3 + $0x30] sm:$0xff]
  %v249 = vld [vmem:[%s3 + $0x38] sm:$0xff]
  %v250 = vld [vmem:[%s3 + $0x40] sm:$0xff]
  %v251 = vld [vmem:[%s3 + $0x48] sm:$0xff]
  %v252 = vld [vmem:[%s3 + $0x50] sm:$0xff]
  %v253 = vld [vmem:[%s3 + $0x58] sm:$0xff]
  %v254 = vld [vmem:[%s3 + $0x60] sm:$0xff]
  %v255 = vld [vmem:[%s3 + $0x68] sm:$0xff]
  %v256 = vld [vmem:[%s3 + $0x70] sm:$0xff]
  %v257 = vld [vmem:[%s3 + $0x78] sm:$0xff]
  %v258 = vld [vmem:[%s4] sm:$0x1]
  %v260 = vlaneseq
  %v261 = vshrl.u32 %v260, 7
  %v262 = vsub.s32 0, %v261
  %v263 = vrot.slane %v258, %v262
  %265 = vmatprep.subr.mxu0 0.0
  %266 = vmatpush1.msra.mxu0 %v242
  %267 = vmatprep.subr.mxu0 0.0
  %268 = vmatpush1.msra.mxu0 %v243
  %269 = vmatprep.subr.mxu0 0.0
  %270 = vmatpush1.msra.mxu0 %v244
  %271 = vmatprep.subr.mxu0 0.0
  %272 = vmatpush1.msra.mxu0 %v245
  %273 = vmatprep.subr.mxu0 0.0
  %274 = vmatpush1.msra.mxu0 %v246
  %275 = vmatprep.subr.mxu0 0.0
  %276 = vmatpush1.msra.mxu0 %v247
  %277 = vmatprep.subr.mxu0 0.0
  %278 = vmatpush1.msra.mxu0 %v248
  %279 = vmatprep.subr.mxu0 0.0
  %280 = vmatpush1.msra.mxu0 %v249
  %281 = vmatprep.subr.mxu0 0.0
  %282 = vmatpush1.msra.mxu0 %v250
  %283 = vmatprep.subr.mxu0 0.0
  %284 = vmatpush1.msra.mxu0 %v251
  %285 = vmatprep.subr.mxu0 0.0
  %286 = vmatpush1.msra.mxu0 %v252
  %287 = vmatprep.subr.mxu0 0.0
  %288 = vmatpush1.msra.mxu0 %v253
  %289 = vmatprep.subr.mxu0 0.0
  %290 = vmatpush1.msra.mxu0 %v254
  %291 = vmatprep.subr.mxu0 0.0
  %292 = vmatpush1.msra.mxu0 %v255
  %293 = vmatprep.subr.mxu0 0.0
  %294 = vmatpush1.msra.mxu0 %v256
  %295 = vmatprep.subr.mxu0 0.0
  %296 = vmatpush1.msra.mxu0 %v257
  %297 = vmatprep.subr.mxu0 0.0
  %298 = vmatpush1.msra.mxu0 0.0
  %299 = vmatprep.subr.mxu0 0.0
  %300 = vmatpush1.msra.mxu0 0.0
  %301 = vmatprep.subr.mxu0 0.0
  %302 = vmatpush1.msra.mxu0 0.0
  %303 = vmatprep.subr.mxu0 0.0
  %304 = vmatpush1.msra.mxu0 0.0
  %305 = vmatprep.subr.mxu0 0.0
  %306 = vmatpush1.msra.mxu0 0.0
  %307 = vmatprep.subr.mxu0 0.0
  %308 = vmatpush1.msra.mxu0 0.0
  %309 = vmatprep.subr.mxu0 0.0
  %310 = vmatpush1.msra.mxu0 0.0
  %311 = vmatprep.subr.mxu0 0.0
  %312 = vmatpush1.msra.mxu0 0.0
  %313 = vmatprep.subr.mxu0 0.0
  %314 = vmatpush1.msra.mxu0 0.0
  %315 = vmatprep.subr.mxu0 0.0
  %316 = vmatpush1.msra.mxu0 0.0
  %317 = vmatprep.subr.mxu0 0.0
  %318 = vmatpush1.msra.mxu0 0.0
  %319 = vmatprep.subr.mxu0 0.0
  %320 = vmatpush1.msra.mxu0 0.0
  %321 = vmatprep.subr.mxu0 0.0
  %322 = vmatpush1.msra.mxu0 0.0
  %323 = vmatprep.subr.mxu0 0.0
  %324 = vmatpush1.msra.mxu0 0.0
  %325 = vmatprep.subr.mxu0 0.0
  %326 = vmatpush1.msra.mxu0 0.0
  %327 = vmatprep.subr.mxu0 0.0
  %328 = vmatpush1.msra.mxu0 0.0
  %329 = vmatprep.mubr.f32.mxu0 0.0
  %330 = vmatmul.mubr.f32.gmra.mrb[0].mxu0 %v241
  %v331 = vpop.f32.mrb[0].mxu0
  %v332 = vadd.f32 %v263, %v331
  %v333 = vpop.f32.mrb[0].mxu0
  %334 = vdwg.mxu0
  %v335 = vmax.f32 %v332, 0.0
  %v336 = vld [vmem:[%s5] sm:$0xff]
  %v337 = vld [vmem:[%s5 + $0x8] sm:$0xff]
  %v338 = vld [vmem:[%s5 + $0x10] sm:$0xff]
  %v339 = vld [vmem:[%s5 + $0x18] sm:$0xff]
  %v340 = vld [vmem:[%s5 + $0x20] sm:$0xff]
  %v341 = vld [vmem:[%s5 + $0x28] sm:$0xff]
  %v342 = vld [vmem:[%s5 + $0x30] sm:$0xff]
  %v343 = vld [vmem:[%s5 + $0x38] sm:$0xff]
  %v344 = vld [vmem:[%s5 + $0x40] sm:$0xff]
  %v345 = vld [vmem:[%s5 + $0x48] sm:$0xff]
  %v346 = vld [vmem:[%s5 + $0x50] sm:$0xff]
  %v347 = vld [vmem:[%s5 + $0x58] sm:$0xff]
  %v348 = vld [vmem:[%s5 + $0x60] sm:$0xff]
  %v349 = vld [vmem:[%s5 + $0x68] sm:$0xff]
  %v350 = vld [vmem:[%s5 + $0x70] sm:$0xff]
  %v351 = vld [vmem:[%s5 + $0x78] sm:$0xff]
  %v352 = vld [vmem:[%s6] sm:$0x1]
  %v354 = vlaneseq
  %v355 = vshrl.u32 %v354, 7
  %v356 = vsub.s32 0, %v355
  %v357 = vrot.slane %v352, %v356
  %359 = vmatprep.subr.mxu0 0.0
  %360 = vmatpush1.msra.mxu0 %v336
  %361 = vmatprep.subr.mxu0 0.0
  %362 = vmatpush1.msra.mxu0 %v337
  %363 = vmatprep.subr.mxu0 0.0
  %364 = vmatpush1.msra.mxu0 %v338
  %365 = vmatprep.subr.mxu0 0.0
  %366 = vmatpush1.msra.mxu0 %v339
  %367 = vmatprep.subr.mxu0 0.0
  %368 = vmatpush1.msra.mxu0 %v340
  %369 = vmatprep.subr.mxu0 0.0
  %370 = vmatpush1.msra.mxu0 %v341
  %371 = vmatprep.subr.mxu0 0.0
  %372 = vmatpush1.msra.mxu0 %v342
  %373 = vmatprep.subr.mxu0 0.0
  %374 = vmatpush1.msra.mxu0 %v343
  %375 = vmatprep.subr.mxu0 0.0
  %376 = vmatpush1.msra.mxu0 %v344
  %377 = vmatprep.subr.mxu0 0.0
  %378 = vmatpush1.msra.mxu0 %v345
  %379 = vmatprep.subr.mxu0 0.0
  %380 = vmatpush1.msra.mxu0 %v346
  %381 = vmatprep.subr.mxu0 0.0
  %382 = vmatpush1.msra.mxu0 %v347
  %383 = vmatprep.subr.mxu0 0.0
  %384 = vmatpush1.msra.mxu0 %v348
  %385 = vmatprep.subr.mxu0 0.0
  %386 = vmatpush1.msra.mxu0 %v349
  %387 = vmatprep.subr.mxu0 0.0
  %388 = vmatpush1.msra.mxu0 %v350
  %389 = vmatprep.subr.mxu0 0.0
  %390 = vmatpush1.msra.mxu0 %v351
  %391 = vmatprep.subr.mxu0 0.0
  %392 = vmatpush1.msra.mxu0 0.0
  %393 = vmatprep.subr.mxu0 0.0
  %394 = vmatpush1.msra.mxu0 0.0
  %395 = vmatprep.subr.mxu0 0.0
  %396 = vmatpush1.msra.mxu0 0.0
  %397 = vmatprep.subr.mxu0 0.0
  %398 = vmatpush1.msra.mxu0 0.0
  %399 = vmatprep.subr.mxu0 0.0
  %400 = vmatpush1.msra.mxu0 0.0
  %401 = vmatprep.subr.mxu0 0.0
  %402 = vmatpush1.msra.mxu0 0.0
  %403 = vmatprep.subr.mxu0 0.0
  %404 = vmatpush1.msra.mxu0 0.0
  %405 = vmatprep.subr.mxu0 0.0
  %406 = vmatpush1.msra.mxu0 0.0
  %407 = vmatprep.subr.mxu0 0.0
  %408 = vmatpush1.msra.mxu0 0.0
  %409 = vmatprep.subr.mxu0 0.0
  %410 = vmatpush1.msra.mxu0 0.0
  %411 = vmatprep.subr.mxu0 0.0
  %412 = vmatpush1.msra.mxu0 0.0
  %413 = vmatprep.subr.mxu0 0.0
  %414 = vmatpush1.msra.mxu0 0.0
  %415 = vmatprep.subr.mxu0 0.0
  %416 = vmatpush1.msra.mxu0 0.0
  %417 = vmatprep.subr.mxu0 0.0
  %418 = vmatpush1.msra.mxu0 0.0
  %419 = vmatprep.subr.mxu0 0.0
  %420 = vmatpush1.msra.mxu0 0.0
  %421 = vmatprep.subr.mxu0 0.0
  %422 = vmatpush1.msra.mxu0 0.0
  %423 = vmatprep.mubr.f32.mxu0 0.0
  %424 = vmatmul.mubr.f32.gmra.mrb[0].mxu0 %v335
  %v425 = vpop.f32.mrb[0].mxu0
  %v426 = vadd.f32 %v357, %v425
  %v427 = vpop.f32.mrb[0].mxu0
  %428 = vdwg.mxu0
  %429 = vst [vmem:[%s7] sm:$0xff] %v426
  // Predicated region
  $region30: #{simple_cnn_forward.11} parent=0 // pred_check
    _
  $region31: #{simple_cnn_forward.11} parent=0 // pred_check_branch
    %431 = sbr.rel (0) target = $region33
  $region32: #{simple_cnn_forward.11} parent=0 // pred_region
    _
  $region33: #{simple_cnn_forward.11} parent=0 // pred_fallthru
    _
  // Predicated region
  $region34: #{simple_cnn_forward.11} parent=0 // pred_check
    _
  $region35: #{simple_cnn_forward.11} parent=0 // pred_check_branch
    %433 = sbr.rel (0) target = $region37
  $region36: #{simple_cnn_forward.11} parent=0 // pred_region
    _
  $region37: #{simple_cnn_forward.11} parent=0 // pred_fallthru
    _

</llo_original>
